<compile_context>
chip_gen: v7x
topology: tpu7x:2x2x1
jax: 0.10.0
libtpu: 0.0.40
codegen_flags: <defaults>
</compile_context>

<pallas_src>
import jax
import jax.numpy as jnp
from jax.experimental import pallas as pl
from jax.experimental.pallas import tpu as pltpu

_VMEM = pl.BlockSpec(memory_space=pltpu.MemorySpace.VMEM)

# Order of weight/bias arrays passed to the fused kernel (after label, feature).
_KP_ORDER = (
    "w_lk", "b_lk",
    "w_fe0", "b_fe0", "w_fe1", "b_fe1", "w_feh", "b_feh",
    "w_fx0", "b_fx0", "w_fx1", "b_fx1", "w_fx2", "b_fx2", "w_fxh", "b_fxh",
    "w_fd0f", "w_fd0z", "b_fd0", "w_fd1", "b_fd1",
)


def _round_up(x, m):
    return ((x + m - 1) // m) * m


# ------------------------------ fused kernel --------------------------------

def _vae_fused_kernel(
    label_ref, feat_ref,
    w_lk_ref, b_lk_ref,
    w_fe0_ref, b_fe0_ref, w_fe1_ref, b_fe1_ref, w_feh_ref, b_feh_ref,
    w_fx0_ref, b_fx0_ref, w_fx1_ref, b_fx1_ref, w_fx2_ref, b_fx2_ref,
    w_fxh_ref, b_fxh_ref,
    w_fd0f_ref, w_fd0z_ref, b_fd0_ref, w_fd1_ref, b_fd1_ref,
    slab_b_ref, slab_l_ref,
):
    f32 = jnp.float32
    lab = label_ref[...]
    feat = feat_ref[...]

    latent = w_fxh_ref.shape[1] // 2
    emb = w_lk_ref.shape[1]
    ldim = w_lk_ref.shape[0]

    def dense(x, w_ref, b_ref):
        return jnp.dot(x, w_ref[...], preferred_element_type=f32) + b_ref[...]

    def relu(x):
        return jnp.maximum(x, 0.0)

    # ---- label encoder applied to eye(label_dim):  eye @ W + b == W + b -----
    h = relu(w_lk_ref[...] + b_lk_ref[...])
    h = relu(dense(h, w_fe0_ref, b_fe0_ref))
    h = relu(dense(h, w_fe1_ref, b_fe1_ref))
    fe_heads = dense(h, w_feh_ref, b_feh_ref)          # (L, 2*latent) = mu|logvar
    fe_mu = fe_heads[:, :latent]

    # z_lab = (label @ fe_mu) / label.sum(1, keepdim=True)
    inv_s = pl.reciprocal(jnp.sum(lab, axis=1, keepdims=True), approx=True)
    z_lab = jnp.dot(lab, fe_mu, preferred_element_type=f32) * inv_s

    # ---- decoder: fd0 split into feat/z parts (no concat), then F.normalize -
    def decode(z):
        d = (jnp.dot(feat, w_fd0f_ref[...], preferred_element_type=f32)
             + jnp.dot(z, w_fd0z_ref[...], preferred_element_type=f32)
             + b_fd0_ref[...])
        d = relu(d)
        d = dense(d, w_fd1_ref, b_fd1_ref)
        d = jnp.where(d > 0.0, d, 0.01 * d)             # LeakyReLU(0.01)
        ss = jnp.sum(d * d, axis=1, keepdims=True)
        # F.normalize(x, dim=1): x / max(||x||, 1e-12)  ==  x * rsqrt(max(ss,1e-24))
        return d * jax.lax.rsqrt(jnp.maximum(ss, 1e-24))

    label_emb = decode(z_lab)

    # ---- feature encoder ----------------------------------------------------
    g = relu(dense(feat, w_fx0_ref, b_fx0_ref))
    g = relu(dense(g, w_fx1_ref, b_fx1_ref))
    g = relu(dense(g, w_fx2_ref, b_fx2_ref))
    fx_heads = dense(g, w_fxh_ref, b_fxh_ref)           # (Bp, 2*latent)
    fx_mu = fx_heads[:, :latent]

    # eval mode: z == z2 == fx_mu  =>  feat_emb2 == feat_emb (computed once)
    feat_emb = decode(fx_mu)

    # ---- final projections against embs = label_lookup.weight = w_lk.T ------
    dn = (((1,), (1,)), ((), ()))
    label_out = jax.lax.dot_general(label_emb, w_lk_ref[...], dn,
                                    preferred_element_type=f32)
    feat_out = jax.lax.dot_general(feat_emb, w_lk_ref[...], dn,
                                   preferred_element_type=f32)

    # ---- pack into lane-dense output slabs (128-aligned field offsets) ------
    fs = slab_b_ref.shape[1] // 5
    slab_b_ref[...] = jnp.zeros_like(slab_b_ref)
    slab_b_ref[:, 0:2 * latent] = fx_heads              # fx_mu | fx_logvar
    slab_b_ref[:, fs:fs + emb] = feat_emb
    slab_b_ref[:, 2 * fs:2 * fs + ldim] = label_out
    slab_b_ref[:, 3 * fs:3 * fs + ldim] = feat_out
    slab_b_ref[:, 4 * fs:4 * fs + emb] = label_emb

    slab_l_ref[...] = jnp.zeros_like(slab_l_ref)
    slab_l_ref[:, 0:2 * latent] = fe_heads               # fe_mu | fe_logvar


# ------------------------------- parameters ---------------------------------

def init_params(key, feature_dim, label_dim, latent_dim, emb_size):
    """Deterministic torch-style init; weights stored transposed (in, out)."""
    layer_dims = [
        ("fx0", feature_dim, 256), ("fx1", 256, 512), ("fx2", 512, 256),
        ("fx_mu", 256, latent_dim), ("fx_logvar", 256, latent_dim),
        ("label_lookup", label_dim, emb_size),
        ("fe0", emb_size, 512), ("fe1", 512, 256),
        ("fe_mu", 256, latent_dim), ("fe_logvar", 256, latent_dim),
        ("fd0", feature_dim + latent_dim, 512), ("fd1", 512, emb_size),
    ]
    params = {}
    keys = jax.random.split(key, len(layer_dims))
    for k, (name, fan_in, fan_out) in zip(keys, layer_dims):
        k_w, k_b = jax.random.split(k)
        bound = 1.0 / float(fan_in) ** 0.5
        params[name + "_w"] = jax.random.uniform(
            k_w, (fan_in, fan_out), jnp.float32, -bound, bound)
        params[name + "_b"] = jax.random.uniform(
            k_b, (fan_out,), jnp.float32, -bound, bound)
    return params


def prepare_params(p):
    """One-time transform to the fused-kernel layout (done outside jit)."""
    def b2d(name):
        return p[name + "_b"].reshape(1, -1)

    feat_dim = p["fx0_w"].shape[0]
    return {
        "w_lk": p["label_lookup_w"], "b_lk": b2d("label_lookup"),
        "w_fe0": p["fe0_w"], "b_fe0": b2d("fe0"),
        "w_fe1": p["fe1_w"], "b_fe1": b2d("fe1"),
        # fused mu|logvar heads
        "w_feh": jnp.concatenate([p["fe_mu_w"], p["fe_logvar_w"]], axis=1),
        "b_feh": jnp.concatenate([p["fe_mu_b"], p["fe_logvar_b"]]).reshape(1, -1),
        "w_fx0": p["fx0_w"], "b_fx0": b2d("fx0"),
        "w_fx1": p["fx1_w"], "b_fx1": b2d("fx1"),
        "w_fx2": p["fx2_w"], "b_fx2": b2d("fx2"),
        "w_fxh": jnp.concatenate([p["fx_mu_w"], p["fx_logvar_w"]], axis=1),
        "b_fxh": jnp.concatenate([p["fx_mu_b"], p["fx_logvar_b"]]).reshape(1, -1),
        # fd0 split so the kernel never materializes concat([feature, z])
        "w_fd0f": p["fd0_w"][:feat_dim],
        "w_fd0z": p["fd0_w"][feat_dim:],
        "b_fd0": b2d("fd0"),
        "w_fd1": p["fd1_w"], "b_fd1": b2d("fd1"),
        # torch's label_lookup.weight (emb_size, label_dim), hoisted transpose
        "embs": p["label_lookup_w"].T,
    }


# ------------------------------ forward pass ---------------------------------

def vae_forward(kparams, label, feature):
    """Fused eval-mode forward; returns the same output dict as VAE.forward."""
    B, L = label.shape
    E = kparams["w_lk"].shape[1]
    latent = kparams["w_fxh"].shape[1] // 2

    # Pad batch to a sublane multiple (>= 8). Padded label rows get a one-hot
    # so label.sum() stays nonzero; padded rows are sliced away afterwards.
    Bp = _round_up(max(B, 8), 8)
    if Bp != B:
        pad = Bp - B
        label_p = jnp.concatenate(
            [label, jnp.zeros((pad, L), jnp.float32).at[:, 0].set(1.0)], axis=0)
        feature_p = jnp.concatenate(
            [feature, jnp.zeros((pad, feature.shape[1]), jnp.float32)], axis=0)
    else:
        label_p, feature_p = label, feature

    field = _round_up(max(2 * latent, E, L, 128), 128)   # lane-dense field stride
    slab_b, slab_l = pl.pallas_call(
        _vae_fused_kernel,
        out_shape=(jax.ShapeDtypeStruct((Bp, 5 * field), jnp.float32),
                   jax.ShapeDtypeStruct((L, field), jnp.float32)),
        in_specs=[_VMEM] * (2 + len(_KP_ORDER)),
        out_specs=(_VMEM, _VMEM),
    )(label_p, feature_p, *[kparams[k] for k in _KP_ORDER])

    fx_mu = slab_b[:B, 0:latent]
    fx_logvar = slab_b[:B, latent:2 * latent]
    feat_emb = slab_b[:B, field:field + E]
    label_out = slab_b[:B, 2 * field:2 * field + L]
    feat_out = slab_b[:B, 3 * field:3 * field + L]
    label_emb = slab_b[:B, 4 * field:4 * field + E]
    fe_mu = slab_l[:, 0:latent]
    fe_logvar = slab_l[:, latent:2 * latent]

    return {
        "fe_mu": fe_mu, "fe_logvar": fe_logvar, "label_emb": label_emb,
        "fx_mu": fx_mu, "fx_logvar": fx_logvar,
        "feat_emb": feat_emb, "feat_emb2": feat_emb,     # eval: z == z2 == mu
        "embs": kparams["embs"],
        "label_out": label_out, "feat_out": feat_out, "feat_out2": feat_out,
        "feat": feature,
    }


# ---------------------------- pure-JAX reference ------------------------------

def _reference_forward(params, label, feature):
    def lin(x, name, act=None):
        y = x @ params[name + "_w"] + params[name + "_b"]
        if act == "relu":
            y = jnp.maximum(y, 0.0)
        elif act == "leaky":
            y = jnp.where(y > 0.0, y, 0.01 * y)
        return y

    L = label.shape[1]
    eye = jnp.eye(L, dtype=jnp.float32)
    h = lin(eye, "label_lookup", "relu")
    h = lin(h, "fe0", "relu")
    h = lin(h, "fe1", "relu")
    fe_mu, fe_logvar = lin(h, "fe_mu"), lin(h, "fe_logvar")
    z_lab = (label @ fe_mu) / jnp.sum(label, axis=1, keepdims=True)

    def dec(z):
        d = lin(jnp.concatenate([feature, z], axis=1), "fd0", "relu")
        d = lin(d, "fd1", "leaky")
        nrm = jnp.sqrt(jnp.sum(d * d, axis=1, keepdims=True))
        return d / jnp.maximum(nrm, 1e-12)

    label_emb = dec(z_lab)
    g = lin(feature, "fx0", "relu")
    g = lin(g, "fx1", "relu")
    g = lin(g, "fx2", "relu")
    fx_mu, fx_logvar = lin(g, "fx_mu"), lin(g, "fx_logvar")
    feat_emb = dec(fx_mu)
    embs = params["label_lookup_w"].T
    return {"fe_mu": fe_mu, "fe_logvar": fe_logvar, "label_emb": label_emb,
            "fx_mu": fx_mu, "fx_logvar": fx_logvar, "feat_emb": feat_emb,
            "label_out": label_emb @ embs, "feat_out": feat_emb @ embs}


# ---------------------------------- main -------------------------------------

if __name__ == "__main__":
    B, FEATURE_DIM, LABEL_DIM, LATENT_DIM, EMB_SIZE = 2, 32, 16, 8, 32

    key = jax.random.PRNGKey(0)
    k_params, k_label, k_feat = jax.random.split(key, 3)

    params = init_params(k_params, FEATURE_DIM, LABEL_DIM, LATENT_DIM, EMB_SIZE)
    kparams = prepare_params(params)

    # multi-hot labels; guarantee nonzero row sum (forward divides by label.sum(1))
    label = (jax.random.uniform(k_label, (B, LABEL_DIM)) < 0.3).astype(jnp.float32)
    label = label.at[:, 0].set(1.0)
    feature = jax.random.normal(k_feat, (B, FEATURE_DIM), dtype=jnp.float32)

    out = jax.jit(vae_forward)(kparams, label, feature)
    jax.block_until_ready(out)

    # shape checks
    assert out["label_out"].shape == (B, LABEL_DIM)
    assert out["feat_out"].shape == (B, LABEL_DIM)
    assert out["label_emb"].shape == (B, EMB_SIZE)
    assert out["feat_emb"].shape == (B, EMB_SIZE)
    assert out["fx_mu"].shape == (B, LATENT_DIM)
    assert out["fe_mu"].shape == (LABEL_DIM, LATENT_DIM)
    assert out["embs"].shape == (EMB_SIZE, LABEL_DIM)

    # numerical check vs pure-JAX eval-mode reference (loose tol: MXU precision
    # + approx reciprocal on the EUP path)
    ref = _reference_forward(params, label, feature)
    for k in ("fe_mu", "fe_logvar", "fx_mu", "fx_logvar",
              "label_emb", "feat_emb", "label_out", "feat_out"):
        assert jnp.allclose(out[k], ref[k], rtol=2e-2, atol=2e-3), k

    print("KERNEL_OK")
</pallas_src>

<mosaic_0001>
module attributes {stable_mosaic.version = 11 : i64} {
  func.func @_vae_fused_kernel(%arg0: memref<8x16xf32, #tpu.memory_space<vmem>>, %arg1: memref<8x32xf32, #tpu.memory_space<vmem>>, %arg2: memref<16x32xf32, #tpu.memory_space<vmem>>, %arg3: memref<1x32xf32, #tpu.memory_space<vmem>>, %arg4: memref<32x512xf32, #tpu.memory_space<vmem>>, %arg5: memref<1x512xf32, #tpu.memory_space<vmem>>, %arg6: memref<512x256xf32, #tpu.memory_space<vmem>>, %arg7: memref<1x256xf32, #tpu.memory_space<vmem>>, %arg8: memref<256x16xf32, #tpu.memory_space<vmem>>, %arg9: memref<1x16xf32, #tpu.memory_space<vmem>>, %arg10: memref<32x256xf32, #tpu.memory_space<vmem>>, %arg11: memref<1x256xf32, #tpu.memory_space<vmem>>, %arg12: memref<256x512xf32, #tpu.memory_space<vmem>>, %arg13: memref<1x512xf32, #tpu.memory_space<vmem>>, %arg14: memref<512x256xf32, #tpu.memory_space<vmem>>, %arg15: memref<1x256xf32, #tpu.memory_space<vmem>>, %arg16: memref<256x16xf32, #tpu.memory_space<vmem>>, %arg17: memref<1x16xf32, #tpu.memory_space<vmem>>, %arg18: memref<32x512xf32, #tpu.memory_space<vmem>>, %arg19: memref<8x512xf32, #tpu.memory_space<vmem>>, %arg20: memref<1x512xf32, #tpu.memory_space<vmem>>, %arg21: memref<512x32xf32, #tpu.memory_space<vmem>>, %arg22: memref<1x32xf32, #tpu.memory_space<vmem>>, %arg23: memref<8x640xf32, #tpu.memory_space<vmem>>, %arg24: memref<16x128xf32, #tpu.memory_space<vmem>>) attributes {dimension_semantics = [], scalar_prefetch = 0 : i64, scratch_operands = 0 : i64, tpu.core_type = #tpu.core_type<tc>} {
    %c0 = arith.constant 0 : index
    %c0_0 = arith.constant 0 : index
    %0 = vector.load %arg0[%c0, %c0_0] : memref<8x16xf32, #tpu.memory_space<vmem>>, vector<8x16xf32>
    %c0_1 = arith.constant 0 : index
    %c0_2 = arith.constant 0 : index
    %1 = vector.load %arg1[%c0_1, %c0_2] : memref<8x32xf32, #tpu.memory_space<vmem>>, vector<8x32xf32>
    %c0_3 = arith.constant 0 : index
    %c0_4 = arith.constant 0 : index
    %2 = vector.load %arg2[%c0_3, %c0_4] : memref<16x32xf32, #tpu.memory_space<vmem>>, vector<16x32xf32>
    %c0_5 = arith.constant 0 : index
    %c0_6 = arith.constant 0 : index
    %3 = vector.load %arg3[%c0_5, %c0_6] : memref<1x32xf32, #tpu.memory_space<vmem>>, vector<1x32xf32>
    %4 = vector.broadcast %3 : vector<1x32xf32> to vector<16x32xf32>
    %5 = arith.addf %2, %4 : vector<16x32xf32>
    %cst = arith.constant 0.000000e+00 : f32
    %6 = vector.broadcast %cst : f32 to vector<16x32xf32>
    %7 = arith.maximumf %5, %6 : vector<16x32xf32>
    %c0_7 = arith.constant 0 : index
    %c0_8 = arith.constant 0 : index
    %8 = vector.load %arg4[%c0_7, %c0_8] : memref<32x512xf32, #tpu.memory_space<vmem>>, vector<32x512xf32>
    %cst_9 = arith.constant dense<0.000000e+00> : vector<16x512xf32>
    %9 = tpu.matmul %7, %8, %cst_9 {dimension_numbers = #tpu.dot_dimension_numbers<[1], [0], [0], [1], [0, 0, 1, 1], [], []>} : vector<16x32xf32>, vector<32x512xf32>, vector<16x512xf32> -> vector<16x512xf32>
    %c0_10 = arith.constant 0 : index
    %c0_11 = arith.constant 0 : index
    %10 = vector.load %arg5[%c0_10, %c0_11] : memref<1x512xf32, #tpu.memory_space<vmem>>, vector<1x512xf32>
    %11 = vector.broadcast %10 : vector<1x512xf32> to vector<16x512xf32>
    %12 = arith.addf %9, %11 : vector<16x512xf32>
    %cst_12 = arith.constant 0.000000e+00 : f32
    %13 = vector.broadcast %cst_12 : f32 to vector<16x512xf32>
    %14 = arith.maximumf %12, %13 : vector<16x512xf32>
    %c0_13 = arith.constant 0 : index
    %c0_14 = arith.constant 0 : index
    %15 = vector.load %arg6[%c0_13, %c0_14] : memref<512x256xf32, #tpu.memory_space<vmem>>, vector<512x256xf32>
    %cst_15 = arith.constant dense<0.000000e+00> : vector<16x256xf32>
    %16 = tpu.matmul %14, %15, %cst_15 {dimension_numbers = #tpu.dot_dimension_numbers<[1], [0], [0], [1], [0, 0, 1, 1], [], []>} : vector<16x512xf32>, vector<512x256xf32>, vector<16x256xf32> -> vector<16x256xf32>
    %c0_16 = arith.constant 0 : index
    %c0_17 = arith.constant 0 : index
    %17 = vector.load %arg7[%c0_16, %c0_17] : memref<1x256xf32, #tpu.memory_space<vmem>>, vector<1x256xf32>
    %18 = vector.broadcast %17 : vector<1x256xf32> to vector<16x256xf32>
    %19 = arith.addf %16, %18 : vector<16x256xf32>
    %cst_18 = arith.constant 0.000000e+00 : f32
    %20 = vector.broadcast %cst_18 : f32 to vector<16x256xf32>
    %21 = arith.maximumf %19, %20 : vector<16x256xf32>
    %c0_19 = arith.constant 0 : index
    %c0_20 = arith.constant 0 : index
    %22 = vector.load %arg8[%c0_19, %c0_20] : memref<256x16xf32, #tpu.memory_space<vmem>>, vector<256x16xf32>
    %cst_21 = arith.constant dense<0.000000e+00> : vector<16x16xf32>
    %23 = tpu.matmul %21, %22, %cst_21 {dimension_numbers = #tpu.dot_dimension_numbers<[1], [0], [0], [1], [0, 0, 1, 1], [], []>} : vector<16x256xf32>, vector<256x16xf32>, vector<16x16xf32> -> vector<16x16xf32>
    %c0_22 = arith.constant 0 : index
    %c0_23 = arith.constant 0 : index
    %24 = vector.load %arg9[%c0_22, %c0_23] : memref<1x16xf32, #tpu.memory_space<vmem>>, vector<1x16xf32>
    %25 = vector.broadcast %24 : vector<1x16xf32> to vector<16x16xf32>
    %26 = arith.addf %23, %25 : vector<16x16xf32>
    %27 = vector.extract_strided_slice %26 {offsets = [0, 0], sizes = [16, 8], strides = [1, 1]} : vector<16x16xf32> to vector<16x8xf32>
    %cst_24 = arith.constant dense<0.000000e+00> : vector<8xf32>
    %28 = vector.multi_reduction <add>, %0, %cst_24 [1] : vector<8x16xf32> to vector<8xf32>
    %29 = vector.shape_cast %28 : vector<8xf32> to vector<8x1xf32>
    %30 = tpu.reciprocal %29 {approx = true} : vector<8x1xf32> -> vector<8x1xf32>
    %cst_25 = arith.constant dense<0.000000e+00> : vector<8x8xf32>
    %31 = tpu.matmul %0, %27, %cst_25 {dimension_numbers = #tpu.dot_dimension_numbers<[1], [0], [0], [1], [0, 0, 1, 1], [], []>} : vector<8x16xf32>, vector<16x8xf32>, vector<8x8xf32> -> vector<8x8xf32>
    %32 = vector.broadcast %30 : vector<8x1xf32> to vector<8x8xf32>
    %33 = arith.mulf %31, %32 : vector<8x8xf32>
    %c0_26 = arith.constant 0 : index
    %c0_27 = arith.constant 0 : index
    %34 = vector.load %arg18[%c0_26, %c0_27] : memref<32x512xf32, #tpu.memory_space<vmem>>, vector<32x512xf32>
    %cst_28 = arith.constant dense<0.000000e+00> : vector<8x512xf32>
    %35 = tpu.matmul %1, %34, %cst_28 {dimension_numbers = #tpu.dot_dimension_numbers<[1], [0], [0], [1], [0, 0, 1, 1], [], []>} : vector<8x32xf32>, vector<32x512xf32>, vector<8x512xf32> -> vector<8x512xf32>
    %c0_29 = arith.constant 0 : index
    %c0_30 = arith.constant 0 : index
    %36 = vector.load %arg19[%c0_29, %c0_30] : memref<8x512xf32, #tpu.memory_space<vmem>>, vector<8x512xf32>
    %cst_31 = arith.constant dense<0.000000e+00> : vector<8x512xf32>
    %37 = tpu.matmul %33, %36, %cst_31 {dimension_numbers = #tpu.dot_dimension_numbers<[1], [0], [0], [1], [0, 0, 1, 1], [], []>} : vector<8x8xf32>, vector<8x512xf32>, vector<8x512xf32> -> vector<8x512xf32>
    %38 = arith.addf %35, %37 : vector<8x512xf32>
    %c0_32 = arith.constant 0 : index
    %c0_33 = arith.constant 0 : index
    %39 = vector.load %arg20[%c0_32, %c0_33] : memref<1x512xf32, #tpu.memory_space<vmem>>, vector<1x512xf32>
    %40 = vector.broadcast %39 : vector<1x512xf32> to vector<8x512xf32>
    %41 = arith.addf %38, %40 : vector<8x512xf32>
    %cst_34 = arith.constant 0.000000e+00 : f32
    %42 = vector.broadcast %cst_34 : f32 to vector<8x512xf32>
    %43 = arith.maximumf %41, %42 : vector<8x512xf32>
    %c0_35 = arith.constant 0 : index
    %c0_36 = arith.constant 0 : index
    %44 = vector.load %arg21[%c0_35, %c0_36] : memref<512x32xf32, #tpu.memory_space<vmem>>, vector<512x32xf32>
    %cst_37 = arith.constant dense<0.000000e+00> : vector<8x32xf32>
    %45 = tpu.matmul %43, %44, %cst_37 {dimension_numbers = #tpu.dot_dimension_numbers<[1], [0], [0], [1], [0, 0, 1, 1], [], []>} : vector<8x512xf32>, vector<512x32xf32>, vector<8x32xf32> -> vector<8x32xf32>
    %c0_38 = arith.constant 0 : index
    %c0_39 = arith.constant 0 : index
    %46 = vector.load %arg22[%c0_38, %c0_39] : memref<1x32xf32, #tpu.memory_space<vmem>>, vector<1x32xf32>
    %47 = vector.broadcast %46 : vector<1x32xf32> to vector<8x32xf32>
    %48 = arith.addf %45, %47 : vector<8x32xf32>
    %cst_40 = arith.constant 0.000000e+00 : f32
    %49 = vector.broadcast %cst_40 : f32 to vector<8x32xf32>
    %50 = arith.cmpf ogt, %48, %49 : vector<8x32xf32>
    %cst_41 = arith.constant 0.00999999977 : f32
    %51 = vector.broadcast %cst_41 : f32 to vector<8x32xf32>
    %52 = arith.mulf %51, %48 : vector<8x32xf32>
    %53 = arith.select %50, %48, %52 : vector<8x32xi1>, vector<8x32xf32>
    %54 = arith.mulf %53, %53 : vector<8x32xf32>
    %cst_42 = arith.constant dense<0.000000e+00> : vector<8xf32>
    %55 = vector.multi_reduction <add>, %54, %cst_42 [1] : vector<8x32xf32> to vector<8xf32>
    %56 = vector.shape_cast %55 : vector<8xf32> to vector<8x1xf32>
    %cst_43 = arith.constant 1.000000e-24 : f32
    %57 = vector.broadcast %cst_43 : f32 to vector<8x1xf32>
    %58 = arith.maximumf %56, %57 : vector<8x1xf32>
    %59 = math.rsqrt %58 : vector<8x1xf32>
    %60 = vector.broadcast %59 : vector<8x1xf32> to vector<8x32xf32>
    %61 = arith.mulf %53, %60 : vector<8x32xf32>
    %c0_44 = arith.constant 0 : index
    %c0_45 = arith.constant 0 : index
    %62 = vector.load %arg10[%c0_44, %c0_45] : memref<32x256xf32, #tpu.memory_space<vmem>>, vector<32x256xf32>
    %cst_46 = arith.constant dense<0.000000e+00> : vector<8x256xf32>
    %63 = tpu.matmul %1, %62, %cst_46 {dimension_numbers = #tpu.dot_dimension_numbers<[1], [0], [0], [1], [0, 0, 1, 1], [], []>} : vector<8x32xf32>, vector<32x256xf32>, vector<8x256xf32> -> vector<8x256xf32>
    %c0_47 = arith.constant 0 : index
    %c0_48 = arith.constant 0 : index
    %64 = vector.load %arg11[%c0_47, %c0_48] : memref<1x256xf32, #tpu.memory_space<vmem>>, vector<1x256xf32>
    %65 = vector.broadcast %64 : vector<1x256xf32> to vector<8x256xf32>
    %66 = arith.addf %63, %65 : vector<8x256xf32>
    %cst_49 = arith.constant 0.000000e+00 : f32
    %67 = vector.broadcast %cst_49 : f32 to vector<8x256xf32>
    %68 = arith.maximumf %66, %67 : vector<8x256xf32>
    %c0_50 = arith.constant 0 : index
    %c0_51 = arith.constant 0 : index
    %69 = vector.load %arg12[%c0_50, %c0_51] : memref<256x512xf32, #tpu.memory_space<vmem>>, vector<256x512xf32>
    %cst_52 = arith.constant dense<0.000000e+00> : vector<8x512xf32>
    %70 = tpu.matmul %68, %69, %cst_52 {dimension_numbers = #tpu.dot_dimension_numbers<[1], [0], [0], [1], [0, 0, 1, 1], [], []>} : vector<8x256xf32>, vector<256x512xf32>, vector<8x512xf32> -> vector<8x512xf32>
    %c0_53 = arith.constant 0 : index
    %c0_54 = arith.constant 0 : index
    %71 = vector.load %arg13[%c0_53, %c0_54] : memref<1x512xf32, #tpu.memory_space<vmem>>, vector<1x512xf32>
    %72 = vector.broadcast %71 : vector<1x512xf32> to vector<8x512xf32>
    %73 = arith.addf %70, %72 : vector<8x512xf32>
    %cst_55 = arith.constant 0.000000e+00 : f32
    %74 = vector.broadcast %cst_55 : f32 to vector<8x512xf32>
    %75 = arith.maximumf %73, %74 : vector<8x512xf32>
    %c0_56 = arith.constant 0 : index
    %c0_57 = arith.constant 0 : index
    %76 = vector.load %arg14[%c0_56, %c0_57] : memref<512x256xf32, #tpu.memory_space<vmem>>, vector<512x256xf32>
    %cst_58 = arith.constant dense<0.000000e+00> : vector<8x256xf32>
    %77 = tpu.matmul %75, %76, %cst_58 {dimension_numbers = #tpu.dot_dimension_numbers<[1], [0], [0], [1], [0, 0, 1, 1], [], []>} : vector<8x512xf32>, vector<512x256xf32>, vector<8x256xf32> -> vector<8x256xf32>
    %c0_59 = arith.constant 0 : index
    %c0_60 = arith.constant 0 : index
    %78 = vector.load %arg15[%c0_59, %c0_60] : memref<1x256xf32, #tpu.memory_space<vmem>>, vector<1x256xf32>
    %79 = vector.broadcast %78 : vector<1x256xf32> to vector<8x256xf32>
    %80 = arith.addf %77, %79 : vector<8x256xf32>
    %cst_61 = arith.constant 0.000000e+00 : f32
    %81 = vector.broadcast %cst_61 : f32 to vector<8x256xf32>
    %82 = arith.maximumf %80, %81 : vector<8x256xf32>
    %c0_62 = arith.constant 0 : index
    %c0_63 = arith.constant 0 : index
    %83 = vector.load %arg16[%c0_62, %c0_63] : memref<256x16xf32, #tpu.memory_space<vmem>>, vector<256x16xf32>
    %cst_64 = arith.constant dense<0.000000e+00> : vector<8x16xf32>
    %84 = tpu.matmul %82, %83, %cst_64 {dimension_numbers = #tpu.dot_dimension_numbers<[1], [0], [0], [1], [0, 0, 1, 1], [], []>} : vector<8x256xf32>, vector<256x16xf32>, vector<8x16xf32> -> vector<8x16xf32>
    %c0_65 = arith.constant 0 : index
    %c0_66 = arith.constant 0 : index
    %85 = vector.load %arg17[%c0_65, %c0_66] : memref<1x16xf32, #tpu.memory_space<vmem>>, vector<1x16xf32>
    %86 = vector.broadcast %85 : vector<1x16xf32> to vector<8x16xf32>
    %87 = arith.addf %84, %86 : vector<8x16xf32>
    %88 = vector.extract_strided_slice %87 {offsets = [0, 0], sizes = [8, 8], strides = [1, 1]} : vector<8x16xf32> to vector<8x8xf32>
    %c0_67 = arith.constant 0 : index
    %c0_68 = arith.constant 0 : index
    %89 = vector.load %arg18[%c0_67, %c0_68] : memref<32x512xf32, #tpu.memory_space<vmem>>, vector<32x512xf32>
    %cst_69 = arith.constant dense<0.000000e+00> : vector<8x512xf32>
    %90 = tpu.matmul %1, %89, %cst_69 {dimension_numbers = #tpu.dot_dimension_numbers<[1], [0], [0], [1], [0, 0, 1, 1], [], []>} : vector<8x32xf32>, vector<32x512xf32>, vector<8x512xf32> -> vector<8x512xf32>
    %c0_70 = arith.constant 0 : index
    %c0_71 = arith.constant 0 : index
    %91 = vector.load %arg19[%c0_70, %c0_71] : memref<8x512xf32, #tpu.memory_space<vmem>>, vector<8x512xf32>
    %cst_72 = arith.constant dense<0.000000e+00> : vector<8x512xf32>
    %92 = tpu.matmul %88, %91, %cst_72 {dimension_numbers = #tpu.dot_dimension_numbers<[1], [0], [0], [1], [0, 0, 1, 1], [], []>} : vector<8x8xf32>, vector<8x512xf32>, vector<8x512xf32> -> vector<8x512xf32>
    %93 = arith.addf %90, %92 : vector<8x512xf32>
    %c0_73 = arith.constant 0 : index
    %c0_74 = arith.constant 0 : index
    %94 = vector.load %arg20[%c0_73, %c0_74] : memref<1x512xf32, #tpu.memory_space<vmem>>, vector<1x512xf32>
    %95 = vector.broadcast %94 : vector<1x512xf32> to vector<8x512xf32>
    %96 = arith.addf %93, %95 : vector<8x512xf32>
    %cst_75 = arith.constant 0.000000e+00 : f32
    %97 = vector.broadcast %cst_75 : f32 to vector<8x512xf32>
    %98 = arith.maximumf %96, %97 : vector<8x512xf32>
    %c0_76 = arith.constant 0 : index
    %c0_77 = arith.constant 0 : index
    %99 = vector.load %arg21[%c0_76, %c0_77] : memref<512x32xf32, #tpu.memory_space<vmem>>, vector<512x32xf32>
    %cst_78 = arith.constant dense<0.000000e+00> : vector<8x32xf32>
    %100 = tpu.matmul %98, %99, %cst_78 {dimension_numbers = #tpu.dot_dimension_numbers<[1], [0], [0], [1], [0, 0, 1, 1], [], []>} : vector<8x512xf32>, vector<512x32xf32>, vector<8x32xf32> -> vector<8x32xf32>
    %c0_79 = arith.constant 0 : index
    %c0_80 = arith.constant 0 : index
    %101 = vector.load %arg22[%c0_79, %c0_80] : memref<1x32xf32, #tpu.memory_space<vmem>>, vector<1x32xf32>
    %102 = vector.broadcast %101 : vector<1x32xf32> to vector<8x32xf32>
    %103 = arith.addf %100, %102 : vector<8x32xf32>
    %cst_81 = arith.constant 0.000000e+00 : f32
    %104 = vector.broadcast %cst_81 : f32 to vector<8x32xf32>
    %105 = arith.cmpf ogt, %103, %104 : vector<8x32xf32>
    %cst_82 = arith.constant 0.00999999977 : f32
    %106 = vector.broadcast %cst_82 : f32 to vector<8x32xf32>
    %107 = arith.mulf %106, %103 : vector<8x32xf32>
    %108 = arith.select %105, %103, %107 : vector<8x32xi1>, vector<8x32xf32>
    %109 = arith.mulf %108, %108 : vector<8x32xf32>
    %cst_83 = arith.constant dense<0.000000e+00> : vector<8xf32>
    %110 = vector.multi_reduction <add>, %109, %cst_83 [1] : vector<8x32xf32> to vector<8xf32>
    %111 = vector.shape_cast %110 : vector<8xf32> to vector<8x1xf32>
    %cst_84 = arith.constant 1.000000e-24 : f32
    %112 = vector.broadcast %cst_84 : f32 to vector<8x1xf32>
    %113 = arith.maximumf %111, %112 : vector<8x1xf32>
    %114 = math.rsqrt %113 : vector<8x1xf32>
    %115 = vector.broadcast %114 : vector<8x1xf32> to vector<8x32xf32>
    %116 = arith.mulf %108, %115 : vector<8x32xf32>
    %c0_85 = arith.constant 0 : index
    %c0_86 = arith.constant 0 : index
    %117 = vector.load %arg2[%c0_85, %c0_86] : memref<16x32xf32, #tpu.memory_space<vmem>>, vector<16x32xf32>
    %cst_87 = arith.constant dense<0.000000e+00> : vector<8x16xf32>
    %118 = tpu.matmul %61, %117, %cst_87 {dimension_numbers = #tpu.dot_dimension_numbers<[1], [1], [0], [0], [0, 0, 1, 0], [], []>} : vector<8x32xf32>, vector<16x32xf32>, vector<8x16xf32> -> vector<8x16xf32>
    %c0_88 = arith.constant 0 : index
    %c0_89 = arith.constant 0 : index
    %119 = vector.load %arg2[%c0_88, %c0_89] : memref<16x32xf32, #tpu.memory_space<vmem>>, vector<16x32xf32>
    %cst_90 = arith.constant dense<0.000000e+00> : vector<8x16xf32>
    %120 = tpu.matmul %116, %119, %cst_90 {dimension_numbers = #tpu.dot_dimension_numbers<[1], [1], [0], [0], [0, 0, 1, 0], [], []>} : vector<8x32xf32>, vector<16x32xf32>, vector<8x16xf32> -> vector<8x16xf32>
    %cst_91 = arith.constant 0.000000e+00 : f32
    %121 = vector.broadcast %cst_91 : f32 to vector<8x640xf32>
    %c0_92 = arith.constant 0 : index
    %c0_93 = arith.constant 0 : index
    %122 = vector.load %arg23[%c0_92, %c0_93] : memref<8x640xf32, #tpu.memory_space<vmem>>, vector<8x640xf32>
    tpu.vector_store %arg23[%c0_92, %c0_93], %121 {strides = array<i32>} : memref<8x640xf32, #tpu.memory_space<vmem>>, vector<8x640xf32>,
    %c0_94 = arith.constant 0 : index
    %c0_95 = arith.constant 0 : index
    %123 = vector.load %arg23[%c0_94, %c0_95] : memref<8x640xf32, #tpu.memory_space<vmem>>, vector<8x16xf32>
    tpu.vector_store %arg23[%c0_94, %c0_95], %87 {strides = array<i32>} : memref<8x640xf32, #tpu.memory_space<vmem>>, vector<8x16xf32>,
    %c0_96 = arith.constant 0 : index
    %c128 = arith.constant 128 : index
    %124 = vector.load %arg23[%c0_96, %c128] : memref<8x640xf32, #tpu.memory_space<vmem>>, vector<8x32xf32>
    tpu.vector_store %arg23[%c0_96, %c128], %116 {strides = array<i32>} : memref<8x640xf32, #tpu.memory_space<vmem>>, vector<8x32xf32>,
    %c0_97 = arith.constant 0 : index
    %c256 = arith.constant 256 : index
    %125 = vector.load %arg23[%c0_97, %c256] : memref<8x640xf32, #tpu.memory_space<vmem>>, vector<8x16xf32>
    tpu.vector_store %arg23[%c0_97, %c256], %118 {strides = array<i32>} : memref<8x640xf32, #tpu.memory_space<vmem>>, vector<8x16xf32>,
    %c0_98 = arith.constant 0 : index
    %c384 = arith.constant 384 : index
    %126 = vector.load %arg23[%c0_98, %c384] : memref<8x640xf32, #tpu.memory_space<vmem>>, vector<8x16xf32>
    tpu.vector_store %arg23[%c0_98, %c384], %120 {strides = array<i32>} : memref<8x640xf32, #tpu.memory_space<vmem>>, vector<8x16xf32>,
    %c0_99 = arith.constant 0 : index
    %c512 = arith.constant 512 : index
    %127 = vector.load %arg23[%c0_99, %c512] : memref<8x640xf32, #tpu.memory_space<vmem>>, vector<8x32xf32>
    tpu.vector_store %arg23[%c0_99, %c512], %61 {strides = array<i32>} : memref<8x640xf32, #tpu.memory_space<vmem>>, vector<8x32xf32>,
    %cst_100 = arith.constant 0.000000e+00 : f32
    %128 = vector.broadcast %cst_100 : f32 to vector<16x128xf32>
    %c0_101 = arith.constant 0 : index
    %c0_102 = arith.constant 0 : index
    %129 = vector.load %arg24[%c0_101, %c0_102] : memref<16x128xf32, #tpu.memory_space<vmem>>, vector<16x128xf32>
    tpu.vector_store %arg24[%c0_101, %c0_102], %128 {strides = array<i32>} : memref<16x128xf32, #tpu.memory_space<vmem>>, vector<16x128xf32>,
    %c0_103 = arith.constant 0 : index
    %c0_104 = arith.constant 0 : index
    %130 = vector.load %arg24[%c0_103, %c0_104] : memref<16x128xf32, #tpu.memory_space<vmem>>, vector<16x16xf32>
    tpu.vector_store %arg24[%c0_103, %c0_104], %26 {strides = array<i32>} : memref<16x128xf32, #tpu.memory_space<vmem>>, vector<16x16xf32>,
    return
  }
}

</mosaic_0001>

<llo_original>
// kernel: vae_forward.1
$region0: #{vae_forward.1}
  #allocation0 [shape = 'u32[]', space=smem, size = 0x4, offset = 0x4, fixed_abs, tag = 'smem constant byte address 0x4 - core index']
  #allocation1 [shape = 'u32[144,128]{1,0:T(1,128)}', space=vmem, size = 0x12000, scoped, tag = 'internal scratch']
  %s0 = inlined_call_operand.vmem [shape: f32[8,16], index: 0, kind: input, shape index: {}]
  %s1 = inlined_call_operand.vmem [shape: f32[8,32], index: 1, kind: input, shape index: {}]
  %s2 = inlined_call_operand.hbm [shape: f32[16,32], index: 2, kind: input, shape index: {}]
  %s3 = inlined_call_operand.hbm [shape: f32[1,32], index: 3, kind: input, shape index: {}]
  %s4 = inlined_call_operand.vmem [shape: f32[32,512], index: 4, kind: input, shape index: {}]
  %s5 = inlined_call_operand.hbm [shape: f32[1,512], index: 5, kind: input, shape index: {}]
  %s6 = inlined_call_operand.vmem [shape: f32[512,256], index: 6, kind: input, shape index: {}]
  %s7 = inlined_call_operand.hbm [shape: f32[1,256], index: 7, kind: input, shape index: {}]
  %s8 = inlined_call_operand.vmem [shape: f32[256,16], index: 8, kind: input, shape index: {}]
  %s9 = inlined_call_operand.hbm [shape: f32[1,16], index: 9, kind: input, shape index: {}]
  %s10 = inlined_call_operand.hbm [shape: f32[32,256], index: 10, kind: input, shape index: {}]
  %s11 = inlined_call_operand.hbm [shape: f32[1,256], index: 11, kind: input, shape index: {}]
  %s12 = inlined_call_operand.hbm [shape: f32[256,512], index: 12, kind: input, shape index: {}]
  %s13 = inlined_call_operand.hbm [shape: f32[1,512], index: 13, kind: input, shape index: {}]
  %s14 = inlined_call_operand.hbm [shape: f32[512,256], index: 14, kind: input, shape index: {}]
  %s15 = inlined_call_operand.hbm [shape: f32[1,256], index: 15, kind: input, shape index: {}]
  %s16 = inlined_call_operand.vmem [shape: f32[256,16], index: 16, kind: input, shape index: {}]
  %s17 = inlined_call_operand.hbm [shape: f32[1,16], index: 17, kind: input, shape index: {}]
  %s18 = inlined_call_operand.vmem [shape: f32[32,512], index: 18, kind: input, shape index: {}]
  %s19 = inlined_call_operand.hbm [shape: f32[8,512], index: 19, kind: input, shape index: {}]
  %s20 = inlined_call_operand.hbm [shape: f32[1,512], index: 20, kind: input, shape index: {}]
  %s21 = inlined_call_operand.vmem [shape: f32[512,32], index: 21, kind: input, shape index: {}]
  %s22 = inlined_call_operand.hbm [shape: f32[1,32], index: 22, kind: input, shape index: {}]
  %s23 = inlined_call_operand.vmem [shape: f32[8,640], index: 23, kind: output, shape index: {0}]
  %s24 = inlined_call_operand.vmem [shape: f32[16,128], index: 24, kind: output, shape index: {1}]
  %25 = xla_tuple %s23, %s24
  %s26 = sld [smem:[#allocation0]]
  $region170: #{vae_forward.1} parent=0
    _
  %s28 = ssub.s32 1, %s26
  %s29 = scalar_select 0, %s28, %s26
  $region1: #{vae_forward.1} parent=0
    #allocation2 [shape = 'u8[8192]{0}', space=vmem, size = 0x2000, scoped, tag = 'input window, operand 2, single buffered']
    #allocation3 [shape = 's32[1]{0}', space=sflag, size = 0x4, scoped, tag = 'scoped memory for vae_forward.1']
    #allocation4 [shape = 'u8[512]{0}', space=vmem, size = 0x400, scoped, tag = 'input window, operand 3, single buffered']
    #allocation5 [shape = 's32[1]{0}', space=sflag, size = 0x4, scoped, tag = 'scoped memory for vae_forward.1']
    #allocation6 [shape = 'u8[2048]{0}', space=vmem, size = 0x800, scoped, tag = 'input window, operand 5, single buffered']
    #allocation7 [shape = 'u8[1024]{0}', space=vmem, size = 0x400, scoped, tag = 'input window, operand 7, single buffered']
    #allocation8 [shape = 's32[1]{0}', space=sflag, size = 0x4, scoped, tag = 'scoped memory for vae_forward.1']
    #allocation9 [shape = 'u8[512]{0}', space=vmem, size = 0x400, scoped, tag = 'input window, operand 9, single buffered']
    #allocation10 [shape = 'u8[32768]{0}', space=vmem, size = 0x8000, scoped, tag = 'input window, operand 10, single buffered']
    #allocation11 [shape = 's32[1]{0}', space=sflag, size = 0x4, scoped, tag = 'scoped memory for vae_forward.1']
    #allocation12 [shape = 'u8[1024]{0}', space=vmem, size = 0x400, scoped, tag = 'input window, operand 11, single buffered']
    #allocation13 [shape = 'u8[524288]{0}', space=vmem, size = 0x80000, scoped, tag = 'input window, operand 12, single buffered']
    #allocation14 [shape = 's32[1]{0}', space=sflag, size = 0x4, scoped, tag = 'scoped memory for vae_forward.1']
    #allocation15 [shape = 'u8[2048]{0}', space=vmem, size = 0x800, scoped, tag = 'input window, operand 13, single buffered']
    #allocation16 [shape = 'u8[524288]{0}', space=vmem, size = 0x80000, scoped, tag = 'input window, operand 14, single buffered']
    #allocation17 [shape = 's32[1]{0}', space=sflag, size = 0x4, scoped, tag = 'scoped memory for vae_forward.1']
    #allocation18 [shape = 'u8[1024]{0}', space=vmem, size = 0x400, scoped, tag = 'input window, operand 15, single buffered']
    #allocation19 [shape = 'u8[512]{0}', space=vmem, size = 0x400, scoped, tag = 'input window, operand 17, single buffered']
    #allocation20 [shape = 's32[1]{0}', space=sflag, size = 0x4, scoped, tag = 'scoped memory for vae_forward.1']
    #allocation21 [shape = 'u8[16384]{0}', space=vmem, size = 0x4000, scoped, tag = 'input window, operand 19, single buffered']
    #allocation22 [shape = 'u8[2048]{0}', space=vmem, size = 0x800, scoped, tag = 'input window, operand 20, single buffered']
    #allocation23 [shape = 's32[1]{0}', space=sflag, size = 0x4, scoped, tag = 'scoped memory for vae_forward.1']
    #allocation24 [shape = 'u8[512]{0}', space=vmem, size = 0x400, scoped, tag = 'input window, operand 22, single buffered']
    %30 = vsyncpa [#allocation3], 0
    %31 = vsyncpa [#allocation5], 0
    %32 = vsyncpa [#allocation8], 0
    %33 = vsyncpa [#allocation11], 0
    %34 = vsyncpa [#allocation14], 0
    %35 = vsyncpa [#allocation17], 0
    %36 = vsyncpa [#allocation20], 0
    %37 = vsyncpa [#allocation23], 0
    // Predicated region
    $region2: #{vae_forward.1} parent=1 // pred_check
      _
    $region3: #{vae_forward.1} parent=1 // pred_check_branch
      %39 = sbr.rel (0) target = $region5
    $region4: #{vae_forward.1} parent=1 // pred_region
      _
    $region5: #{vae_forward.1} parent=1 // pred_fallthru
      _
    // Predicated region
    $region6: #{vae_forward.1} parent=1 // pred_check
      _
    $region7: #{vae_forward.1} parent=1 // pred_check_branch
      %41 = sbr.rel (0) target = $region9
    $region8: #{vae_forward.1} parent=1 // pred_region
      _
    $region9: #{vae_forward.1} parent=1 // pred_fallthru
      _
    // Predicated region
    $region10: #{vae_forward.1} parent=1 // pred_check
      _
    $region11: #{vae_forward.1} parent=1 // pred_check_branch
      %43 = sbr.rel (0) target = $region13
    $region12: #{vae_forward.1} parent=1 // pred_region
      %s45 = ssub.s32 256, 256
      %46 = vsyncadd [#allocation3], %s45
      %s47 = sshll.u32 [#allocation2], 4
      %s48 = int_to_ptr.vmem [resolvable:$true] %s47
      %53 = dma.hbm_to_vmem [thread:$0]  %s2, 256, %s48, [#allocation3], 128, 128, 8
    $region13: #{vae_forward.1} parent=1 // pred_fallthru
      _
    // Predicated region
    $region14: #{vae_forward.1} parent=1 // pred_check
      _
    $region15: #{vae_forward.1} parent=1 // pred_check_branch
      %55 = sbr.rel (0) target = $region17
    $region16: #{vae_forward.1} parent=1 // pred_region
      %s57 = ssub.s32 16, 16
      %58 = vsyncadd [#allocation5], %s57
      %s60 = sshll.u32 [#allocation4], 4
      %s61 = int_to_ptr.vmem [resolvable:$true] %s60
      %63 = dma.hbm_to_vmem [thread:$0]  %s3, 16, %s61, [#allocation5]
    $region17: #{vae_forward.1} parent=1 // pred_fallthru
      _
    // Predicated region
    $region18: #{vae_forward.1} parent=1 // pred_check
      _
    $region19: #{vae_forward.1} parent=1 // pred_check_branch
      %65 = sbr.rel (0) target = $region21
    $region20: #{vae_forward.1} parent=1 // pred_region
      _
    $region21: #{vae_forward.1} parent=1 // pred_fallthru
      _
    // Predicated region
    $region22: #{vae_forward.1} parent=1 // pred_check
      _
    $region23: #{vae_forward.1} parent=1 // pred_check_branch
      %67 = sbr.rel (0) target = $region25
    $region24: #{vae_forward.1} parent=1 // pred_region
      %s69 = ssub.s32 64, 64
      %70 = vsyncadd [#allocation5], %s69
      %s72 = sshll.u32 [#allocation6], 4
      %s73 = int_to_ptr.vmem [resolvable:$true] %s72
      %75 = dma.hbm_to_vmem [thread:$0]  %s5, 64, %s73, [#allocation5]
    $region25: #{vae_forward.1} parent=1 // pred_fallthru
      _
    // Predicated region
    $region26: #{vae_forward.1} parent=1 // pred_check
      _
    $region27: #{vae_forward.1} parent=1 // pred_check_branch
      %77 = sbr.rel (0) target = $region29
    $region28: #{vae_forward.1} parent=1 // pred_region
      _
    $region29: #{vae_forward.1} parent=1 // pred_fallthru
      _
    // Predicated region
    $region30: #{vae_forward.1} parent=1 // pred_check
      _
    $region31: #{vae_forward.1} parent=1 // pred_check_branch
      %79 = sbr.rel (0) target = $region33
    $region32: #{vae_forward.1} parent=1 // pred_region
      %s81 = ssub.s32 32, 32
      %82 = vsyncadd [#allocation8], %s81
      %s84 = sshll.u32 [#allocation7], 4
      %s85 = int_to_ptr.vmem [resolvable:$true] %s84
      %87 = dma.hbm_to_vmem [thread:$0]  %s7, 32, %s85, [#allocation8]
    $region33: #{vae_forward.1} parent=1 // pred_fallthru
      _
    // Predicated region
    $region34: #{vae_forward.1} parent=1 // pred_check
      _
    $region35: #{vae_forward.1} parent=1 // pred_check_branch
      %89 = sbr.rel (0) target = $region37
    $region36: #{vae_forward.1} parent=1 // pred_region
      _
    $region37: #{vae_forward.1} parent=1 // pred_fallthru
      _
    // Predicated region
    $region38: #{vae_forward.1} parent=1 // pred_check
      _
    $region39: #{vae_forward.1} parent=1 // pred_check_branch
      %91 = sbr.rel (0) target = $region41
    $region40: #{vae_forward.1} parent=1 // pred_region
      %s93 = ssub.s32 16, 16
      %94 = vsyncadd [#allocation8], %s93
      %s96 = sshll.u32 [#allocation9], 4
      %s97 = int_to_ptr.vmem [resolvable:$true] %s96
      %99 = dma.hbm_to_vmem [thread:$0]  %s9, 16, %s97, [#allocation8]
    $region41: #{vae_forward.1} parent=1 // pred_fallthru
      _
    // Predicated region
    $region42: #{vae_forward.1} parent=1 // pred_check
      _
    $region43: #{vae_forward.1} parent=1 // pred_check_branch
      %101 = sbr.rel (0) target = $region45
    $region44: #{vae_forward.1} parent=1 // pred_region
      %s103 = ssub.s32 1024, 1024
      %104 = vsyncadd [#allocation11], %s103
      %s105 = sshll.u32 [#allocation10], 4
      %s106 = int_to_ptr.vmem [resolvable:$true] %s105
      %111 = dma.hbm_to_vmem [thread:$0]  %s10, 1024, %s106, [#allocation11], 256, 256, 16
    $region45: #{vae_forward.1} parent=1 // pred_fallthru
      _
    // Predicated region
    $region46: #{vae_forward.1} parent=1 // pred_check
      _
    $region47: #{vae_forward.1} parent=1 // pred_check_branch
      %113 = sbr.rel (0) target = $region49
    $region48: #{vae_forward.1} parent=1 // pred_region
      %s115 = ssub.s32 32, 32
      %116 = vsyncadd [#allocation11], %s115
      %s118 = sshll.u32 [#allocation12], 4
      %s119 = int_to_ptr.vmem [resolvable:$true] %s118
      %121 = dma.hbm_to_vmem [thread:$0]  %s11, 32, %s119, [#allocation11]
    $region49: #{vae_forward.1} parent=1 // pred_fallthru
      _
    // Predicated region
    $region50: #{vae_forward.1} parent=1 // pred_check
      _
    $region51: #{vae_forward.1} parent=1 // pred_check_branch
      %123 = sbr.rel (0) target = $region53
    $region52: #{vae_forward.1} parent=1 // pred_region
      %s125 = ssub.s32 16384, 16384
      %126 = vsyncadd [#allocation14], %s125
      %s127 = sshll.u32 [#allocation13], 4
      %s128 = int_to_ptr.vmem [resolvable:$true] %s127
      %133 = dma.hbm_to_vmem [thread:$0]  %s12, 16384, %s128, [#allocation14], 512, 512, 32
    $region53: #{vae_forward.1} parent=1 // pred_fallthru
      _
    // Predicated region
    $region54: #{vae_forward.1} parent=1 // pred_check
      _
    $region55: #{vae_forward.1} parent=1 // pred_check_branch
      %135 = sbr.rel (0) target = $region57
    $region56: #{vae_forward.1} parent=1 // pred_region
      %s137 = ssub.s32 64, 64
      %138 = vsyncadd [#allocation14], %s137
      %s140 = sshll.u32 [#allocation15], 4
      %s141 = int_to_ptr.vmem [resolvable:$true] %s140
      %143 = dma.hbm_to_vmem [thread:$0]  %s13, 64, %s141, [#allocation14]
    $region57: #{vae_forward.1} parent=1 // pred_fallthru
      _
    // Predicated region
    $region58: #{vae_forward.1} parent=1 // pred_check
      _
    $region59: #{vae_forward.1} parent=1 // pred_check_branch
      %145 = sbr.rel (0) target = $region61
    $region60: #{vae_forward.1} parent=1 // pred_region
      %s147 = ssub.s32 16384, 16384
      %148 = vsyncadd [#allocation17], %s147
      %s149 = sshll.u32 [#allocation16], 4
      %s150 = int_to_ptr.vmem [resolvable:$true] %s149
      %155 = dma.hbm_to_vmem [thread:$0]  %s14, 16384, %s150, [#allocation17], 256, 256, 16
    $region61: #{vae_forward.1} parent=1 // pred_fallthru
      _
    // Predicated region
    $region62: #{vae_forward.1} parent=1 // pred_check
      _
    $region63: #{vae_forward.1} parent=1 // pred_check_branch
      %157 = sbr.rel (0) target = $region65
    $region64: #{vae_forward.1} parent=1 // pred_region
      %s159 = ssub.s32 32, 32
      %160 = vsyncadd [#allocation17], %s159
      %s162 = sshll.u32 [#allocation18], 4
      %s163 = int_to_ptr.vmem [resolvable:$true] %s162
      %165 = dma.hbm_to_vmem [thread:$0]  %s15, 32, %s163, [#allocation17]
    $region65: #{vae_forward.1} parent=1 // pred_fallthru
      _
    // Predicated region
    $region66: #{vae_forward.1} parent=1 // pred_check
      _
    $region67: #{vae_forward.1} parent=1 // pred_check_branch
      %167 = sbr.rel (0) target = $region69
    $region68: #{vae_forward.1} parent=1 // pred_region
      _
    $region69: #{vae_forward.1} parent=1 // pred_fallthru
      _
    // Predicated region
    $region70: #{vae_forward.1} parent=1 // pred_check
      _
    $region71: #{vae_forward.1} parent=1 // pred_check_branch
      %169 = sbr.rel (0) target = $region73
    $region72: #{vae_forward.1} parent=1 // pred_region
      %s171 = ssub.s32 16, 16
      %172 = vsyncadd [#allocation20], %s171
      %s174 = sshll.u32 [#allocation19], 4
      %s175 = int_to_ptr.vmem [resolvable:$true] %s174
      %177 = dma.hbm_to_vmem [thread:$0]  %s17, 16, %s175, [#allocation20]
    $region73: #{vae_forward.1} parent=1 // pred_fallthru
      _
    // Predicated region
    $region74: #{vae_forward.1} parent=1 // pred_check
      _
    $region75: #{vae_forward.1} parent=1 // pred_check_branch
      %179 = sbr.rel (0) target = $region77
    $region76: #{vae_forward.1} parent=1 // pred_region
      _
    $region77: #{vae_forward.1} parent=1 // pred_fallthru
      _
    // Predicated region
    $region78: #{vae_forward.1} parent=1 // pred_check
      _
    $region79: #{vae_forward.1} parent=1 // pred_check_branch
      %181 = sbr.rel (0) target = $region81
    $region80: #{vae_forward.1} parent=1 // pred_region
      %s183 = ssub.s32 512, 512
      %184 = vsyncadd [#allocation20], %s183
      %s186 = sshll.u32 [#allocation21], 4
      %s187 = int_to_ptr.vmem [resolvable:$true] %s186
      %189 = dma.hbm_to_vmem [thread:$0]  %s19, 512, %s187, [#allocation20]
    $region81: #{vae_forward.1} parent=1 // pred_fallthru
      _
    // Predicated region
    $region82: #{vae_forward.1} parent=1 // pred_check
      _
    $region83: #{vae_forward.1} parent=1 // pred_check_branch
      %191 = sbr.rel (0) target = $region85
    $region84: #{vae_forward.1} parent=1 // pred_region
      %s193 = ssub.s32 64, 64
      %194 = vsyncadd [#allocation23], %s193
      %s196 = sshll.u32 [#allocation22], 4
      %s197 = int_to_ptr.vmem [resolvable:$true] %s196
      %199 = dma.hbm_to_vmem [thread:$0]  %s20, 64, %s197, [#allocation23]
    $region85: #{vae_forward.1} parent=1 // pred_fallthru
      _
    // Predicated region
    $region86: #{vae_forward.1} parent=1 // pred_check
      _
    $region87: #{vae_forward.1} parent=1 // pred_check_branch
      %201 = sbr.rel (0) target = $region89
    $region88: #{vae_forward.1} parent=1 // pred_region
      _
    $region89: #{vae_forward.1} parent=1 // pred_fallthru
      _
    // Predicated region
    $region90: #{vae_forward.1} parent=1 // pred_check
      _
    $region91: #{vae_forward.1} parent=1 // pred_check_branch
      %203 = sbr.rel (0) target = $region93
    $region92: #{vae_forward.1} parent=1 // pred_region
      %s205 = ssub.s32 16, 16
      %206 = vsyncadd [#allocation23], %s205
      %s208 = sshll.u32 [#allocation24], 4
      %s209 = int_to_ptr.vmem [resolvable:$true] %s208
      %211 = dma.hbm_to_vmem [thread:$0]  %s22, 16, %s209, [#allocation23]
    $region93: #{vae_forward.1} parent=1 // pred_fallthru
      _
    // Predicated region
    $region94: #{vae_forward.1} parent=1 // pred_check
      _
    $region95: #{vae_forward.1} parent=1 // pred_check_branch
      %213 = sbr.rel (0) target = $region97
    $region96: #{vae_forward.1} parent=1 // pred_region
      %214 = dma.done [#allocation3], 256
    $region97: #{vae_forward.1} parent=1 // pred_fallthru
      _
    // Predicated region
    $region98: #{vae_forward.1} parent=1 // pred_check
      _
    $region99: #{vae_forward.1} parent=1 // pred_check_branch
      %216 = sbr.rel (0) target = $region101
    $region100: #{vae_forward.1} parent=1 // pred_region
      %217 = dma.done [#allocation5], 16
    $region101: #{vae_forward.1} parent=1 // pred_fallthru
      _
    // Predicated region
    $region102: #{vae_forward.1} parent=1 // pred_check
      _
    $region103: #{vae_forward.1} parent=1 // pred_check_branch
      %219 = sbr.rel (0) target = $region105
    $region104: #{vae_forward.1} parent=1 // pred_region
      %220 = dma.done [#allocation5], 64
    $region105: #{vae_forward.1} parent=1 // pred_fallthru
      _
    // Predicated region
    $region106: #{vae_forward.1} parent=1 // pred_check
      _
    $region107: #{vae_forward.1} parent=1 // pred_check_branch
      %222 = sbr.rel (0) target = $region109
    $region108: #{vae_forward.1} parent=1 // pred_region
      %223 = dma.done [#allocation8], 32
    $region109: #{vae_forward.1} parent=1 // pred_fallthru
      _
    // Predicated region
    $region110: #{vae_forward.1} parent=1 // pred_check
      _
    $region111: #{vae_forward.1} parent=1 // pred_check_branch
      %225 = sbr.rel (0) target = $region113
    $region112: #{vae_forward.1} parent=1 // pred_region
      %226 = dma.done [#allocation8], 16
    $region113: #{vae_forward.1} parent=1 // pred_fallthru
      _
    // Predicated region
    $region114: #{vae_forward.1} parent=1 // pred_check
      _
    $region115: #{vae_forward.1} parent=1 // pred_check_branch
      %228 = sbr.rel (0) target = $region117
    $region116: #{vae_forward.1} parent=1 // pred_region
      %229 = dma.done [#allocation11], 1024
    $region117: #{vae_forward.1} parent=1 // pred_fallthru
      _
    // Predicated region
    $region118: #{vae_forward.1} parent=1 // pred_check
      _
    $region119: #{vae_forward.1} parent=1 // pred_check_branch
      %231 = sbr.rel (0) target = $region121
    $region120: #{vae_forward.1} parent=1 // pred_region
      %232 = dma.done [#allocation11], 32
    $region121: #{vae_forward.1} parent=1 // pred_fallthru
      _
    // Predicated region
    $region122: #{vae_forward.1} parent=1 // pred_check
      _
    $region123: #{vae_forward.1} parent=1 // pred_check_branch
      %234 = sbr.rel (0) target = $region125
    $region124: #{vae_forward.1} parent=1 // pred_region
      %235 = dma.done [#allocation14], 16384
    $region125: #{vae_forward.1} parent=1 // pred_fallthru
      _
    // Predicated region
    $region126: #{vae_forward.1} parent=1 // pred_check
      _
    $region127: #{vae_forward.1} parent=1 // pred_check_branch
      %237 = sbr.rel (0) target = $region129
    $region128: #{vae_forward.1} parent=1 // pred_region
      %238 = dma.done [#allocation14], 64
    $region129: #{vae_forward.1} parent=1 // pred_fallthru
      _
    // Predicated region
    $region130: #{vae_forward.1} parent=1 // pred_check
      _
    $region131: #{vae_forward.1} parent=1 // pred_check_branch
      %240 = sbr.rel (0) target = $region133
    $region132: #{vae_forward.1} parent=1 // pred_region
      %241 = dma.done [#allocation17], 16384
    $region133: #{vae_forward.1} parent=1 // pred_fallthru
      _
    // Predicated region
    $region134: #{vae_forward.1} parent=1 // pred_check
      _
    $region135: #{vae_forward.1} parent=1 // pred_check_branch
      %243 = sbr.rel (0) target = $region137
    $region136: #{vae_forward.1} parent=1 // pred_region
      %244 = dma.done [#allocation17], 32
    $region137: #{vae_forward.1} parent=1 // pred_fallthru
      _
    // Predicated region
    $region138: #{vae_forward.1} parent=1 // pred_check
      _
    $region139: #{vae_forward.1} parent=1 // pred_check_branch
      %246 = sbr.rel (0) target = $region141
    $region140: #{vae_forward.1} parent=1 // pred_region
      %247 = dma.done [#allocation20], 16
    $region141: #{vae_forward.1} parent=1 // pred_fallthru
      _
    // Predicated region
    $region142: #{vae_forward.1} parent=1 // pred_check
      _
    $region143: #{vae_forward.1} parent=1 // pred_check_branch
      %249 = sbr.rel (0) target = $region145
    $region144: #{vae_forward.1} parent=1 // pred_region
      %250 = dma.done [#allocation20], 512
    $region145: #{vae_forward.1} parent=1 // pred_fallthru
      _
    // Predicated region
    $region146: #{vae_forward.1} parent=1 // pred_check
      _
    $region147: #{vae_forward.1} parent=1 // pred_check_branch
      %252 = sbr.rel (0) target = $region149
    $region148: #{vae_forward.1} parent=1 // pred_region
      %253 = dma.done [#allocation23], 64
    $region149: #{vae_forward.1} parent=1 // pred_fallthru
      _
    // Predicated region
    $region150: #{vae_forward.1} parent=1 // pred_check
      _
    $region151: #{vae_forward.1} parent=1 // pred_check_branch
      %255 = sbr.rel (0) target = $region153
    $region152: #{vae_forward.1} parent=1 // pred_region
      %256 = dma.done [#allocation23], 16
    $region153: #{vae_forward.1} parent=1 // pred_fallthru
      _
    %v257 = vld [vmem:[%s0] sm:$0xff]
    %v258 = vld [vmem:[%s1] sm:$0xff]
    %v259 = vld [vmem:[#allocation2] sm:$0xff]
    %v260 = vld [vmem:[#allocation2 + $0x8] sm:$0xff]
    %v261 = vld [vmem:[#allocation4] sm:$0x1]
    %v263 = vlaneseq
    %v264 = vshrl.u32 %v263, 7
    %v265 = vsub.s32 0, %v264
    %v266 = vrot.slane %v261, %v265
    %v268 = vadd.f32 %v259, %v266
    %v269 = vadd.f32 %v260, %v266
    %v270 = vmax.f32 %v268, 0.0
    %v271 = vmax.f32 %v269, 0.0
    %v272 = vld [vmem:[%s4] sm:$0xff]
    %v273 = vld [vmem:[%s4 + $0x8] sm:$0xff]
    %v274 = vld [vmem:[%s4 + $0x10] sm:$0xff]
    %v275 = vld [vmem:[%s4 + $0x18] sm:$0xff]
    %v276 = vld [vmem:[%s4 + $0x20] sm:$0xff]
    %v277 = vld [vmem:[%s4 + $0x28] sm:$0xff]
    %v278 = vld [vmem:[%s4 + $0x30] sm:$0xff]
    %v279 = vld [vmem:[%s4 + $0x38] sm:$0xff]
    %v280 = vld [vmem:[%s4 + $0x40] sm:$0xff]
    %v281 = vld [vmem:[%s4 + $0x48] sm:$0xff]
    %v282 = vld [vmem:[%s4 + $0x50] sm:$0xff]
    %v283 = vld [vmem:[%s4 + $0x58] sm:$0xff]
    %v284 = vld [vmem:[%s4 + $0x60] sm:$0xff]
    %v285 = vld [vmem:[%s4 + $0x68] sm:$0xff]
    %v286 = vld [vmem:[%s4 + $0x70] sm:$0xff]
    %v287 = vld [vmem:[%s4 + $0x78] sm:$0xff]
    %v288 = vld [vmem:[#allocation6] sm:$0xf]
    %v290 = vlaneseq
    %v291 = vshrl.u32 %v290, 7
    %v292 = vsub.s32 0, %v291
    %v293 = vrot.slane %v288, %v292
    %v294 = vlaneseq
    %v295 = vshrl.u32 %v294, 7
    %v296 = vsub.s32 1, %v295
    %v297 = vrot.slane %v288, %v296
    %v298 = vlaneseq
    %v299 = vshrl.u32 %v298, 7
    %v300 = vsub.s32 2, %v299
    %v301 = vrot.slane %v288, %v300
    %v302 = vlaneseq
    %v303 = vshrl.u32 %v302, 7
    %v304 = vsub.s32 3, %v303
    %v305 = vrot.slane %v288, %v304
    %vm310 = vcmask 261120
    %v312 = vsel %vm310, %v270, 0
    %v315 = vsel %vm310, %v271, 0
    %317 = vmatprep.subr.mxu0 %v273
    %318 = vmatpush1.msra.mxu0 %v272
    %319 = vmatprep.subr.mxu0 %v277
    %320 = vmatpush1.msra.mxu0 %v276
    %321 = vmatprep.subr.mxu0 %v281
    %322 = vmatpush1.msra.mxu0 %v280
    %323 = vmatprep.subr.mxu0 %v285
    %324 = vmatpush1.msra.mxu0 %v284
    %325 = vmatprep.subr.mxu0 0.0
    %326 = vmatpush1.msra.mxu0 0.0
    %327 = vmatprep.subr.mxu0 0.0
    %328 = vmatpush1.msra.mxu0 0.0
    %329 = vmatprep.subr.mxu0 0.0
    %330 = vmatpush1.msra.mxu0 0.0
    %331 = vmatprep.subr.mxu0 0.0
    %332 = vmatpush1.msra.mxu0 0.0
    %333 = vmatprep.subr.mxu0 0.0
    %334 = vmatpush1.msra.mxu0 0.0
    %335 = vmatprep.subr.mxu0 0.0
    %336 = vmatpush1.msra.mxu0 0.0
    %337 = vmatprep.subr.mxu0 0.0
    %338 = vmatpush1.msra.mxu0 0.0
    %339 = vmatprep.subr.mxu0 0.0
    %340 = vmatpush1.msra.mxu0 0.0
    %341 = vmatprep.subr.mxu0 0.0
    %342 = vmatpush1.msra.mxu0 0.0
    %343 = vmatprep.subr.mxu0 0.0
    %344 = vmatpush1.msra.mxu0 0.0
    %345 = vmatprep.subr.mxu0 0.0
    %346 = vmatpush1.msra.mxu0 0.0
    %347 = vmatprep.subr.mxu0 0.0
    %348 = vmatpush1.msra.mxu0 0.0
    %349 = vmatprep.subr.mxu0 0.0
    %350 = vmatpush1.msra.mxu0 0.0
    %351 = vmatprep.subr.mxu0 0.0
    %352 = vmatpush1.msra.mxu0 0.0
    %353 = vmatprep.subr.mxu0 0.0
    %354 = vmatpush1.msra.mxu0 0.0
    %355 = vmatprep.subr.mxu0 0.0
    %356 = vmatpush1.msra.mxu0 0.0
    %357 = vmatprep.subr.mxu0 0.0
    %358 = vmatpush1.msra.mxu0 0.0
    %359 = vmatprep.subr.mxu0 0.0
    %360 = vmatpush1.msra.mxu0 0.0
    %361 = vmatprep.subr.mxu0 0.0
    %362 = vmatpush1.msra.mxu0 0.0
    %363 = vmatprep.subr.mxu0 0.0
    %364 = vmatpush1.msra.mxu0 0.0
    %365 = vmatprep.subr.mxu0 0.0
    %366 = vmatpush1.msra.mxu0 0.0
    %367 = vmatprep.subr.mxu0 0.0
    %368 = vmatpush1.msra.mxu0 0.0
    %369 = vmatprep.subr.mxu0 0.0
    %370 = vmatpush1.msra.mxu0 0.0
    %371 = vmatprep.subr.mxu0 0.0
    %372 = vmatpush1.msra.mxu0 0.0
    %373 = vmatprep.subr.mxu0 0.0
    %374 = vmatpush1.msra.mxu0 0.0
    %375 = vmatprep.subr.mxu0 0.0
    %376 = vmatpush1.msra.mxu0 0.0
    %377 = vmatprep.subr.mxu0 0.0
    %378 = vmatpush1.msra.mxu0 0.0
    %379 = vmatprep.subr.mxu0 0.0
    %380 = vmatpush1.msra.mxu0 0.0
    %381 = vmatprep.mubr.f32.mxu0 0.0
    %382 = vmatmul.mubr.f32.gmra.mrb[0].mxu0 %v312
    %v383 = vpop.f32.mrb[0].mxu0
    %v384 = vadd.f32 %v293, %v383
    %v385 = vpop.f32.mrb[0].mxu0
    %v386 = vadd.f32 %v297, %v385
    %387 = vmatprep.mubr.f32.mxu0 0.0
    %388 = vmatmul.mubr.f32.gmra.mrb[0].mxu0 %v315
    %v389 = vpop.f32.mrb[0].mxu0
    %v390 = vadd.f32 %v293, %v389
    %v391 = vpop.f32.mrb[0].mxu0
    %v392 = vadd.f32 %v297, %v391
    %393 = vdwg.mxu0
    %394 = vmatprep.subr.mxu0 %v275
    %395 = vmatpush1.msra.mxu0 %v274
    %396 = vmatprep.subr.mxu0 %v279
    %397 = vmatpush1.msra.mxu0 %v278
    %398 = vmatprep.subr.mxu0 %v283
    %399 = vmatpush1.msra.mxu0 %v282
    %400 = vmatprep.subr.mxu0 %v287
    %401 = vmatpush1.msra.mxu0 %v286
    %402 = vmatprep.subr.mxu0 0.0
    %403 = vmatpush1.msra.mxu0 0.0
    %404 = vmatprep.subr.mxu0 0.0
    %405 = vmatpush1.msra.mxu0 0.0
    %406 = vmatprep.subr.mxu0 0.0
    %407 = vmatpush1.msra.mxu0 0.0
    %408 = vmatprep.subr.mxu0 0.0
    %409 = vmatpush1.msra.mxu0 0.0
    %410 = vmatprep.subr.mxu0 0.0
    %411 = vmatpush1.msra.mxu0 0.0
    %412 = vmatprep.subr.mxu0 0.0
    %413 = vmatpush1.msra.mxu0 0.0
    %414 = vmatprep.subr.mxu0 0.0
    %415 = vmatpush1.msra.mxu0 0.0
    %416 = vmatprep.subr.mxu0 0.0
    %417 = vmatpush1.msra.mxu0 0.0
    %418 = vmatprep.subr.mxu0 0.0
    %419 = vmatpush1.msra.mxu0 0.0
    %420 = vmatprep.subr.mxu0 0.0
    %421 = vmatpush1.msra.mxu0 0.0
    %422 = vmatprep.subr.mxu0 0.0
    %423 = vmatpush1.msra.mxu0 0.0
    %424 = vmatprep.subr.mxu0 0.0
    %425 = vmatpush1.msra.mxu0 0.0
    %426 = vmatprep.subr.mxu0 0.0
    %427 = vmatpush1.msra.mxu0 0.0
    %428 = vmatprep.subr.mxu0 0.0
    %429 = vmatpush1.msra.mxu0 0.0
    %430 = vmatprep.subr.mxu0 0.0
    %431 = vmatpush1.msra.mxu0 0.0
    %432 = vmatprep.subr.mxu0 0.0
    %433 = vmatpush1.msra.mxu0 0.0
    %434 = vmatprep.subr.mxu0 0.0
    %435 = vmatpush1.msra.mxu0 0.0
    %436 = vmatprep.subr.mxu0 0.0
    %437 = vmatpush1.msra.mxu0 0.0
    %438 = vmatprep.subr.mxu0 0.0
    %439 = vmatpush1.msra.mxu0 0.0
    %440 = vmatprep.subr.mxu0 0.0
    %441 = vmatpush1.msra.mxu0 0.0
    %442 = vmatprep.subr.mxu0 0.0
    %443 = vmatpush1.msra.mxu0 0.0
    %444 = vmatprep.subr.mxu0 0.0
    %445 = vmatpush1.msra.mxu0 0.0
    %446 = vmatprep.subr.mxu0 0.0
    %447 = vmatpush1.msra.mxu0 0.0
    %448 = vmatprep.subr.mxu0 0.0
    %449 = vmatpush1.msra.mxu0 0.0
    %450 = vmatprep.subr.mxu0 0.0
    %451 = vmatpush1.msra.mxu0 0.0
    %452 = vmatprep.subr.mxu0 0.0
    %453 = vmatpush1.msra.mxu0 0.0
    %454 = vmatprep.subr.mxu0 0.0
    %455 = vmatpush1.msra.mxu0 0.0
    %456 = vmatprep.subr.mxu0 0.0
    %457 = vmatpush1.msra.mxu0 0.0
    %458 = vmatprep.mubr.f32.mxu0 0.0
    %459 = vmatmul.mubr.f32.gmra.mrb[0].mxu0 %v312
    %v460 = vpop.f32.mrb[0].mxu0
    %v461 = vadd.f32 %v301, %v460
    %v462 = vpop.f32.mrb[0].mxu0
    %v463 = vadd.f32 %v305, %v462
    %464 = vmatprep.mubr.f32.mxu0 0.0
    %465 = vmatmul.mubr.f32.gmra.mrb[0].mxu0 %v315
    %v466 = vpop.f32.mrb[0].mxu0
    %v467 = vadd.f32 %v301, %v466
    %v468 = vpop.f32.mrb[0].mxu0
    %v469 = vadd.f32 %v305, %v468
    %470 = vdwg.mxu0
    %v471 = vmax.f32 %v384, 0.0
    %v472 = vmax.f32 %v386, 0.0
    %v473 = vmax.f32 %v461, 0.0
    %v474 = vmax.f32 %v463, 0.0
    %v475 = vmax.f32 %v390, 0.0
    %v476 = vmax.f32 %v392, 0.0
    %v477 = vmax.f32 %v467, 0.0
    %v478 = vmax.f32 %v469, 0.0
    %v479 = vld [vmem:[%s6] sm:$0xff]
    %v480 = vld [vmem:[%s6 + $0x8] sm:$0xff]
    %v481 = vld [vmem:[%s6 + $0x10] sm:$0xff]
    %v482 = vld [vmem:[%s6 + $0x18] sm:$0xff]
    %v483 = vld [vmem:[%s6 + $0x20] sm:$0xff]
    %v484 = vld [vmem:[%s6 + $0x28] sm:$0xff]
    %v485 = vld [vmem:[%s6 + $0x30] sm:$0xff]
    %v486 = vld [vmem:[%s6 + $0x38] sm:$0xff]
    %v487 = vld [vmem:[%s6 + $0x40] sm:$0xff]
    %v488 = vld [vmem:[%s6 + $0x48] sm:$0xff]
    %v489 = vld [vmem:[%s6 + $0x50] sm:$0xff]
    %v490 = vld [vmem:[%s6 + $0x58] sm:$0xff]
    %v491 = vld [vmem:[%s6 + $0x60] sm:$0xff]
    %v492 = vld [vmem:[%s6 + $0x68] sm:$0xff]
    %v493 = vld [vmem:[%s6 + $0x70] sm:$0xff]
    %v494 = vld [vmem:[%s6 + $0x78] sm:$0xff]
    %v495 = vld [vmem:[%s6 + $0x80] sm:$0xff]
    %v496 = vld [vmem:[%s6 + $0x88] sm:$0xff]
    %v497 = vld [vmem:[%s6 + $0x90] sm:$0xff]
    %v498 = vld [vmem:[%s6 + $0x98] sm:$0xff]
    %v499 = vld [vmem:[%s6 + $0xa0] sm:$0xff]
    %v500 = vld [vmem:[%s6 + $0xa8] sm:$0xff]
    %v501 = vld [vmem:[%s6 + $0xb0] sm:$0xff]
    %v502 = vld [vmem:[%s6 + $0xb8] sm:$0xff]
    %v503 = vld [vmem:[%s6 + $0xc0] sm:$0xff]
    %v504 = vld [vmem:[%s6 + $0xc8] sm:$0xff]
    %v505 = vld [vmem:[%s6 + $0xd0] sm:$0xff]
    %v506 = vld [vmem:[%s6 + $0xd8] sm:$0xff]
    %v507 = vld [vmem:[%s6 + $0xe0] sm:$0xff]
    %v508 = vld [vmem:[%s6 + $0xe8] sm:$0xff]
    %v509 = vld [vmem:[%s6 + $0xf0] sm:$0xff]
    %v510 = vld [vmem:[%s6 + $0xf8] sm:$0xff]
    %v511 = vld [vmem:[%s6 + $0x100] sm:$0xff]
    %v512 = vld [vmem:[%s6 + $0x108] sm:$0xff]
    %v513 = vld [vmem:[%s6 + $0x110] sm:$0xff]
    %v514 = vld [vmem:[%s6 + $0x118] sm:$0xff]
    %v515 = vld [vmem:[%s6 + $0x120] sm:$0xff]
    %v516 = vld [vmem:[%s6 + $0x128] sm:$0xff]
    %v517 = vld [vmem:[%s6 + $0x130] sm:$0xff]
    %v518 = vld [vmem:[%s6 + $0x138] sm:$0xff]
    %v519 = vld [vmem:[%s6 + $0x140] sm:$0xff]
    %v520 = vld [vmem:[%s6 + $0x148] sm:$0xff]
    %v521 = vld [vmem:[%s6 + $0x150] sm:$0xff]
    %v522 = vld [vmem:[%s6 + $0x158] sm:$0xff]
    %v523 = vld [vmem:[%s6 + $0x160] sm:$0xff]
    %v524 = vld [vmem:[%s6 + $0x168] sm:$0xff]
    %v525 = vld [vmem:[%s6 + $0x170] sm:$0xff]
    %v526 = vld [vmem:[%s6 + $0x178] sm:$0xff]
    %v527 = vld [vmem:[%s6 + $0x180] sm:$0xff]
    %v528 = vld [vmem:[%s6 + $0x188] sm:$0xff]
    %v529 = vld [vmem:[%s6 + $0x190] sm:$0xff]
    %v530 = vld [vmem:[%s6 + $0x198] sm:$0xff]
    %v531 = vld [vmem:[%s6 + $0x1a0] sm:$0xff]
    %v532 = vld [vmem:[%s6 + $0x1a8] sm:$0xff]
    %v533 = vld [vmem:[%s6 + $0x1b0] sm:$0xff]
    %v534 = vld [vmem:[%s6 + $0x1b8] sm:$0xff]
    %v535 = vld [vmem:[%s6 + $0x1c0] sm:$0xff]
    %v536 = vld [vmem:[%s6 + $0x1c8] sm:$0xff]
    %v537 = vld [vmem:[%s6 + $0x1d0] sm:$0xff]
    %v538 = vld [vmem:[%s6 + $0x1d8] sm:$0xff]
    %v539 = vld [vmem:[%s6 + $0x1e0] sm:$0xff]
    %v540 = vld [vmem:[%s6 + $0x1e8] sm:$0xff]
    %v541 = vld [vmem:[%s6 + $0x1f0] sm:$0xff]
    %v542 = vld [vmem:[%s6 + $0x1f8] sm:$0xff]
    %v543 = vld [vmem:[%s6 + $0x200] sm:$0xff]
    %v544 = vld [vmem:[%s6 + $0x208] sm:$0xff]
    %v545 = vld [vmem:[%s6 + $0x210] sm:$0xff]
    %v546 = vld [vmem:[%s6 + $0x218] sm:$0xff]
    %v547 = vld [vmem:[%s6 + $0x220] sm:$0xff]
    %v548 = vld [vmem:[%s6 + $0x228] sm:$0xff]
    %v549 = vld [vmem:[%s6 + $0x230] sm:$0xff]
    %v550 = vld [vmem:[%s6 + $0x238] sm:$0xff]
    %v551 = vld [vmem:[%s6 + $0x240] sm:$0xff]
    %v552 = vld [vmem:[%s6 + $0x248] sm:$0xff]
    %v553 = vld [vmem:[%s6 + $0x250] sm:$0xff]
    %v554 = vld [vmem:[%s6 + $0x258] sm:$0xff]
    %v555 = vld [vmem:[%s6 + $0x260] sm:$0xff]
    %v556 = vld [vmem:[%s6 + $0x268] sm:$0xff]
    %v557 = vld [vmem:[%s6 + $0x270] sm:$0xff]
    %v558 = vld [vmem:[%s6 + $0x278] sm:$0xff]
    %v559 = vld [vmem:[%s6 + $0x280] sm:$0xff]
    %v560 = vld [vmem:[%s6 + $0x288] sm:$0xff]
    %v561 = vld [vmem:[%s6 + $0x290] sm:$0xff]
    %v562 = vld [vmem:[%s6 + $0x298] sm:$0xff]
    %v563 = vld [vmem:[%s6 + $0x2a0] sm:$0xff]
    %v564 = vld [vmem:[%s6 + $0x2a8] sm:$0xff]
    %v565 = vld [vmem:[%s6 + $0x2b0] sm:$0xff]
    %v566 = vld [vmem:[%s6 + $0x2b8] sm:$0xff]
    %v567 = vld [vmem:[%s6 + $0x2c0] sm:$0xff]
    %v568 = vld [vmem:[%s6 + $0x2c8] sm:$0xff]
    %v569 = vld [vmem:[%s6 + $0x2d0] sm:$0xff]
    %v570 = vld [vmem:[%s6 + $0x2d8] sm:$0xff]
    %v571 = vld [vmem:[%s6 + $0x2e0] sm:$0xff]
    %v572 = vld [vmem:[%s6 + $0x2e8] sm:$0xff]
    %v573 = vld [vmem:[%s6 + $0x2f0] sm:$0xff]
    %v574 = vld [vmem:[%s6 + $0x2f8] sm:$0xff]
    %v575 = vld [vmem:[%s6 + $0x300] sm:$0xff]
    %v576 = vld [vmem:[%s6 + $0x308] sm:$0xff]
    %v577 = vld [vmem:[%s6 + $0x310] sm:$0xff]
    %v578 = vld [vmem:[%s6 + $0x318] sm:$0xff]
    %v579 = vld [vmem:[%s6 + $0x320] sm:$0xff]
    %v580 = vld [vmem:[%s6 + $0x328] sm:$0xff]
    %v581 = vld [vmem:[%s6 + $0x330] sm:$0xff]
    %v582 = vld [vmem:[%s6 + $0x338] sm:$0xff]
    %v583 = vld [vmem:[%s6 + $0x340] sm:$0xff]
    %v584 = vld [vmem:[%s6 + $0x348] sm:$0xff]
    %v585 = vld [vmem:[%s6 + $0x350] sm:$0xff]
    %v586 = vld [vmem:[%s6 + $0x358] sm:$0xff]
    %v587 = vld [vmem:[%s6 + $0x360] sm:$0xff]
    %v588 = vld [vmem:[%s6 + $0x368] sm:$0xff]
    %v589 = vld [vmem:[%s6 + $0x370] sm:$0xff]
    %v590 = vld [vmem:[%s6 + $0x378] sm:$0xff]
    %v591 = vld [vmem:[%s6 + $0x380] sm:$0xff]
    %v592 = vld [vmem:[%s6 + $0x388] sm:$0xff]
    %v593 = vld [vmem:[%s6 + $0x390] sm:$0xff]
    %v594 = vld [vmem:[%s6 + $0x398] sm:$0xff]
    %v595 = vld [vmem:[%s6 + $0x3a0] sm:$0xff]
    %v596 = vld [vmem:[%s6 + $0x3a8] sm:$0xff]
    %v597 = vld [vmem:[%s6 + $0x3b0] sm:$0xff]
    %v598 = vld [vmem:[%s6 + $0x3b8] sm:$0xff]
    %v599 = vld [vmem:[%s6 + $0x3c0] sm:$0xff]
    %v600 = vld [vmem:[%s6 + $0x3c8] sm:$0xff]
    %v601 = vld [vmem:[%s6 + $0x3d0] sm:$0xff]
    %v602 = vld [vmem:[%s6 + $0x3d8] sm:$0xff]
    %v603 = vld [vmem:[%s6 + $0x3e0] sm:$0xff]
    %v604 = vld [vmem:[%s6 + $0x3e8] sm:$0xff]
    %v605 = vld [vmem:[%s6 + $0x3f0] sm:$0xff]
    %v606 = vld [vmem:[%s6 + $0x3f8] sm:$0xff]
    %v607 = vld [vmem:[#allocation7] sm:$0x3]
    %v609 = vlaneseq
    %v610 = vshrl.u32 %v609, 7
    %v611 = vsub.s32 0, %v610
    %v612 = vrot.slane %v607, %v611
    %v613 = vlaneseq
    %v614 = vshrl.u32 %v613, 7
    %v615 = vsub.s32 1, %v614
    %v616 = vrot.slane %v607, %v615
    %619 = vmatprep.subr.mxu0 %v480
    %620 = vmatpush1.msra.mxu0 %v479
    %621 = vmatprep.subr.mxu0 %v482
    %622 = vmatpush1.msra.mxu0 %v481
    %623 = vmatprep.subr.mxu0 %v484
    %624 = vmatpush1.msra.mxu0 %v483
    %625 = vmatprep.subr.mxu0 %v486
    %626 = vmatpush1.msra.mxu0 %v485
    %627 = vmatprep.subr.mxu0 %v488
    %628 = vmatpush1.msra.mxu0 %v487
    %629 = vmatprep.subr.mxu0 %v490
    %630 = vmatpush1.msra.mxu0 %v489
    %631 = vmatprep.subr.mxu0 %v492
    %632 = vmatpush1.msra.mxu0 %v491
    %633 = vmatprep.subr.mxu0 %v494
    %634 = vmatpush1.msra.mxu0 %v493
    %635 = vmatprep.subr.mxu0 %v496
    %636 = vmatpush1.msra.mxu0 %v495
    %637 = vmatprep.subr.mxu0 %v498
    %638 = vmatpush1.msra.mxu0 %v497
    %639 = vmatprep.subr.mxu0 %v500
    %640 = vmatpush1.msra.mxu0 %v499
    %641 = vmatprep.subr.mxu0 %v502
    %642 = vmatpush1.msra.mxu0 %v501
    %643 = vmatprep.subr.mxu0 %v504
    %644 = vmatpush1.msra.mxu0 %v503
    %645 = vmatprep.subr.mxu0 %v506
    %646 = vmatpush1.msra.mxu0 %v505
    %647 = vmatprep.subr.mxu0 %v508
    %648 = vmatpush1.msra.mxu0 %v507
    %649 = vmatprep.subr.mxu0 %v510
    %650 = vmatpush1.msra.mxu0 %v509
    %651 = vmatprep.subr.mxu0 %v512
    %652 = vmatpush1.msra.mxu0 %v511
    %653 = vmatprep.subr.mxu0 %v514
    %654 = vmatpush1.msra.mxu0 %v513
    %655 = vmatprep.subr.mxu0 %v516
    %656 = vmatpush1.msra.mxu0 %v515
    %657 = vmatprep.subr.mxu0 %v518
    %658 = vmatpush1.msra.mxu0 %v517
    %659 = vmatprep.subr.mxu0 %v520
    %660 = vmatpush1.msra.mxu0 %v519
    %661 = vmatprep.subr.mxu0 %v522
    %662 = vmatpush1.msra.mxu0 %v521
    %663 = vmatprep.subr.mxu0 %v524
    %664 = vmatpush1.msra.mxu0 %v523
    %665 = vmatprep.subr.mxu0 %v526
    %666 = vmatpush1.msra.mxu0 %v525
    %667 = vmatprep.subr.mxu0 %v528
    %668 = vmatpush1.msra.mxu0 %v527
    %669 = vmatprep.subr.mxu0 %v530
    %670 = vmatpush1.msra.mxu0 %v529
    %671 = vmatprep.subr.mxu0 %v532
    %672 = vmatpush1.msra.mxu0 %v531
    %673 = vmatprep.subr.mxu0 %v534
    %674 = vmatpush1.msra.mxu0 %v533
    %675 = vmatprep.subr.mxu0 %v536
    %676 = vmatpush1.msra.mxu0 %v535
    %677 = vmatprep.subr.mxu0 %v538
    %678 = vmatpush1.msra.mxu0 %v537
    %679 = vmatprep.subr.mxu0 %v540
    %680 = vmatpush1.msra.mxu0 %v539
    %681 = vmatprep.subr.mxu0 %v542
    %682 = vmatpush1.msra.mxu0 %v541
    %683 = vmatprep.mubr.f32.mxu0 %v472
    %684 = vmatmul.mubr.f32.gmra.mrb[0].mxu0 %v471
    %v685 = vpop.f32.mrb[0].mxu0
    %v686 = vadd.f32 %v612, %v685
    %v687 = vpop.f32.mrb[0].mxu0
    %v688 = vadd.f32 %v616, %v687
    %689 = vmatprep.mubr.f32.mxu0 %v476
    %690 = vmatmul.mubr.f32.gmra.mrb[0].mxu0 %v475
    %v691 = vpop.f32.mrb[0].mxu0
    %v692 = vadd.f32 %v612, %v691
    %v693 = vpop.f32.mrb[0].mxu0
    %v694 = vadd.f32 %v616, %v693
    %695 = vdwg.mxu0
    %696 = vmatprep.subr.mxu0 %v544
    %697 = vmatpush1.msra.mxu0 %v543
    %698 = vmatprep.subr.mxu0 %v546
    %699 = vmatpush1.msra.mxu0 %v545
    %700 = vmatprep.subr.mxu0 %v548
    %701 = vmatpush1.msra.mxu0 %v547
    %702 = vmatprep.subr.mxu0 %v550
    %703 = vmatpush1.msra.mxu0 %v549
    %704 = vmatprep.subr.mxu0 %v552
    %705 = vmatpush1.msra.mxu0 %v551
    %706 = vmatprep.subr.mxu0 %v554
    %707 = vmatpush1.msra.mxu0 %v553
    %708 = vmatprep.subr.mxu0 %v556
    %709 = vmatpush1.msra.mxu0 %v555
    %710 = vmatprep.subr.mxu0 %v558
    %711 = vmatpush1.msra.mxu0 %v557
    %712 = vmatprep.subr.mxu0 %v560
    %713 = vmatpush1.msra.mxu0 %v559
    %714 = vmatprep.subr.mxu0 %v562
    %715 = vmatpush1.msra.mxu0 %v561
    %716 = vmatprep.subr.mxu0 %v564
    %717 = vmatpush1.msra.mxu0 %v563
    %718 = vmatprep.subr.mxu0 %v566
    %719 = vmatpush1.msra.mxu0 %v565
    %720 = vmatprep.subr.mxu0 %v568
    %721 = vmatpush1.msra.mxu0 %v567
    %722 = vmatprep.subr.mxu0 %v570
    %723 = vmatpush1.msra.mxu0 %v569
    %724 = vmatprep.subr.mxu0 %v572
    %725 = vmatpush1.msra.mxu0 %v571
    %726 = vmatprep.subr.mxu0 %v574
    %727 = vmatpush1.msra.mxu0 %v573
    %728 = vmatprep.subr.mxu0 %v576
    %729 = vmatpush1.msra.mxu0 %v575
    %730 = vmatprep.subr.mxu0 %v578
    %731 = vmatpush1.msra.mxu0 %v577
    %732 = vmatprep.subr.mxu0 %v580
    %733 = vmatpush1.msra.mxu0 %v579
    %734 = vmatprep.subr.mxu0 %v582
    %735 = vmatpush1.msra.mxu0 %v581
    %736 = vmatprep.subr.mxu0 %v584
    %737 = vmatpush1.msra.mxu0 %v583
    %738 = vmatprep.subr.mxu0 %v586
    %739 = vmatpush1.msra.mxu0 %v585
    %740 = vmatprep.subr.mxu0 %v588
    %741 = vmatpush1.msra.mxu0 %v587
    %742 = vmatprep.subr.mxu0 %v590
    %743 = vmatpush1.msra.mxu0 %v589
    %744 = vmatprep.subr.mxu0 %v592
    %745 = vmatpush1.msra.mxu0 %v591
    %746 = vmatprep.subr.mxu0 %v594
    %747 = vmatpush1.msra.mxu0 %v593
    %748 = vmatprep.subr.mxu0 %v596
    %749 = vmatpush1.msra.mxu0 %v595
    %750 = vmatprep.subr.mxu0 %v598
    %751 = vmatpush1.msra.mxu0 %v597
    %752 = vmatprep.subr.mxu0 %v600
    %753 = vmatpush1.msra.mxu0 %v599
    %754 = vmatprep.subr.mxu0 %v602
    %755 = vmatpush1.msra.mxu0 %v601
    %756 = vmatprep.subr.mxu0 %v604
    %757 = vmatpush1.msra.mxu0 %v603
    %758 = vmatprep.subr.mxu0 %v606
    %759 = vmatpush1.msra.mxu0 %v605
    %760 = vmatprep.mubr.f32.mxu0 %v474
    %761 = vmatmul.mubr.f32.gmra.mrb[0].mxu0 %v473
    %v762 = vpop.f32.mrb[0].mxu0
    %v763 = vadd.f32 %v686, %v762
    %v764 = vpop.f32.mrb[0].mxu0
    %v765 = vadd.f32 %v688, %v764
    %766 = vmatprep.mubr.f32.mxu0 %v478
    %767 = vmatmul.mubr.f32.gmra.mrb[0].mxu0 %v477
    %v768 = vpop.f32.mrb[0].mxu0
    %v769 = vadd.f32 %v692, %v768
    %v770 = vpop.f32.mrb[0].mxu0
    %v771 = vadd.f32 %v694, %v770
    %772 = vdwg.mxu0
    %v773 = vmax.f32 %v763, 0.0
    %v774 = vmax.f32 %v765, 0.0
    %v775 = vmax.f32 %v769, 0.0
    %v776 = vmax.f32 %v771, 0.0
    %v777 = vld [vmem:[%s8] sm:$0xff]
    %v778 = vld [vmem:[%s8 + $0x8] sm:$0xff]
    %v779 = vld [vmem:[%s8 + $0x10] sm:$0xff]
    %v780 = vld [vmem:[%s8 + $0x18] sm:$0xff]
    %v781 = vld [vmem:[%s8 + $0x20] sm:$0xff]
    %v782 = vld [vmem:[%s8 + $0x28] sm:$0xff]
    %v783 = vld [vmem:[%s8 + $0x30] sm:$0xff]
    %v784 = vld [vmem:[%s8 + $0x38] sm:$0xff]
    %v785 = vld [vmem:[%s8 + $0x40] sm:$0xff]
    %v786 = vld [vmem:[%s8 + $0x48] sm:$0xff]
    %v787 = vld [vmem:[%s8 + $0x50] sm:$0xff]
    %v788 = vld [vmem:[%s8 + $0x58] sm:$0xff]
    %v789 = vld [vmem:[%s8 + $0x60] sm:$0xff]
    %v790 = vld [vmem:[%s8 + $0x68] sm:$0xff]
    %v791 = vld [vmem:[%s8 + $0x70] sm:$0xff]
    %v792 = vld [vmem:[%s8 + $0x78] sm:$0xff]
    %v793 = vld [vmem:[%s8 + $0x80] sm:$0xff]
    %v794 = vld [vmem:[%s8 + $0x88] sm:$0xff]
    %v795 = vld [vmem:[%s8 + $0x90] sm:$0xff]
    %v796 = vld [vmem:[%s8 + $0x98] sm:$0xff]
    %v797 = vld [vmem:[%s8 + $0xa0] sm:$0xff]
    %v798 = vld [vmem:[%s8 + $0xa8] sm:$0xff]
    %v799 = vld [vmem:[%s8 + $0xb0] sm:$0xff]
    %v800 = vld [vmem:[%s8 + $0xb8] sm:$0xff]
    %v801 = vld [vmem:[%s8 + $0xc0] sm:$0xff]
    %v802 = vld [vmem:[%s8 + $0xc8] sm:$0xff]
    %v803 = vld [vmem:[%s8 + $0xd0] sm:$0xff]
    %v804 = vld [vmem:[%s8 + $0xd8] sm:$0xff]
    %v805 = vld [vmem:[%s8 + $0xe0] sm:$0xff]
    %v806 = vld [vmem:[%s8 + $0xe8] sm:$0xff]
    %v807 = vld [vmem:[%s8 + $0xf0] sm:$0xff]
    %v808 = vld [vmem:[%s8 + $0xf8] sm:$0xff]
    %v809 = vld [vmem:[#allocation9] sm:$0x1]
    %v811 = vlaneseq
    %v812 = vshrl.u32 %v811, 7
    %v813 = vsub.s32 0, %v812
    %v814 = vrot.slane %v809, %v813
    %816 = vmatprep.subr.mxu0 0.0
    %817 = vmatpush1.msra.mxu0 %v777
    %818 = vmatprep.subr.mxu0 0.0
    %819 = vmatpush1.msra.mxu0 %v778
    %820 = vmatprep.subr.mxu0 0.0
    %821 = vmatpush1.msra.mxu0 %v779
    %822 = vmatprep.subr.mxu0 0.0
    %823 = vmatpush1.msra.mxu0 %v780
    %824 = vmatprep.subr.mxu0 0.0
    %825 = vmatpush1.msra.mxu0 %v781
    %826 = vmatprep.subr.mxu0 0.0
    %827 = vmatpush1.msra.mxu0 %v782
    %828 = vmatprep.subr.mxu0 0.0
    %829 = vmatpush1.msra.mxu0 %v783
    %830 = vmatprep.subr.mxu0 0.0
    %831 = vmatpush1.msra.mxu0 %v784
    %832 = vmatprep.subr.mxu0 0.0
    %833 = vmatpush1.msra.mxu0 %v785
    %834 = vmatprep.subr.mxu0 0.0
    %835 = vmatpush1.msra.mxu0 %v786
    %836 = vmatprep.subr.mxu0 0.0
    %837 = vmatpush1.msra.mxu0 %v787
    %838 = vmatprep.subr.mxu0 0.0
    %839 = vmatpush1.msra.mxu0 %v788
    %840 = vmatprep.subr.mxu0 0.0
    %841 = vmatpush1.msra.mxu0 %v789
    %842 = vmatprep.subr.mxu0 0.0
    %843 = vmatpush1.msra.mxu0 %v790
    %844 = vmatprep.subr.mxu0 0.0
    %845 = vmatpush1.msra.mxu0 %v791
    %846 = vmatprep.subr.mxu0 0.0
    %847 = vmatpush1.msra.mxu0 %v792
    %848 = vmatprep.subr.mxu0 0.0
    %849 = vmatpush1.msra.mxu0 %v793
    %850 = vmatprep.subr.mxu0 0.0
    %851 = vmatpush1.msra.mxu0 %v794
    %852 = vmatprep.subr.mxu0 0.0
    %853 = vmatpush1.msra.mxu0 %v795
    %854 = vmatprep.subr.mxu0 0.0
    %855 = vmatpush1.msra.mxu0 %v796
    %856 = vmatprep.subr.mxu0 0.0
    %857 = vmatpush1.msra.mxu0 %v797
    %858 = vmatprep.subr.mxu0 0.0
    %859 = vmatpush1.msra.mxu0 %v798
    %860 = vmatprep.subr.mxu0 0.0
    %861 = vmatpush1.msra.mxu0 %v799
    %862 = vmatprep.subr.mxu0 0.0
    %863 = vmatpush1.msra.mxu0 %v800
    %864 = vmatprep.subr.mxu0 0.0
    %865 = vmatpush1.msra.mxu0 %v801
    %866 = vmatprep.subr.mxu0 0.0
    %867 = vmatpush1.msra.mxu0 %v802
    %868 = vmatprep.subr.mxu0 0.0
    %869 = vmatpush1.msra.mxu0 %v803
    %870 = vmatprep.subr.mxu0 0.0
    %871 = vmatpush1.msra.mxu0 %v804
    %872 = vmatprep.subr.mxu0 0.0
    %873 = vmatpush1.msra.mxu0 %v805
    %874 = vmatprep.subr.mxu0 0.0
    %875 = vmatpush1.msra.mxu0 %v806
    %876 = vmatprep.subr.mxu0 0.0
    %877 = vmatpush1.msra.mxu0 %v807
    %878 = vmatprep.subr.mxu0 0.0
    %879 = vmatpush1.msra.mxu0 %v808
    %880 = vmatprep.mubr.f32.mxu0 %v774
    %881 = vmatmul.mubr.f32.gmra.mrb[0].mxu0 %v773
    %v882 = vpop.f32.mrb[0].mxu0
    %v883 = vadd.f32 %v814, %v882
    %v884 = vpop.f32.mrb[0].mxu0
    %885 = vmatprep.mubr.f32.mxu0 %v776
    %886 = vmatmul.mubr.f32.gmra.mrb[0].mxu0 %v775
    %v887 = vpop.f32.mrb[0].mxu0
    %v888 = vadd.f32 %v814, %v887
    %v889 = vpop.f32.mrb[0].mxu0
    %890 = vdwg.mxu0
    %vm891 = vcmask 130048
    %v892 = vsel %vm891, %v257, 0.0
    %893 = vadd.xlane.f32.xlu0 %v892
    %v894 = vpop.xlane.xlu0 %893
    %v895 = vrcp.pop %v894
    %v897 = vsel %vm891, %v257, 0
    %899 = vmatprep.subr.mxu0 0.0
    %900 = vmatpush1.msra.mxu0 %v883
    %901 = vmatprep.subr.mxu0 0.0
    %902 = vmatpush1.msra.mxu0 %v888
    %903 = vmatprep.subr.mxu0 0.0
    %904 = vmatpush1.msra.mxu0 0.0
    %905 = vmatprep.subr.mxu0 0.0
    %906 = vmatpush1.msra.mxu0 0.0
    %907 = vmatprep.subr.mxu0 0.0
    %908 = vmatpush1.msra.mxu0 0.0
    %909 = vmatprep.subr.mxu0 0.0
    %910 = vmatpush1.msra.mxu0 0.0
    %911 = vmatprep.subr.mxu0 0.0
    %912 = vmatpush1.msra.mxu0 0.0
    %913 = vmatprep.subr.mxu0 0.0
    %914 = vmatpush1.msra.mxu0 0.0
    %915 = vmatprep.subr.mxu0 0.0
    %916 = vmatpush1.msra.mxu0 0.0
    %917 = vmatprep.subr.mxu0 0.0
    %918 = vmatpush1.msra.mxu0 0.0
    %919 = vmatprep.subr.mxu0 0.0
    %920 = vmatpush1.msra.mxu0 0.0
    %921 = vmatprep.subr.mxu0 0.0
    %922 = vmatpush1.msra.mxu0 0.0
    %923 = vmatprep.subr.mxu0 0.0
    %924 = vmatpush1.msra.mxu0 0.0
    %925 = vmatprep.subr.mxu0 0.0
    %926 = vmatpush1.msra.mxu0 0.0
    %927 = vmatprep.subr.mxu0 0.0
    %928 = vmatpush1.msra.mxu0 0.0
    %929 = vmatprep.subr.mxu0 0.0
    %930 = vmatpush1.msra.mxu0 0.0
    %931 = vmatprep.subr.mxu0 0.0
    %932 = vmatpush1.msra.mxu0 0.0
    %933 = vmatprep.subr.mxu0 0.0
    %934 = vmatpush1.msra.mxu0 0.0
    %935 = vmatprep.subr.mxu0 0.0
    %936 = vmatpush1.msra.mxu0 0.0
    %937 = vmatprep.subr.mxu0 0.0
    %938 = vmatpush1.msra.mxu0 0.0
    %939 = vmatprep.subr.mxu0 0.0
    %940 = vmatpush1.msra.mxu0 0.0
    %941 = vmatprep.subr.mxu0 0.0
    %942 = vmatpush1.msra.mxu0 0.0
    %943 = vmatprep.subr.mxu0 0.0
    %944 = vmatpush1.msra.mxu0 0.0
    %945 = vmatprep.subr.mxu0 0.0
    %946 = vmatpush1.msra.mxu0 0.0
    %947 = vmatprep.subr.mxu0 0.0
    %948 = vmatpush1.msra.mxu0 0.0
    %949 = vmatprep.subr.mxu0 0.0
    %950 = vmatpush1.msra.mxu0 0.0
    %951 = vmatprep.subr.mxu0 0.0
    %952 = vmatpush1.msra.mxu0 0.0
    %953 = vmatprep.subr.mxu0 0.0
    %954 = vmatpush1.msra.mxu0 0.0
    %955 = vmatprep.subr.mxu0 0.0
    %956 = vmatpush1.msra.mxu0 0.0
    %957 = vmatprep.subr.mxu0 0.0
    %958 = vmatpush1.msra.mxu0 0.0
    %959 = vmatprep.subr.mxu0 0.0
    %960 = vmatpush1.msra.mxu0 0.0
    %961 = vmatprep.subr.mxu0 0.0
    %962 = vmatpush1.msra.mxu0 0.0
    %963 = vmatprep.mubr.f32.mxu0 0.0
    %964 = vmatmul.mubr.f32.gmra.mrb[0].mxu0 %v897
    %v965 = vpop.f32.mrb[0].mxu0
    %v966 = vadd.f32 0.0, %v965
    %v967 = vpop.f32.mrb[0].mxu0
    %968 = vdwg.mxu0
    %v969 = vmul.f32 %v966, %v895
    %v970 = vld [vmem:[%s18] sm:$0xff]
    %v971 = vld [vmem:[%s18 + $0x8] sm:$0xff]
    %v972 = vld [vmem:[%s18 + $0x10] sm:$0xff]
    %v973 = vld [vmem:[%s18 + $0x18] sm:$0xff]
    %v974 = vld [vmem:[%s18 + $0x20] sm:$0xff]
    %v975 = vld [vmem:[%s18 + $0x28] sm:$0xff]
    %v976 = vld [vmem:[%s18 + $0x30] sm:$0xff]
    %v977 = vld [vmem:[%s18 + $0x38] sm:$0xff]
    %v978 = vld [vmem:[%s18 + $0x40] sm:$0xff]
    %v979 = vld [vmem:[%s18 + $0x48] sm:$0xff]
    %v980 = vld [vmem:[%s18 + $0x50] sm:$0xff]
    %v981 = vld [vmem:[%s18 + $0x58] sm:$0xff]
    %v982 = vld [vmem:[%s18 + $0x60] sm:$0xff]
    %v983 = vld [vmem:[%s18 + $0x68] sm:$0xff]
    %v984 = vld [vmem:[%s18 + $0x70] sm:$0xff]
    %v985 = vld [vmem:[%s18 + $0x78] sm:$0xff]
    %v986 = vld [vmem:[#allocation21] sm:$0xff]
    %v987 = vld [vmem:[#allocation21 + $0x8] sm:$0xff]
    %v988 = vld [vmem:[#allocation21 + $0x10] sm:$0xff]
    %v989 = vld [vmem:[#allocation21 + $0x18] sm:$0xff]
    %vm990 = vcmask 64512
    %v992 = vsel %vm990, %v969, 0
    %994 = vmatprep.subr.mxu0 %v987
    %995 = vmatpush1.msra.mxu0 %v986
    %996 = vmatprep.subr.mxu0 0.0
    %997 = vmatpush1.msra.mxu0 0.0
    %998 = vmatprep.subr.mxu0 0.0
    %999 = vmatpush1.msra.mxu0 0.0
    %1000 = vmatprep.subr.mxu0 0.0
    %1001 = vmatpush1.msra.mxu0 0.0
    %1002 = vmatprep.subr.mxu0 0.0
    %1003 = vmatpush1.msra.mxu0 0.0
    %1004 = vmatprep.subr.mxu0 0.0
    %1005 = vmatpush1.msra.mxu0 0.0
    %1006 = vmatprep.subr.mxu0 0.0
    %1007 = vmatpush1.msra.mxu0 0.0
    %1008 = vmatprep.subr.mxu0 0.0
    %1009 = vmatpush1.msra.mxu0 0.0
    %1010 = vmatprep.subr.mxu0 0.0
    %1011 = vmatpush1.msra.mxu0 0.0
    %1012 = vmatprep.subr.mxu0 0.0
    %1013 = vmatpush1.msra.mxu0 0.0
    %1014 = vmatprep.subr.mxu0 0.0
    %1015 = vmatpush1.msra.mxu0 0.0
    %1016 = vmatprep.subr.mxu0 0.0
    %1017 = vmatpush1.msra.mxu0 0.0
    %1018 = vmatprep.subr.mxu0 0.0
    %1019 = vmatpush1.msra.mxu0 0.0
    %1020 = vmatprep.subr.mxu0 0.0
    %1021 = vmatpush1.msra.mxu0 0.0
    %1022 = vmatprep.subr.mxu0 0.0
    %1023 = vmatpush1.msra.mxu0 0.0
    %1024 = vmatprep.subr.mxu0 0.0
    %1025 = vmatpush1.msra.mxu0 0.0
    %1026 = vmatprep.subr.mxu0 0.0
    %1027 = vmatpush1.msra.mxu0 0.0
    %1028 = vmatprep.subr.mxu0 0.0
    %1029 = vmatpush1.msra.mxu0 0.0
    %1030 = vmatprep.subr.mxu0 0.0
    %1031 = vmatpush1.msra.mxu0 0.0
    %1032 = vmatprep.subr.mxu0 0.0
    %1033 = vmatpush1.msra.mxu0 0.0
    %1034 = vmatprep.subr.mxu0 0.0
    %1035 = vmatpush1.msra.mxu0 0.0
    %1036 = vmatprep.subr.mxu0 0.0
    %1037 = vmatpush1.msra.mxu0 0.0
    %1038 = vmatprep.subr.mxu0 0.0
    %1039 = vmatpush1.msra.mxu0 0.0
    %1040 = vmatprep.subr.mxu0 0.0
    %1041 = vmatpush1.msra.mxu0 0.0
    %1042 = vmatprep.subr.mxu0 0.0
    %1043 = vmatpush1.msra.mxu0 0.0
    %1044 = vmatprep.subr.mxu0 0.0
    %1045 = vmatpush1.msra.mxu0 0.0
    %1046 = vmatprep.subr.mxu0 0.0
    %1047 = vmatpush1.msra.mxu0 0.0
    %1048 = vmatprep.subr.mxu0 0.0
    %1049 = vmatpush1.msra.mxu0 0.0
    %1050 = vmatprep.subr.mxu0 0.0
    %1051 = vmatpush1.msra.mxu0 0.0
    %1052 = vmatprep.subr.mxu0 0.0
    %1053 = vmatpush1.msra.mxu0 0.0
    %1054 = vmatprep.subr.mxu0 0.0
    %1055 = vmatpush1.msra.mxu0 0.0
    %1056 = vmatprep.subr.mxu0 0.0
    %1057 = vmatpush1.msra.mxu0 0.0
    %1058 = vmatprep.mubr.f32.mxu0 0.0
    %1059 = vmatmul.mubr.f32.gmra.mrb[0].mxu0 %v992
    %v1060 = vpop.f32.mrb[0].mxu0
    %v1061 = vadd.f32 0.0, %v1060
    %v1062 = vpop.f32.mrb[0].mxu0
    %v1063 = vadd.f32 0.0, %v1062
    %1064 = vdwg.mxu0
    %1065 = vmatprep.subr.mxu0 %v989
    %1066 = vmatpush1.msra.mxu0 %v988
    %1067 = vmatprep.subr.mxu0 0.0
    %1068 = vmatpush1.msra.mxu0 0.0
    %1069 = vmatprep.subr.mxu0 0.0
    %1070 = vmatpush1.msra.mxu0 0.0
    %1071 = vmatprep.subr.mxu0 0.0
    %1072 = vmatpush1.msra.mxu0 0.0
    %1073 = vmatprep.subr.mxu0 0.0
    %1074 = vmatpush1.msra.mxu0 0.0
    %1075 = vmatprep.subr.mxu0 0.0
    %1076 = vmatpush1.msra.mxu0 0.0
    %1077 = vmatprep.subr.mxu0 0.0
    %1078 = vmatpush1.msra.mxu0 0.0
    %1079 = vmatprep.subr.mxu0 0.0
    %1080 = vmatpush1.msra.mxu0 0.0
    %1081 = vmatprep.subr.mxu0 0.0
    %1082 = vmatpush1.msra.mxu0 0.0
    %1083 = vmatprep.subr.mxu0 0.0
    %1084 = vmatpush1.msra.mxu0 0.0
    %1085 = vmatprep.subr.mxu0 0.0
    %1086 = vmatpush1.msra.mxu0 0.0
    %1087 = vmatprep.subr.mxu0 0.0
    %1088 = vmatpush1.msra.mxu0 0.0
    %1089 = vmatprep.subr.mxu0 0.0
    %1090 = vmatpush1.msra.mxu0 0.0
    %1091 = vmatprep.subr.mxu0 0.0
    %1092 = vmatpush1.msra.mxu0 0.0
    %1093 = vmatprep.subr.mxu0 0.0
    %1094 = vmatpush1.msra.mxu0 0.0
    %1095 = vmatprep.subr.mxu0 0.0
    %1096 = vmatpush1.msra.mxu0 0.0
    %1097 = vmatprep.subr.mxu0 0.0
    %1098 = vmatpush1.msra.mxu0 0.0
    %1099 = vmatprep.subr.mxu0 0.0
    %1100 = vmatpush1.msra.mxu0 0.0
    %1101 = vmatprep.subr.mxu0 0.0
    %1102 = vmatpush1.msra.mxu0 0.0
    %1103 = vmatprep.subr.mxu0 0.0
    %1104 = vmatpush1.msra.mxu0 0.0
    %1105 = vmatprep.subr.mxu0 0.0
    %1106 = vmatpush1.msra.mxu0 0.0
    %1107 = vmatprep.subr.mxu0 0.0
    %1108 = vmatpush1.msra.mxu0 0.0
    %1109 = vmatprep.subr.mxu0 0.0
    %1110 = vmatpush1.msra.mxu0 0.0
    %1111 = vmatprep.subr.mxu0 0.0
    %1112 = vmatpush1.msra.mxu0 0.0
    %1113 = vmatprep.subr.mxu0 0.0
    %1114 = vmatpush1.msra.mxu0 0.0
    %1115 = vmatprep.subr.mxu0 0.0
    %1116 = vmatpush1.msra.mxu0 0.0
    %1117 = vmatprep.subr.mxu0 0.0
    %1118 = vmatpush1.msra.mxu0 0.0
    %1119 = vmatprep.subr.mxu0 0.0
    %1120 = vmatpush1.msra.mxu0 0.0
    %1121 = vmatprep.subr.mxu0 0.0
    %1122 = vmatpush1.msra.mxu0 0.0
    %1123 = vmatprep.subr.mxu0 0.0
    %1124 = vmatpush1.msra.mxu0 0.0
    %1125 = vmatprep.subr.mxu0 0.0
    %1126 = vmatpush1.msra.mxu0 0.0
    %1127 = vmatprep.subr.mxu0 0.0
    %1128 = vmatpush1.msra.mxu0 0.0
    %1129 = vmatprep.mubr.f32.mxu0 0.0
    %1130 = vmatmul.mubr.f32.gmra.mrb[0].mxu0 %v992
    %v1131 = vpop.f32.mrb[0].mxu0
    %v1132 = vadd.f32 0.0, %v1131
    %v1133 = vpop.f32.mrb[0].mxu0
    %v1134 = vadd.f32 0.0, %v1133
    %1135 = vdwg.mxu0
    %v1137 = vsel %vm310, %v258, 0
    %1139 = vmatprep.subr.mxu0 %v971
    %1140 = vmatpush1.msra.mxu0 %v970
    %1141 = vmatprep.subr.mxu0 %v975
    %1142 = vmatpush1.msra.mxu0 %v974
    %1143 = vmatprep.subr.mxu0 %v979
    %1144 = vmatpush1.msra.mxu0 %v978
    %1145 = vmatprep.subr.mxu0 %v983
    %1146 = vmatpush1.msra.mxu0 %v982
    %1147 = vmatprep.subr.mxu0 0.0
    %1148 = vmatpush1.msra.mxu0 0.0
    %1149 = vmatprep.subr.mxu0 0.0
    %1150 = vmatpush1.msra.mxu0 0.0
    %1151 = vmatprep.subr.mxu0 0.0
    %1152 = vmatpush1.msra.mxu0 0.0
    %1153 = vmatprep.subr.mxu0 0.0
    %1154 = vmatpush1.msra.mxu0 0.0
    %1155 = vmatprep.subr.mxu0 0.0
    %1156 = vmatpush1.msra.mxu0 0.0
    %1157 = vmatprep.subr.mxu0 0.0
    %1158 = vmatpush1.msra.mxu0 0.0
    %1159 = vmatprep.subr.mxu0 0.0
    %1160 = vmatpush1.msra.mxu0 0.0
    %1161 = vmatprep.subr.mxu0 0.0
    %1162 = vmatpush1.msra.mxu0 0.0
    %1163 = vmatprep.subr.mxu0 0.0
    %1164 = vmatpush1.msra.mxu0 0.0
    %1165 = vmatprep.subr.mxu0 0.0
    %1166 = vmatpush1.msra.mxu0 0.0
    %1167 = vmatprep.subr.mxu0 0.0
    %1168 = vmatpush1.msra.mxu0 0.0
    %1169 = vmatprep.subr.mxu0 0.0
    %1170 = vmatpush1.msra.mxu0 0.0
    %1171 = vmatprep.subr.mxu0 0.0
    %1172 = vmatpush1.msra.mxu0 0.0
    %1173 = vmatprep.subr.mxu0 0.0
    %1174 = vmatpush1.msra.mxu0 0.0
    %1175 = vmatprep.subr.mxu0 0.0
    %1176 = vmatpush1.msra.mxu0 0.0
    %1177 = vmatprep.subr.mxu0 0.0
    %1178 = vmatpush1.msra.mxu0 0.0
    %1179 = vmatprep.subr.mxu0 0.0
    %1180 = vmatpush1.msra.mxu0 0.0
    %1181 = vmatprep.subr.mxu0 0.0
    %1182 = vmatpush1.msra.mxu0 0.0
    %1183 = vmatprep.subr.mxu0 0.0
    %1184 = vmatpush1.msra.mxu0 0.0
    %1185 = vmatprep.subr.mxu0 0.0
    %1186 = vmatpush1.msra.mxu0 0.0
    %1187 = vmatprep.subr.mxu0 0.0
    %1188 = vmatpush1.msra.mxu0 0.0
    %1189 = vmatprep.subr.mxu0 0.0
    %1190 = vmatpush1.msra.mxu0 0.0
    %1191 = vmatprep.subr.mxu0 0.0
    %1192 = vmatpush1.msra.mxu0 0.0
    %1193 = vmatprep.subr.mxu0 0.0
    %1194 = vmatpush1.msra.mxu0 0.0
    %1195 = vmatprep.subr.mxu0 0.0
    %1196 = vmatpush1.msra.mxu0 0.0
    %1197 = vmatprep.subr.mxu0 0.0
    %1198 = vmatpush1.msra.mxu0 0.0
    %1199 = vmatprep.subr.mxu0 0.0
    %1200 = vmatpush1.msra.mxu0 0.0
    %1201 = vmatprep.subr.mxu0 0.0
    %1202 = vmatpush1.msra.mxu0 0.0
    %1203 = vmatprep.mubr.f32.mxu0 0.0
    %1204 = vmatmul.mubr.f32.gmra.mrb[0].mxu0 %v1137
    %v1205 = vpop.f32.mrb[0].mxu0
    %v1206 = vadd.f32 %v1061, %v1205
    %v1207 = vpop.f32.mrb[0].mxu0
    %v1208 = vadd.f32 %v1063, %v1207
    %1209 = vdwg.mxu0
    %1210 = vmatprep.subr.mxu0 %v973
    %1211 = vmatpush1.msra.mxu0 %v972
    %1212 = vmatprep.subr.mxu0 %v977
    %1213 = vmatpush1.msra.mxu0 %v976
    %1214 = vmatprep.subr.mxu0 %v981
    %1215 = vmatpush1.msra.mxu0 %v980
    %1216 = vmatprep.subr.mxu0 %v985
    %1217 = vmatpush1.msra.mxu0 %v984
    %1218 = vmatprep.subr.mxu0 0.0
    %1219 = vmatpush1.msra.mxu0 0.0
    %1220 = vmatprep.subr.mxu0 0.0
    %1221 = vmatpush1.msra.mxu0 0.0
    %1222 = vmatprep.subr.mxu0 0.0
    %1223 = vmatpush1.msra.mxu0 0.0
    %1224 = vmatprep.subr.mxu0 0.0
    %1225 = vmatpush1.msra.mxu0 0.0
    %1226 = vmatprep.subr.mxu0 0.0
    %1227 = vmatpush1.msra.mxu0 0.0
    %1228 = vmatprep.subr.mxu0 0.0
    %1229 = vmatpush1.msra.mxu0 0.0
    %1230 = vmatprep.subr.mxu0 0.0
    %1231 = vmatpush1.msra.mxu0 0.0
    %1232 = vmatprep.subr.mxu0 0.0
    %1233 = vmatpush1.msra.mxu0 0.0
    %1234 = vmatprep.subr.mxu0 0.0
    %1235 = vmatpush1.msra.mxu0 0.0
    %1236 = vmatprep.subr.mxu0 0.0
    %1237 = vmatpush1.msra.mxu0 0.0
    %1238 = vmatprep.subr.mxu0 0.0
    %1239 = vmatpush1.msra.mxu0 0.0
    %1240 = vmatprep.subr.mxu0 0.0
    %1241 = vmatpush1.msra.mxu0 0.0
    %1242 = vmatprep.subr.mxu0 0.0
    %1243 = vmatpush1.msra.mxu0 0.0
    %1244 = vmatprep.subr.mxu0 0.0
    %1245 = vmatpush1.msra.mxu0 0.0
    %1246 = vmatprep.subr.mxu0 0.0
    %1247 = vmatpush1.msra.mxu0 0.0
    %1248 = vmatprep.subr.mxu0 0.0
    %1249 = vmatpush1.msra.mxu0 0.0
    %1250 = vmatprep.subr.mxu0 0.0
    %1251 = vmatpush1.msra.mxu0 0.0
    %1252 = vmatprep.subr.mxu0 0.0
    %1253 = vmatpush1.msra.mxu0 0.0
    %1254 = vmatprep.subr.mxu0 0.0
    %1255 = vmatpush1.msra.mxu0 0.0
    %1256 = vmatprep.subr.mxu0 0.0
    %1257 = vmatpush1.msra.mxu0 0.0
    %1258 = vmatprep.subr.mxu0 0.0
    %1259 = vmatpush1.msra.mxu0 0.0
    %1260 = vmatprep.subr.mxu0 0.0
    %1261 = vmatpush1.msra.mxu0 0.0
    %1262 = vmatprep.subr.mxu0 0.0
    %1263 = vmatpush1.msra.mxu0 0.0
    %1264 = vmatprep.subr.mxu0 0.0
    %1265 = vmatpush1.msra.mxu0 0.0
    %1266 = vmatprep.subr.mxu0 0.0
    %1267 = vmatpush1.msra.mxu0 0.0
    %1268 = vmatprep.subr.mxu0 0.0
    %1269 = vmatpush1.msra.mxu0 0.0
    %1270 = vmatprep.subr.mxu0 0.0
    %1271 = vmatpush1.msra.mxu0 0.0
    %1272 = vmatprep.subr.mxu0 0.0
    %1273 = vmatpush1.msra.mxu0 0.0
    %1274 = vmatprep.mubr.f32.mxu0 0.0
    %1275 = vmatmul.mubr.f32.gmra.mrb[0].mxu0 %v1137
    %v1276 = vpop.f32.mrb[0].mxu0
    %v1277 = vadd.f32 %v1132, %v1276
    %v1278 = vpop.f32.mrb[0].mxu0
    %v1279 = vadd.f32 %v1134, %v1278
    %1280 = vdwg.mxu0
    %v1281 = vld [vmem:[#allocation22] sm:$0xf]
    %v1283 = vlaneseq
    %v1284 = vshrl.u32 %v1283, 7
    %v1285 = vsub.s32 0, %v1284
    %v1286 = vrot.slane %v1281, %v1285
    %v1287 = vlaneseq
    %v1288 = vshrl.u32 %v1287, 7
    %v1289 = vsub.s32 1, %v1288
    %v1290 = vrot.slane %v1281, %v1289
    %v1291 = vlaneseq
    %v1292 = vshrl.u32 %v1291, 7
    %v1293 = vsub.s32 2, %v1292
    %v1294 = vrot.slane %v1281, %v1293
    %v1295 = vlaneseq
    %v1296 = vshrl.u32 %v1295, 7
    %v1297 = vsub.s32 3, %v1296
    %v1298 = vrot.slane %v1281, %v1297
    %v1303 = vadd.f32 %v1206, %v1286
    %v1304 = vadd.f32 %v1208, %v1290
    %v1305 = vadd.f32 %v1277, %v1294
    %v1306 = vadd.f32 %v1279, %v1298
    %v1307 = vmax.f32 %v1303, 0.0
    %v1308 = vmax.f32 %v1304, 0.0
    %v1309 = vmax.f32 %v1305, 0.0
    %v1310 = vmax.f32 %v1306, 0.0
    %v1311 = vld [vmem:[%s21] sm:$0xff]
    %v1312 = vld [vmem:[%s21 + $0x8] sm:$0xff]
    %v1313 = vld [vmem:[%s21 + $0x10] sm:$0xff]
    %v1314 = vld [vmem:[%s21 + $0x18] sm:$0xff]
    %v1315 = vld [vmem:[%s21 + $0x20] sm:$0xff]
    %v1316 = vld [vmem:[%s21 + $0x28] sm:$0xff]
    %v1317 = vld [vmem:[%s21 + $0x30] sm:$0xff]
    %v1318 = vld [vmem:[%s21 + $0x38] sm:$0xff]
    %v1319 = vld [vmem:[%s21 + $0x40] sm:$0xff]
    %v1320 = vld [vmem:[%s21 + $0x48] sm:$0xff]
    %v1321 = vld [vmem:[%s21 + $0x50] sm:$0xff]
    %v1322 = vld [vmem:[%s21 + $0x58] sm:$0xff]
    %v1323 = vld [vmem:[%s21 + $0x60] sm:$0xff]
    %v1324 = vld [vmem:[%s21 + $0x68] sm:$0xff]
    %v1325 = vld [vmem:[%s21 + $0x70] sm:$0xff]
    %v1326 = vld [vmem:[%s21 + $0x78] sm:$0xff]
    %v1327 = vld [vmem:[%s21 + $0x80] sm:$0xff]
    %v1328 = vld [vmem:[%s21 + $0x88] sm:$0xff]
    %v1329 = vld [vmem:[%s21 + $0x90] sm:$0xff]
    %v1330 = vld [vmem:[%s21 + $0x98] sm:$0xff]
    %v1331 = vld [vmem:[%s21 + $0xa0] sm:$0xff]
    %v1332 = vld [vmem:[%s21 + $0xa8] sm:$0xff]
    %v1333 = vld [vmem:[%s21 + $0xb0] sm:$0xff]
    %v1334 = vld [vmem:[%s21 + $0xb8] sm:$0xff]
    %v1335 = vld [vmem:[%s21 + $0xc0] sm:$0xff]
    %v1336 = vld [vmem:[%s21 + $0xc8] sm:$0xff]
    %v1337 = vld [vmem:[%s21 + $0xd0] sm:$0xff]
    %v1338 = vld [vmem:[%s21 + $0xd8] sm:$0xff]
    %v1339 = vld [vmem:[%s21 + $0xe0] sm:$0xff]
    %v1340 = vld [vmem:[%s21 + $0xe8] sm:$0xff]
    %v1341 = vld [vmem:[%s21 + $0xf0] sm:$0xff]
    %v1342 = vld [vmem:[%s21 + $0xf8] sm:$0xff]
    %v1343 = vld [vmem:[%s21 + $0x100] sm:$0xff]
    %v1344 = vld [vmem:[%s21 + $0x108] sm:$0xff]
    %v1345 = vld [vmem:[%s21 + $0x110] sm:$0xff]
    %v1346 = vld [vmem:[%s21 + $0x118] sm:$0xff]
    %v1347 = vld [vmem:[%s21 + $0x120] sm:$0xff]
    %v1348 = vld [vmem:[%s21 + $0x128] sm:$0xff]
    %v1349 = vld [vmem:[%s21 + $0x130] sm:$0xff]
    %v1350 = vld [vmem:[%s21 + $0x138] sm:$0xff]
    %v1351 = vld [vmem:[%s21 + $0x140] sm:$0xff]
    %v1352 = vld [vmem:[%s21 + $0x148] sm:$0xff]
    %v1353 = vld [vmem:[%s21 + $0x150] sm:$0xff]
    %v1354 = vld [vmem:[%s21 + $0x158] sm:$0xff]
    %v1355 = vld [vmem:[%s21 + $0x160] sm:$0xff]
    %v1356 = vld [vmem:[%s21 + $0x168] sm:$0xff]
    %v1357 = vld [vmem:[%s21 + $0x170] sm:$0xff]
    %v1358 = vld [vmem:[%s21 + $0x178] sm:$0xff]
    %v1359 = vld [vmem:[%s21 + $0x180] sm:$0xff]
    %v1360 = vld [vmem:[%s21 + $0x188] sm:$0xff]
    %v1361 = vld [vmem:[%s21 + $0x190] sm:$0xff]
    %v1362 = vld [vmem:[%s21 + $0x198] sm:$0xff]
    %v1363 = vld [vmem:[%s21 + $0x1a0] sm:$0xff]
    %v1364 = vld [vmem:[%s21 + $0x1a8] sm:$0xff]
    %v1365 = vld [vmem:[%s21 + $0x1b0] sm:$0xff]
    %v1366 = vld [vmem:[%s21 + $0x1b8] sm:$0xff]
    %v1367 = vld [vmem:[%s21 + $0x1c0] sm:$0xff]
    %v1368 = vld [vmem:[%s21 + $0x1c8] sm:$0xff]
    %v1369 = vld [vmem:[%s21 + $0x1d0] sm:$0xff]
    %v1370 = vld [vmem:[%s21 + $0x1d8] sm:$0xff]
    %v1371 = vld [vmem:[%s21 + $0x1e0] sm:$0xff]
    %v1372 = vld [vmem:[%s21 + $0x1e8] sm:$0xff]
    %v1373 = vld [vmem:[%s21 + $0x1f0] sm:$0xff]
    %v1374 = vld [vmem:[%s21 + $0x1f8] sm:$0xff]
    %v1375 = vld [vmem:[#allocation24] sm:$0x1]
    %v1377 = vlaneseq
    %v1378 = vshrl.u32 %v1377, 7
    %v1379 = vsub.s32 0, %v1378
    %v1380 = vrot.slane %v1375, %v1379
    %1382 = vmatprep.subr.mxu0 0.0
    %1383 = vmatpush1.msra.mxu0 %v1311
    %1384 = vmatprep.subr.mxu0 0.0
    %1385 = vmatpush1.msra.mxu0 %v1312
    %1386 = vmatprep.subr.mxu0 0.0
    %1387 = vmatpush1.msra.mxu0 %v1313
    %1388 = vmatprep.subr.mxu0 0.0
    %1389 = vmatpush1.msra.mxu0 %v1314
    %1390 = vmatprep.subr.mxu0 0.0
    %1391 = vmatpush1.msra.mxu0 %v1315
    %1392 = vmatprep.subr.mxu0 0.0
    %1393 = vmatpush1.msra.mxu0 %v1316
    %1394 = vmatprep.subr.mxu0 0.0
    %1395 = vmatpush1.msra.mxu0 %v1317
    %1396 = vmatprep.subr.mxu0 0.0
    %1397 = vmatpush1.msra.mxu0 %v1318
    %1398 = vmatprep.subr.mxu0 0.0
    %1399 = vmatpush1.msra.mxu0 %v1319
    %1400 = vmatprep.subr.mxu0 0.0
    %1401 = vmatpush1.msra.mxu0 %v1320
    %1402 = vmatprep.subr.mxu0 0.0
    %1403 = vmatpush1.msra.mxu0 %v1321
    %1404 = vmatprep.subr.mxu0 0.0
    %1405 = vmatpush1.msra.mxu0 %v1322
    %1406 = vmatprep.subr.mxu0 0.0
    %1407 = vmatpush1.msra.mxu0 %v1323
    %1408 = vmatprep.subr.mxu0 0.0
    %1409 = vmatpush1.msra.mxu0 %v1324
    %1410 = vmatprep.subr.mxu0 0.0
    %1411 = vmatpush1.msra.mxu0 %v1325
    %1412 = vmatprep.subr.mxu0 0.0
    %1413 = vmatpush1.msra.mxu0 %v1326
    %1414 = vmatprep.subr.mxu0 0.0
    %1415 = vmatpush1.msra.mxu0 %v1327
    %1416 = vmatprep.subr.mxu0 0.0
    %1417 = vmatpush1.msra.mxu0 %v1328
    %1418 = vmatprep.subr.mxu0 0.0
    %1419 = vmatpush1.msra.mxu0 %v1329
    %1420 = vmatprep.subr.mxu0 0.0
    %1421 = vmatpush1.msra.mxu0 %v1330
    %1422 = vmatprep.subr.mxu0 0.0
    %1423 = vmatpush1.msra.mxu0 %v1331
    %1424 = vmatprep.subr.mxu0 0.0
    %1425 = vmatpush1.msra.mxu0 %v1332
    %1426 = vmatprep.subr.mxu0 0.0
    %1427 = vmatpush1.msra.mxu0 %v1333
    %1428 = vmatprep.subr.mxu0 0.0
    %1429 = vmatpush1.msra.mxu0 %v1334
    %1430 = vmatprep.subr.mxu0 0.0
    %1431 = vmatpush1.msra.mxu0 %v1335
    %1432 = vmatprep.subr.mxu0 0.0
    %1433 = vmatpush1.msra.mxu0 %v1336
    %1434 = vmatprep.subr.mxu0 0.0
    %1435 = vmatpush1.msra.mxu0 %v1337
    %1436 = vmatprep.subr.mxu0 0.0
    %1437 = vmatpush1.msra.mxu0 %v1338
    %1438 = vmatprep.subr.mxu0 0.0
    %1439 = vmatpush1.msra.mxu0 %v1339
    %1440 = vmatprep.subr.mxu0 0.0
    %1441 = vmatpush1.msra.mxu0 %v1340
    %1442 = vmatprep.subr.mxu0 0.0
    %1443 = vmatpush1.msra.mxu0 %v1341
    %1444 = vmatprep.subr.mxu0 0.0
    %1445 = vmatpush1.msra.mxu0 %v1342
    %1446 = vmatprep.mubr.f32.mxu0 %v1308
    %1447 = vmatmul.mubr.f32.gmra.mrb[0].mxu0 %v1307
    %v1448 = vpop.f32.mrb[0].mxu0
    %v1449 = vadd.f32 %v1380, %v1448
    %v1450 = vpop.f32.mrb[0].mxu0
    %1451 = vdwg.mxu0
    %1452 = vmatprep.subr.mxu0 0.0
    %1453 = vmatpush1.msra.mxu0 %v1343
    %1454 = vmatprep.subr.mxu0 0.0
    %1455 = vmatpush1.msra.mxu0 %v1344
    %1456 = vmatprep.subr.mxu0 0.0
    %1457 = vmatpush1.msra.mxu0 %v1345
    %1458 = vmatprep.subr.mxu0 0.0
    %1459 = vmatpush1.msra.mxu0 %v1346
    %1460 = vmatprep.subr.mxu0 0.0
    %1461 = vmatpush1.msra.mxu0 %v1347
    %1462 = vmatprep.subr.mxu0 0.0
    %1463 = vmatpush1.msra.mxu0 %v1348
    %1464 = vmatprep.subr.mxu0 0.0
    %1465 = vmatpush1.msra.mxu0 %v1349
    %1466 = vmatprep.subr.mxu0 0.0
    %1467 = vmatpush1.msra.mxu0 %v1350
    %1468 = vmatprep.subr.mxu0 0.0
    %1469 = vmatpush1.msra.mxu0 %v1351
    %1470 = vmatprep.subr.mxu0 0.0
    %1471 = vmatpush1.msra.mxu0 %v1352
    %1472 = vmatprep.subr.mxu0 0.0
    %1473 = vmatpush1.msra.mxu0 %v1353
    %1474 = vmatprep.subr.mxu0 0.0
    %1475 = vmatpush1.msra.mxu0 %v1354
    %1476 = vmatprep.subr.mxu0 0.0
    %1477 = vmatpush1.msra.mxu0 %v1355
    %1478 = vmatprep.subr.mxu0 0.0
    %1479 = vmatpush1.msra.mxu0 %v1356
    %1480 = vmatprep.subr.mxu0 0.0
    %1481 = vmatpush1.msra.mxu0 %v1357
    %1482 = vmatprep.subr.mxu0 0.0
    %1483 = vmatpush1.msra.mxu0 %v1358
    %1484 = vmatprep.subr.mxu0 0.0
    %1485 = vmatpush1.msra.mxu0 %v1359
    %1486 = vmatprep.subr.mxu0 0.0
    %1487 = vmatpush1.msra.mxu0 %v1360
    %1488 = vmatprep.subr.mxu0 0.0
    %1489 = vmatpush1.msra.mxu0 %v1361
    %1490 = vmatprep.subr.mxu0 0.0
    %1491 = vmatpush1.msra.mxu0 %v1362
    %1492 = vmatprep.subr.mxu0 0.0
    %1493 = vmatpush1.msra.mxu0 %v1363
    %1494 = vmatprep.subr.mxu0 0.0
    %1495 = vmatpush1.msra.mxu0 %v1364
    %1496 = vmatprep.subr.mxu0 0.0
    %1497 = vmatpush1.msra.mxu0 %v1365
    %1498 = vmatprep.subr.mxu0 0.0
    %1499 = vmatpush1.msra.mxu0 %v1366
    %1500 = vmatprep.subr.mxu0 0.0
    %1501 = vmatpush1.msra.mxu0 %v1367
    %1502 = vmatprep.subr.mxu0 0.0
    %1503 = vmatpush1.msra.mxu0 %v1368
    %1504 = vmatprep.subr.mxu0 0.0
    %1505 = vmatpush1.msra.mxu0 %v1369
    %1506 = vmatprep.subr.mxu0 0.0
    %1507 = vmatpush1.msra.mxu0 %v1370
    %1508 = vmatprep.subr.mxu0 0.0
    %1509 = vmatpush1.msra.mxu0 %v1371
    %1510 = vmatprep.subr.mxu0 0.0
    %1511 = vmatpush1.msra.mxu0 %v1372
    %1512 = vmatprep.subr.mxu0 0.0
    %1513 = vmatpush1.msra.mxu0 %v1373
    %1514 = vmatprep.subr.mxu0 0.0
    %1515 = vmatpush1.msra.mxu0 %v1374
    %1516 = vmatprep.mubr.f32.mxu0 %v1310
    %1517 = vmatmul.mubr.f32.gmra.mrb[0].mxu0 %v1309
    %v1518 = vpop.f32.mrb[0].mxu0
    %v1519 = vadd.f32 %v1449, %v1518
    %v1520 = vpop.f32.mrb[0].mxu0
    %1521 = vdwg.mxu0
    %vm1522 = vcmp.gt.f32.partialorder %v1519, 0.0
    %v1523 = vmul.f32 %v1519, 0.01
    %v1524 = vsel %vm1522, %v1519, %v1523
    %v1525 = vmul.f32 %v1524, %v1524
    %v1526 = vsel %vm310, %v1525, 0.0
    %1527 = vadd.xlane.f32.xlu0 %v1526
    %v1528 = vpop.xlane.xlu0 %1527
    %v1529 = vmax.f32 %v1528, 1e-24
    %v1530 = vrsqrt.pop %v1529
    %v1531 = vmul.f32 %v1524, %v1530
    %v1532 = vld [vmem:[#allocation10] sm:$0xff]
    %v1533 = vld [vmem:[#allocation10 + $0x8] sm:$0xff]
    %v1534 = vld [vmem:[#allocation10 + $0x10] sm:$0xff]
    %v1535 = vld [vmem:[#allocation10 + $0x18] sm:$0xff]
    %v1536 = vld [vmem:[#allocation10 + $0x20] sm:$0xff]
    %v1537 = vld [vmem:[#allocation10 + $0x28] sm:$0xff]
    %v1538 = vld [vmem:[#allocation10 + $0x30] sm:$0xff]
    %v1539 = vld [vmem:[#allocation10 + $0x38] sm:$0xff]
    %v1540 = vld [vmem:[#allocation12] sm:$0x3]
    %v1542 = vlaneseq
    %v1543 = vshrl.u32 %v1542, 7
    %v1544 = vsub.s32 0, %v1543
    %v1545 = vrot.slane %v1540, %v1544
    %v1546 = vlaneseq
    %v1547 = vshrl.u32 %v1546, 7
    %v1548 = vsub.s32 1, %v1547
    %v1549 = vrot.slane %v1540, %v1548
    %1552 = vmatprep.subr.mxu0 %v1533
    %1553 = vmatpush1.msra.mxu0 %v1532
    %1554 = vmatprep.subr.mxu0 %v1535
    %1555 = vmatpush1.msra.mxu0 %v1534
    %1556 = vmatprep.subr.mxu0 %v1537
    %1557 = vmatpush1.msra.mxu0 %v1536
    %1558 = vmatprep.subr.mxu0 %v1539
    %1559 = vmatpush1.msra.mxu0 %v1538
    %1560 = vmatprep.subr.mxu0 0.0
    %1561 = vmatpush1.msra.mxu0 0.0
    %1562 = vmatprep.subr.mxu0 0.0
    %1563 = vmatpush1.msra.mxu0 0.0
    %1564 = vmatprep.subr.mxu0 0.0
    %1565 = vmatpush1.msra.mxu0 0.0
    %1566 = vmatprep.subr.mxu0 0.0
    %1567 = vmatpush1.msra.mxu0 0.0
    %1568 = vmatprep.subr.mxu0 0.0
    %1569 = vmatpush1.msra.mxu0 0.0
    %1570 = vmatprep.subr.mxu0 0.0
    %1571 = vmatpush1.msra.mxu0 0.0
    %1572 = vmatprep.subr.mxu0 0.0
    %1573 = vmatpush1.msra.mxu0 0.0
    %1574 = vmatprep.subr.mxu0 0.0
    %1575 = vmatpush1.msra.mxu0 0.0
    %1576 = vmatprep.subr.mxu0 0.0
    %1577 = vmatpush1.msra.mxu0 0.0
    %1578 = vmatprep.subr.mxu0 0.0
    %1579 = vmatpush1.msra.mxu0 0.0
    %1580 = vmatprep.subr.mxu0 0.0
    %1581 = vmatpush1.msra.mxu0 0.0
    %1582 = vmatprep.subr.mxu0 0.0
    %1583 = vmatpush1.msra.mxu0 0.0
    %1584 = vmatprep.subr.mxu0 0.0
    %1585 = vmatpush1.msra.mxu0 0.0
    %1586 = vmatprep.subr.mxu0 0.0
    %1587 = vmatpush1.msra.mxu0 0.0
    %1588 = vmatprep.subr.mxu0 0.0
    %1589 = vmatpush1.msra.mxu0 0.0
    %1590 = vmatprep.subr.mxu0 0.0
    %1591 = vmatpush1.msra.mxu0 0.0
    %1592 = vmatprep.subr.mxu0 0.0
    %1593 = vmatpush1.msra.mxu0 0.0
    %1594 = vmatprep.subr.mxu0 0.0
    %1595 = vmatpush1.msra.mxu0 0.0
    %1596 = vmatprep.subr.mxu0 0.0
    %1597 = vmatpush1.msra.mxu0 0.0
    %1598 = vmatprep.subr.mxu0 0.0
    %1599 = vmatpush1.msra.mxu0 0.0
    %1600 = vmatprep.subr.mxu0 0.0
    %1601 = vmatpush1.msra.mxu0 0.0
    %1602 = vmatprep.subr.mxu0 0.0
    %1603 = vmatpush1.msra.mxu0 0.0
    %1604 = vmatprep.subr.mxu0 0.0
    %1605 = vmatpush1.msra.mxu0 0.0
    %1606 = vmatprep.subr.mxu0 0.0
    %1607 = vmatpush1.msra.mxu0 0.0
    %1608 = vmatprep.subr.mxu0 0.0
    %1609 = vmatpush1.msra.mxu0 0.0
    %1610 = vmatprep.subr.mxu0 0.0
    %1611 = vmatpush1.msra.mxu0 0.0
    %1612 = vmatprep.subr.mxu0 0.0
    %1613 = vmatpush1.msra.mxu0 0.0
    %1614 = vmatprep.subr.mxu0 0.0
    %1615 = vmatpush1.msra.mxu0 0.0
    %1616 = vmatprep.mubr.f32.mxu0 0.0
    %1617 = vmatmul.mubr.f32.gmra.mrb[0].mxu0 %v1137
    %v1618 = vpop.f32.mrb[0].mxu0
    %v1619 = vadd.f32 %v1545, %v1618
    %v1620 = vpop.f32.mrb[0].mxu0
    %v1621 = vadd.f32 %v1549, %v1620
    %1622 = vdwg.mxu0
    %v1623 = vmax.f32 %v1619, 0.0
    %v1624 = vmax.f32 %v1621, 0.0
    %v1625 = vld [vmem:[#allocation13] sm:$0xff]
    %v1626 = vld [vmem:[#allocation13 + $0x8] sm:$0xff]
    %v1627 = vld [vmem:[#allocation13 + $0x10] sm:$0xff]
    %v1628 = vld [vmem:[#allocation13 + $0x18] sm:$0xff]
    %v1629 = vld [vmem:[#allocation13 + $0x20] sm:$0xff]
    %v1630 = vld [vmem:[#allocation13 + $0x28] sm:$0xff]
    %v1631 = vld [vmem:[#allocation13 + $0x30] sm:$0xff]
    %v1632 = vld [vmem:[#allocation13 + $0x38] sm:$0xff]
    %v1633 = vld [vmem:[#allocation13 + $0x40] sm:$0xff]
    %v1634 = vld [vmem:[#allocation13 + $0x48] sm:$0xff]
    %v1635 = vld [vmem:[#allocation13 + $0x50] sm:$0xff]
    %v1636 = vld [vmem:[#allocation13 + $0x58] sm:$0xff]
    %v1637 = vld [vmem:[#allocation13 + $0x60] sm:$0xff]
    %v1638 = vld [vmem:[#allocation13 + $0x68] sm:$0xff]
    %v1639 = vld [vmem:[#allocation13 + $0x70] sm:$0xff]
    %v1640 = vld [vmem:[#allocation13 + $0x78] sm:$0xff]
    %v1641 = vld [vmem:[#allocation13 + $0x80] sm:$0xff]
    %v1642 = vld [vmem:[#allocation13 + $0x88] sm:$0xff]
    %v1643 = vld [vmem:[#allocation13 + $0x90] sm:$0xff]
    %v1644 = vld [vmem:[#allocation13 + $0x98] sm:$0xff]
    %v1645 = vld [vmem:[#allocation13 + $0xa0] sm:$0xff]
    %v1646 = vld [vmem:[#allocation13 + $0xa8] sm:$0xff]
    %v1647 = vld [vmem:[#allocation13 + $0xb0] sm:$0xff]
    %v1648 = vld [vmem:[#allocation13 + $0xb8] sm:$0xff]
    %v1649 = vld [vmem:[#allocation13 + $0xc0] sm:$0xff]
    %v1650 = vld [vmem:[#allocation13 + $0xc8] sm:$0xff]
    %v1651 = vld [vmem:[#allocation13 + $0xd0] sm:$0xff]
    %v1652 = vld [vmem:[#allocation13 + $0xd8] sm:$0xff]
    %v1653 = vld [vmem:[#allocation13 + $0xe0] sm:$0xff]
    %v1654 = vld [vmem:[#allocation13 + $0xe8] sm:$0xff]
    %v1655 = vld [vmem:[#allocation13 + $0xf0] sm:$0xff]
    %v1656 = vld [vmem:[#allocation13 + $0xf8] sm:$0xff]
    %v1657 = vld [vmem:[#allocation13 + $0x100] sm:$0xff]
    %v1658 = vld [vmem:[#allocation13 + $0x108] sm:$0xff]
    %v1659 = vld [vmem:[#allocation13 + $0x110] sm:$0xff]
    %v1660 = vld [vmem:[#allocation13 + $0x118] sm:$0xff]
    %v1661 = vld [vmem:[#allocation13 + $0x120] sm:$0xff]
    %v1662 = vld [vmem:[#allocation13 + $0x128] sm:$0xff]
    %v1663 = vld [vmem:[#allocation13 + $0x130] sm:$0xff]
    %v1664 = vld [vmem:[#allocation13 + $0x138] sm:$0xff]
    %v1665 = vld [vmem:[#allocation13 + $0x140] sm:$0xff]
    %v1666 = vld [vmem:[#allocation13 + $0x148] sm:$0xff]
    %v1667 = vld [vmem:[#allocation13 + $0x150] sm:$0xff]
    %v1668 = vld [vmem:[#allocation13 + $0x158] sm:$0xff]
    %v1669 = vld [vmem:[#allocation13 + $0x160] sm:$0xff]
    %v1670 = vld [vmem:[#allocation13 + $0x168] sm:$0xff]
    %v1671 = vld [vmem:[#allocation13 + $0x170] sm:$0xff]
    %v1672 = vld [vmem:[#allocation13 + $0x178] sm:$0xff]
    %v1673 = vld [vmem:[#allocation13 + $0x180] sm:$0xff]
    %v1674 = vld [vmem:[#allocation13 + $0x188] sm:$0xff]
    %v1675 = vld [vmem:[#allocation13 + $0x190] sm:$0xff]
    %v1676 = vld [vmem:[#allocation13 + $0x198] sm:$0xff]
    %v1677 = vld [vmem:[#allocation13 + $0x1a0] sm:$0xff]
    %v1678 = vld [vmem:[#allocation13 + $0x1a8] sm:$0xff]
    %v1679 = vld [vmem:[#allocation13 + $0x1b0] sm:$0xff]
    %v1680 = vld [vmem:[#allocation13 + $0x1b8] sm:$0xff]
    %v1681 = vld [vmem:[#allocation13 + $0x1c0] sm:$0xff]
    %v1682 = vld [vmem:[#allocation13 + $0x1c8] sm:$0xff]
    %v1683 = vld [vmem:[#allocation13 + $0x1d0] sm:$0xff]
    %v1684 = vld [vmem:[#allocation13 + $0x1d8] sm:$0xff]
    %v1685 = vld [vmem:[#allocation13 + $0x1e0] sm:$0xff]
    %v1686 = vld [vmem:[#allocation13 + $0x1e8] sm:$0xff]
    %v1687 = vld [vmem:[#allocation13 + $0x1f0] sm:$0xff]
    %v1688 = vld [vmem:[#allocation13 + $0x1f8] sm:$0xff]
    %v1689 = vld [vmem:[#allocation13 + $0x200] sm:$0xff]
    %v1690 = vld [vmem:[#allocation13 + $0x208] sm:$0xff]
    %v1691 = vld [vmem:[#allocation13 + $0x210] sm:$0xff]
    %v1692 = vld [vmem:[#allocation13 + $0x218] sm:$0xff]
    %v1693 = vld [vmem:[#allocation13 + $0x220] sm:$0xff]
    %v1694 = vld [vmem:[#allocation13 + $0x228] sm:$0xff]
    %v1695 = vld [vmem:[#allocation13 + $0x230] sm:$0xff]
    %v1696 = vld [vmem:[#allocation13 + $0x238] sm:$0xff]
    %v1697 = vld [vmem:[#allocation13 + $0x240] sm:$0xff]
    %v1698 = vld [vmem:[#allocation13 + $0x248] sm:$0xff]
    %v1699 = vld [vmem:[#allocation13 + $0x250] sm:$0xff]
    %v1700 = vld [vmem:[#allocation13 + $0x258] sm:$0xff]
    %v1701 = vld [vmem:[#allocation13 + $0x260] sm:$0xff]
    %v1702 = vld [vmem:[#allocation13 + $0x268] sm:$0xff]
    %v1703 = vld [vmem:[#allocation13 + $0x270] sm:$0xff]
    %v1704 = vld [vmem:[#allocation13 + $0x278] sm:$0xff]
    %v1705 = vld [vmem:[#allocation13 + $0x280] sm:$0xff]
    %v1706 = vld [vmem:[#allocation13 + $0x288] sm:$0xff]
    %v1707 = vld [vmem:[#allocation13 + $0x290] sm:$0xff]
    %v1708 = vld [vmem:[#allocation13 + $0x298] sm:$0xff]
    %v1709 = vld [vmem:[#allocation13 + $0x2a0] sm:$0xff]
    %v1710 = vld [vmem:[#allocation13 + $0x2a8] sm:$0xff]
    %v1711 = vld [vmem:[#allocation13 + $0x2b0] sm:$0xff]
    %v1712 = vld [vmem:[#allocation13 + $0x2b8] sm:$0xff]
    %v1713 = vld [vmem:[#allocation13 + $0x2c0] sm:$0xff]
    %v1714 = vld [vmem:[#allocation13 + $0x2c8] sm:$0xff]
    %v1715 = vld [vmem:[#allocation13 + $0x2d0] sm:$0xff]
    %v1716 = vld [vmem:[#allocation13 + $0x2d8] sm:$0xff]
    %v1717 = vld [vmem:[#allocation13 + $0x2e0] sm:$0xff]
    %v1718 = vld [vmem:[#allocation13 + $0x2e8] sm:$0xff]
    %v1719 = vld [vmem:[#allocation13 + $0x2f0] sm:$0xff]
    %v1720 = vld [vmem:[#allocation13 + $0x2f8] sm:$0xff]
    %v1721 = vld [vmem:[#allocation13 + $0x300] sm:$0xff]
    %v1722 = vld [vmem:[#allocation13 + $0x308] sm:$0xff]
    %v1723 = vld [vmem:[#allocation13 + $0x310] sm:$0xff]
    %v1724 = vld [vmem:[#allocation13 + $0x318] sm:$0xff]
    %v1725 = vld [vmem:[#allocation13 + $0x320] sm:$0xff]
    %v1726 = vld [vmem:[#allocation13 + $0x328] sm:$0xff]
    %v1727 = vld [vmem:[#allocation13 + $0x330] sm:$0xff]
    %v1728 = vld [vmem:[#allocation13 + $0x338] sm:$0xff]
    %v1729 = vld [vmem:[#allocation13 + $0x340] sm:$0xff]
    %v1730 = vld [vmem:[#allocation13 + $0x348] sm:$0xff]
    %v1731 = vld [vmem:[#allocation13 + $0x350] sm:$0xff]
    %v1732 = vld [vmem:[#allocation13 + $0x358] sm:$0xff]
    %v1733 = vld [vmem:[#allocation13 + $0x360] sm:$0xff]
    %v1734 = vld [vmem:[#allocation13 + $0x368] sm:$0xff]
    %v1735 = vld [vmem:[#allocation13 + $0x370] sm:$0xff]
    %v1736 = vld [vmem:[#allocation13 + $0x378] sm:$0xff]
    %v1737 = vld [vmem:[#allocation13 + $0x380] sm:$0xff]
    %v1738 = vld [vmem:[#allocation13 + $0x388] sm:$0xff]
    %v1739 = vld [vmem:[#allocation13 + $0x390] sm:$0xff]
    %v1740 = vld [vmem:[#allocation13 + $0x398] sm:$0xff]
    %v1741 = vld [vmem:[#allocation13 + $0x3a0] sm:$0xff]
    %v1742 = vld [vmem:[#allocation13 + $0x3a8] sm:$0xff]
    %v1743 = vld [vmem:[#allocation13 + $0x3b0] sm:$0xff]
    %v1744 = vld [vmem:[#allocation13 + $0x3b8] sm:$0xff]
    %v1745 = vld [vmem:[#allocation13 + $0x3c0] sm:$0xff]
    %v1746 = vld [vmem:[#allocation13 + $0x3c8] sm:$0xff]
    %v1747 = vld [vmem:[#allocation13 + $0x3d0] sm:$0xff]
    %v1748 = vld [vmem:[#allocation13 + $0x3d8] sm:$0xff]
    %v1749 = vld [vmem:[#allocation13 + $0x3e0] sm:$0xff]
    %v1750 = vld [vmem:[#allocation13 + $0x3e8] sm:$0xff]
    %v1751 = vld [vmem:[#allocation13 + $0x3f0] sm:$0xff]
    %v1752 = vld [vmem:[#allocation13 + $0x3f8] sm:$0xff]
    %v1753 = vld [vmem:[#allocation15] sm:$0xf]
    %v1755 = vlaneseq
    %v1756 = vshrl.u32 %v1755, 7
    %v1757 = vsub.s32 0, %v1756
    %v1758 = vrot.slane %v1753, %v1757
    %v1759 = vlaneseq
    %v1760 = vshrl.u32 %v1759, 7
    %v1761 = vsub.s32 1, %v1760
    %v1762 = vrot.slane %v1753, %v1761
    %v1763 = vlaneseq
    %v1764 = vshrl.u32 %v1763, 7
    %v1765 = vsub.s32 2, %v1764
    %v1766 = vrot.slane %v1753, %v1765
    %v1767 = vlaneseq
    %v1768 = vshrl.u32 %v1767, 7
    %v1769 = vsub.s32 3, %v1768
    %v1770 = vrot.slane %v1753, %v1769
    %1775 = vmatprep.subr.mxu0 %v1626
    %1776 = vmatpush1.msra.mxu0 %v1625
    %1777 = vmatprep.subr.mxu0 %v1630
    %1778 = vmatpush1.msra.mxu0 %v1629
    %1779 = vmatprep.subr.mxu0 %v1634
    %1780 = vmatpush1.msra.mxu0 %v1633
    %1781 = vmatprep.subr.mxu0 %v1638
    %1782 = vmatpush1.msra.mxu0 %v1637
    %1783 = vmatprep.subr.mxu0 %v1642
    %1784 = vmatpush1.msra.mxu0 %v1641
    %1785 = vmatprep.subr.mxu0 %v1646
    %1786 = vmatpush1.msra.mxu0 %v1645
    %1787 = vmatprep.subr.mxu0 %v1650
    %1788 = vmatpush1.msra.mxu0 %v1649
    %1789 = vmatprep.subr.mxu0 %v1654
    %1790 = vmatpush1.msra.mxu0 %v1653
    %1791 = vmatprep.subr.mxu0 %v1658
    %1792 = vmatpush1.msra.mxu0 %v1657
    %1793 = vmatprep.subr.mxu0 %v1662
    %1794 = vmatpush1.msra.mxu0 %v1661
    %1795 = vmatprep.subr.mxu0 %v1666
    %1796 = vmatpush1.msra.mxu0 %v1665
    %1797 = vmatprep.subr.mxu0 %v1670
    %1798 = vmatpush1.msra.mxu0 %v1669
    %1799 = vmatprep.subr.mxu0 %v1674
    %1800 = vmatpush1.msra.mxu0 %v1673
    %1801 = vmatprep.subr.mxu0 %v1678
    %1802 = vmatpush1.msra.mxu0 %v1677
    %1803 = vmatprep.subr.mxu0 %v1682
    %1804 = vmatpush1.msra.mxu0 %v1681
    %1805 = vmatprep.subr.mxu0 %v1686
    %1806 = vmatpush1.msra.mxu0 %v1685
    %1807 = vmatprep.subr.mxu0 %v1690
    %1808 = vmatpush1.msra.mxu0 %v1689
    %1809 = vmatprep.subr.mxu0 %v1694
    %1810 = vmatpush1.msra.mxu0 %v1693
    %1811 = vmatprep.subr.mxu0 %v1698
    %1812 = vmatpush1.msra.mxu0 %v1697
    %1813 = vmatprep.subr.mxu0 %v1702
    %1814 = vmatpush1.msra.mxu0 %v1701
    %1815 = vmatprep.subr.mxu0 %v1706
    %1816 = vmatpush1.msra.mxu0 %v1705
    %1817 = vmatprep.subr.mxu0 %v1710
    %1818 = vmatpush1.msra.mxu0 %v1709
    %1819 = vmatprep.subr.mxu0 %v1714
    %1820 = vmatpush1.msra.mxu0 %v1713
    %1821 = vmatprep.subr.mxu0 %v1718
    %1822 = vmatpush1.msra.mxu0 %v1717
    %1823 = vmatprep.subr.mxu0 %v1722
    %1824 = vmatpush1.msra.mxu0 %v1721
    %1825 = vmatprep.subr.mxu0 %v1726
    %1826 = vmatpush1.msra.mxu0 %v1725
    %1827 = vmatprep.subr.mxu0 %v1730
    %1828 = vmatpush1.msra.mxu0 %v1729
    %1829 = vmatprep.subr.mxu0 %v1734
    %1830 = vmatpush1.msra.mxu0 %v1733
    %1831 = vmatprep.subr.mxu0 %v1738
    %1832 = vmatpush1.msra.mxu0 %v1737
    %1833 = vmatprep.subr.mxu0 %v1742
    %1834 = vmatpush1.msra.mxu0 %v1741
    %1835 = vmatprep.subr.mxu0 %v1746
    %1836 = vmatpush1.msra.mxu0 %v1745
    %1837 = vmatprep.subr.mxu0 %v1750
    %1838 = vmatpush1.msra.mxu0 %v1749
    %1839 = vmatprep.mubr.f32.mxu0 %v1624
    %1840 = vmatmul.mubr.f32.gmra.mrb[0].mxu0 %v1623
    %v1841 = vpop.f32.mrb[0].mxu0
    %v1842 = vadd.f32 %v1758, %v1841
    %v1843 = vpop.f32.mrb[0].mxu0
    %v1844 = vadd.f32 %v1762, %v1843
    %1845 = vdwg.mxu0
    %1846 = vmatprep.subr.mxu0 %v1628
    %1847 = vmatpush1.msra.mxu0 %v1627
    %1848 = vmatprep.subr.mxu0 %v1632
    %1849 = vmatpush1.msra.mxu0 %v1631
    %1850 = vmatprep.subr.mxu0 %v1636
    %1851 = vmatpush1.msra.mxu0 %v1635
    %1852 = vmatprep.subr.mxu0 %v1640
    %1853 = vmatpush1.msra.mxu0 %v1639
    %1854 = vmatprep.subr.mxu0 %v1644
    %1855 = vmatpush1.msra.mxu0 %v1643
    %1856 = vmatprep.subr.mxu0 %v1648
    %1857 = vmatpush1.msra.mxu0 %v1647
    %1858 = vmatprep.subr.mxu0 %v1652
    %1859 = vmatpush1.msra.mxu0 %v1651
    %1860 = vmatprep.subr.mxu0 %v1656
    %1861 = vmatpush1.msra.mxu0 %v1655
    %1862 = vmatprep.subr.mxu0 %v1660
    %1863 = vmatpush1.msra.mxu0 %v1659
    %1864 = vmatprep.subr.mxu0 %v1664
    %1865 = vmatpush1.msra.mxu0 %v1663
    %1866 = vmatprep.subr.mxu0 %v1668
    %1867 = vmatpush1.msra.mxu0 %v1667
    %1868 = vmatprep.subr.mxu0 %v1672
    %1869 = vmatpush1.msra.mxu0 %v1671
    %1870 = vmatprep.subr.mxu0 %v1676
    %1871 = vmatpush1.msra.mxu0 %v1675
    %1872 = vmatprep.subr.mxu0 %v1680
    %1873 = vmatpush1.msra.mxu0 %v1679
    %1874 = vmatprep.subr.mxu0 %v1684
    %1875 = vmatpush1.msra.mxu0 %v1683
    %1876 = vmatprep.subr.mxu0 %v1688
    %1877 = vmatpush1.msra.mxu0 %v1687
    %1878 = vmatprep.subr.mxu0 %v1692
    %1879 = vmatpush1.msra.mxu0 %v1691
    %1880 = vmatprep.subr.mxu0 %v1696
    %1881 = vmatpush1.msra.mxu0 %v1695
    %1882 = vmatprep.subr.mxu0 %v1700
    %1883 = vmatpush1.msra.mxu0 %v1699
    %1884 = vmatprep.subr.mxu0 %v1704
    %1885 = vmatpush1.msra.mxu0 %v1703
    %1886 = vmatprep.subr.mxu0 %v1708
    %1887 = vmatpush1.msra.mxu0 %v1707
    %1888 = vmatprep.subr.mxu0 %v1712
    %1889 = vmatpush1.msra.mxu0 %v1711
    %1890 = vmatprep.subr.mxu0 %v1716
    %1891 = vmatpush1.msra.mxu0 %v1715
    %1892 = vmatprep.subr.mxu0 %v1720
    %1893 = vmatpush1.msra.mxu0 %v1719
    %1894 = vmatprep.subr.mxu0 %v1724
    %1895 = vmatpush1.msra.mxu0 %v1723
    %1896 = vmatprep.subr.mxu0 %v1728
    %1897 = vmatpush1.msra.mxu0 %v1727
    %1898 = vmatprep.subr.mxu0 %v1732
    %1899 = vmatpush1.msra.mxu0 %v1731
    %1900 = vmatprep.subr.mxu0 %v1736
    %1901 = vmatpush1.msra.mxu0 %v1735
    %1902 = vmatprep.subr.mxu0 %v1740
    %1903 = vmatpush1.msra.mxu0 %v1739
    %1904 = vmatprep.subr.mxu0 %v1744
    %1905 = vmatpush1.msra.mxu0 %v1743
    %1906 = vmatprep.subr.mxu0 %v1748
    %1907 = vmatpush1.msra.mxu0 %v1747
    %1908 = vmatprep.subr.mxu0 %v1752
    %1909 = vmatpush1.msra.mxu0 %v1751
    %1910 = vmatprep.mubr.f32.mxu0 %v1624
    %1911 = vmatmul.mubr.f32.gmra.mrb[0].mxu0 %v1623
    %v1912 = vpop.f32.mrb[0].mxu0
    %v1913 = vadd.f32 %v1766, %v1912
    %v1914 = vpop.f32.mrb[0].mxu0
    %v1915 = vadd.f32 %v1770, %v1914
    %1916 = vdwg.mxu0
    %v1917 = vmax.f32 %v1842, 0.0
    %v1918 = vmax.f32 %v1844, 0.0
    %v1919 = vmax.f32 %v1913, 0.0
    %v1920 = vmax.f32 %v1915, 0.0
    %v1921 = vld [vmem:[#allocation16] sm:$0xff]
    %v1922 = vld [vmem:[#allocation16 + $0x8] sm:$0xff]
    %v1923 = vld [vmem:[#allocation16 + $0x10] sm:$0xff]
    %v1924 = vld [vmem:[#allocation16 + $0x18] sm:$0xff]
    %v1925 = vld [vmem:[#allocation16 + $0x20] sm:$0xff]
    %v1926 = vld [vmem:[#allocation16 + $0x28] sm:$0xff]
    %v1927 = vld [vmem:[#allocation16 + $0x30] sm:$0xff]
    %v1928 = vld [vmem:[#allocation16 + $0x38] sm:$0xff]
    %v1929 = vld [vmem:[#allocation16 + $0x40] sm:$0xff]
    %v1930 = vld [vmem:[#allocation16 + $0x48] sm:$0xff]
    %v1931 = vld [vmem:[#allocation16 + $0x50] sm:$0xff]
    %v1932 = vld [vmem:[#allocation16 + $0x58] sm:$0xff]
    %v1933 = vld [vmem:[#allocation16 + $0x60] sm:$0xff]
    %v1934 = vld [vmem:[#allocation16 + $0x68] sm:$0xff]
    %v1935 = vld [vmem:[#allocation16 + $0x70] sm:$0xff]
    %v1936 = vld [vmem:[#allocation16 + $0x78] sm:$0xff]
    %v1937 = vld [vmem:[#allocation16 + $0x80] sm:$0xff]
    %v1938 = vld [vmem:[#allocation16 + $0x88] sm:$0xff]
    %v1939 = vld [vmem:[#allocation16 + $0x90] sm:$0xff]
    %v1940 = vld [vmem:[#allocation16 + $0x98] sm:$0xff]
    %v1941 = vld [vmem:[#allocation16 + $0xa0] sm:$0xff]
    %v1942 = vld [vmem:[#allocation16 + $0xa8] sm:$0xff]
    %v1943 = vld [vmem:[#allocation16 + $0xb0] sm:$0xff]
    %v1944 = vld [vmem:[#allocation16 + $0xb8] sm:$0xff]
    %v1945 = vld [vmem:[#allocation16 + $0xc0] sm:$0xff]
    %v1946 = vld [vmem:[#allocation16 + $0xc8] sm:$0xff]
    %v1947 = vld [vmem:[#allocation16 + $0xd0] sm:$0xff]
    %v1948 = vld [vmem:[#allocation16 + $0xd8] sm:$0xff]
    %v1949 = vld [vmem:[#allocation16 + $0xe0] sm:$0xff]
    %v1950 = vld [vmem:[#allocation16 + $0xe8] sm:$0xff]
    %v1951 = vld [vmem:[#allocation16 + $0xf0] sm:$0xff]
    %v1952 = vld [vmem:[#allocation16 + $0xf8] sm:$0xff]
    %v1953 = vld [vmem:[#allocation16 + $0x100] sm:$0xff]
    %v1954 = vld [vmem:[#allocation16 + $0x108] sm:$0xff]
    %v1955 = vld [vmem:[#allocation16 + $0x110] sm:$0xff]
    %v1956 = vld [vmem:[#allocation16 + $0x118] sm:$0xff]
    %v1957 = vld [vmem:[#allocation16 + $0x120] sm:$0xff]
    %v1958 = vld [vmem:[#allocation16 + $0x128] sm:$0xff]
    %v1959 = vld [vmem:[#allocation16 + $0x130] sm:$0xff]
    %v1960 = vld [vmem:[#allocation16 + $0x138] sm:$0xff]
    %v1961 = vld [vmem:[#allocation16 + $0x140] sm:$0xff]
    %v1962 = vld [vmem:[#allocation16 + $0x148] sm:$0xff]
    %v1963 = vld [vmem:[#allocation16 + $0x150] sm:$0xff]
    %v1964 = vld [vmem:[#allocation16 + $0x158] sm:$0xff]
    %v1965 = vld [vmem:[#allocation16 + $0x160] sm:$0xff]
    %v1966 = vld [vmem:[#allocation16 + $0x168] sm:$0xff]
    %v1967 = vld [vmem:[#allocation16 + $0x170] sm:$0xff]
    %v1968 = vld [vmem:[#allocation16 + $0x178] sm:$0xff]
    %v1969 = vld [vmem:[#allocation16 + $0x180] sm:$0xff]
    %v1970 = vld [vmem:[#allocation16 + $0x188] sm:$0xff]
    %v1971 = vld [vmem:[#allocation16 + $0x190] sm:$0xff]
    %v1972 = vld [vmem:[#allocation16 + $0x198] sm:$0xff]
    %v1973 = vld [vmem:[#allocation16 + $0x1a0] sm:$0xff]
    %v1974 = vld [vmem:[#allocation16 + $0x1a8] sm:$0xff]
    %v1975 = vld [vmem:[#allocation16 + $0x1b0] sm:$0xff]
    %v1976 = vld [vmem:[#allocation16 + $0x1b8] sm:$0xff]
    %v1977 = vld [vmem:[#allocation16 + $0x1c0] sm:$0xff]
    %v1978 = vld [vmem:[#allocation16 + $0x1c8] sm:$0xff]
    %v1979 = vld [vmem:[#allocation16 + $0x1d0] sm:$0xff]
    %v1980 = vld [vmem:[#allocation16 + $0x1d8] sm:$0xff]
    %v1981 = vld [vmem:[#allocation16 + $0x1e0] sm:$0xff]
    %v1982 = vld [vmem:[#allocation16 + $0x1e8] sm:$0xff]
    %v1983 = vld [vmem:[#allocation16 + $0x1f0] sm:$0xff]
    %v1984 = vld [vmem:[#allocation16 + $0x1f8] sm:$0xff]
    %v1985 = vld [vmem:[#allocation16 + $0x200] sm:$0xff]
    %v1986 = vld [vmem:[#allocation16 + $0x208] sm:$0xff]
    %v1987 = vld [vmem:[#allocation16 + $0x210] sm:$0xff]
    %v1988 = vld [vmem:[#allocation16 + $0x218] sm:$0xff]
    %v1989 = vld [vmem:[#allocation16 + $0x220] sm:$0xff]
    %v1990 = vld [vmem:[#allocation16 + $0x228] sm:$0xff]
    %v1991 = vld [vmem:[#allocation16 + $0x230] sm:$0xff]
    %v1992 = vld [vmem:[#allocation16 + $0x238] sm:$0xff]
    %v1993 = vld [vmem:[#allocation16 + $0x240] sm:$0xff]
    %v1994 = vld [vmem:[#allocation16 + $0x248] sm:$0xff]
    %v1995 = vld [vmem:[#allocation16 + $0x250] sm:$0xff]
    %v1996 = vld [vmem:[#allocation16 + $0x258] sm:$0xff]
    %v1997 = vld [vmem:[#allocation16 + $0x260] sm:$0xff]
    %v1998 = vld [vmem:[#allocation16 + $0x268] sm:$0xff]
    %v1999 = vld [vmem:[#allocation16 + $0x270] sm:$0xff]
    %v2000 = vld [vmem:[#allocation16 + $0x278] sm:$0xff]
    %v2001 = vld [vmem:[#allocation16 + $0x280] sm:$0xff]
    %v2002 = vld [vmem:[#allocation16 + $0x288] sm:$0xff]
    %v2003 = vld [vmem:[#allocation16 + $0x290] sm:$0xff]
    %v2004 = vld [vmem:[#allocation16 + $0x298] sm:$0xff]
    %v2005 = vld [vmem:[#allocation16 + $0x2a0] sm:$0xff]
    %v2006 = vld [vmem:[#allocation16 + $0x2a8] sm:$0xff]
    %v2007 = vld [vmem:[#allocation16 + $0x2b0] sm:$0xff]
    %v2008 = vld [vmem:[#allocation16 + $0x2b8] sm:$0xff]
    %v2009 = vld [vmem:[#allocation16 + $0x2c0] sm:$0xff]
    %v2010 = vld [vmem:[#allocation16 + $0x2c8] sm:$0xff]
    %v2011 = vld [vmem:[#allocation16 + $0x2d0] sm:$0xff]
    %v2012 = vld [vmem:[#allocation16 + $0x2d8] sm:$0xff]
    %v2013 = vld [vmem:[#allocation16 + $0x2e0] sm:$0xff]
    %v2014 = vld [vmem:[#allocation16 + $0x2e8] sm:$0xff]
    %v2015 = vld [vmem:[#allocation16 + $0x2f0] sm:$0xff]
    %v2016 = vld [vmem:[#allocation16 + $0x2f8] sm:$0xff]
    %v2017 = vld [vmem:[#allocation16 + $0x300] sm:$0xff]
    %v2018 = vld [vmem:[#allocation16 + $0x308] sm:$0xff]
    %v2019 = vld [vmem:[#allocation16 + $0x310] sm:$0xff]
    %v2020 = vld [vmem:[#allocation16 + $0x318] sm:$0xff]
    %v2021 = vld [vmem:[#allocation16 + $0x320] sm:$0xff]
    %v2022 = vld [vmem:[#allocation16 + $0x328] sm:$0xff]
    %v2023 = vld [vmem:[#allocation16 + $0x330] sm:$0xff]
    %v2024 = vld [vmem:[#allocation16 + $0x338] sm:$0xff]
    %v2025 = vld [vmem:[#allocation16 + $0x340] sm:$0xff]
    %v2026 = vld [vmem:[#allocation16 + $0x348] sm:$0xff]
    %v2027 = vld [vmem:[#allocation16 + $0x350] sm:$0xff]
    %v2028 = vld [vmem:[#allocation16 + $0x358] sm:$0xff]
    %v2029 = vld [vmem:[#allocation16 + $0x360] sm:$0xff]
    %v2030 = vld [vmem:[#allocation16 + $0x368] sm:$0xff]
    %v2031 = vld [vmem:[#allocation16 + $0x370] sm:$0xff]
    %v2032 = vld [vmem:[#allocation16 + $0x378] sm:$0xff]
    %v2033 = vld [vmem:[#allocation16 + $0x380] sm:$0xff]
    %v2034 = vld [vmem:[#allocation16 + $0x388] sm:$0xff]
    %v2035 = vld [vmem:[#allocation16 + $0x390] sm:$0xff]
    %v2036 = vld [vmem:[#allocation16 + $0x398] sm:$0xff]
    %v2037 = vld [vmem:[#allocation16 + $0x3a0] sm:$0xff]
    %v2038 = vld [vmem:[#allocation16 + $0x3a8] sm:$0xff]
    %v2039 = vld [vmem:[#allocation16 + $0x3b0] sm:$0xff]
    %v2040 = vld [vmem:[#allocation16 + $0x3b8] sm:$0xff]
    %v2041 = vld [vmem:[#allocation16 + $0x3c0] sm:$0xff]
    %v2042 = vld [vmem:[#allocation16 + $0x3c8] sm:$0xff]
    %v2043 = vld [vmem:[#allocation16 + $0x3d0] sm:$0xff]
    %v2044 = vld [vmem:[#allocation16 + $0x3d8] sm:$0xff]
    %v2045 = vld [vmem:[#allocation16 + $0x3e0] sm:$0xff]
    %v2046 = vld [vmem:[#allocation16 + $0x3e8] sm:$0xff]
    %v2047 = vld [vmem:[#allocation16 + $0x3f0] sm:$0xff]
    %v2048 = vld [vmem:[#allocation16 + $0x3f8] sm:$0xff]
    %v2049 = vld [vmem:[#allocation18] sm:$0x3]
    %v2051 = vlaneseq
    %v2052 = vshrl.u32 %v2051, 7
    %v2053 = vsub.s32 0, %v2052
    %v2054 = vrot.slane %v2049, %v2053
    %v2055 = vlaneseq
    %v2056 = vshrl.u32 %v2055, 7
    %v2057 = vsub.s32 1, %v2056
    %v2058 = vrot.slane %v2049, %v2057
    %2061 = vmatprep.subr.mxu0 %v1922
    %2062 = vmatpush1.msra.mxu0 %v1921
    %2063 = vmatprep.subr.mxu0 %v1924
    %2064 = vmatpush1.msra.mxu0 %v1923
    %2065 = vmatprep.subr.mxu0 %v1926
    %2066 = vmatpush1.msra.mxu0 %v1925
    %2067 = vmatprep.subr.mxu0 %v1928
    %2068 = vmatpush1.msra.mxu0 %v1927
    %2069 = vmatprep.subr.mxu0 %v1930
    %2070 = vmatpush1.msra.mxu0 %v1929
    %2071 = vmatprep.subr.mxu0 %v1932
    %2072 = vmatpush1.msra.mxu0 %v1931
    %2073 = vmatprep.subr.mxu0 %v1934
    %2074 = vmatpush1.msra.mxu0 %v1933
    %2075 = vmatprep.subr.mxu0 %v1936
    %2076 = vmatpush1.msra.mxu0 %v1935
    %2077 = vmatprep.subr.mxu0 %v1938
    %2078 = vmatpush1.msra.mxu0 %v1937
    %2079 = vmatprep.subr.mxu0 %v1940
    %2080 = vmatpush1.msra.mxu0 %v1939
    %2081 = vmatprep.subr.mxu0 %v1942
    %2082 = vmatpush1.msra.mxu0 %v1941
    %2083 = vmatprep.subr.mxu0 %v1944
    %2084 = vmatpush1.msra.mxu0 %v1943
    %2085 = vmatprep.subr.mxu0 %v1946
    %2086 = vmatpush1.msra.mxu0 %v1945
    %2087 = vmatprep.subr.mxu0 %v1948
    %2088 = vmatpush1.msra.mxu0 %v1947
    %2089 = vmatprep.subr.mxu0 %v1950
    %2090 = vmatpush1.msra.mxu0 %v1949
    %2091 = vmatprep.subr.mxu0 %v1952
    %2092 = vmatpush1.msra.mxu0 %v1951
    %2093 = vmatprep.subr.mxu0 %v1954
    %2094 = vmatpush1.msra.mxu0 %v1953
    %2095 = vmatprep.subr.mxu0 %v1956
    %2096 = vmatpush1.msra.mxu0 %v1955
    %2097 = vmatprep.subr.mxu0 %v1958
    %2098 = vmatpush1.msra.mxu0 %v1957
    %2099 = vmatprep.subr.mxu0 %v1960
    %2100 = vmatpush1.msra.mxu0 %v1959
    %2101 = vmatprep.subr.mxu0 %v1962
    %2102 = vmatpush1.msra.mxu0 %v1961
    %2103 = vmatprep.subr.mxu0 %v1964
    %2104 = vmatpush1.msra.mxu0 %v1963
    %2105 = vmatprep.subr.mxu0 %v1966
    %2106 = vmatpush1.msra.mxu0 %v1965
    %2107 = vmatprep.subr.mxu0 %v1968
    %2108 = vmatpush1.msra.mxu0 %v1967
    %2109 = vmatprep.subr.mxu0 %v1970
    %2110 = vmatpush1.msra.mxu0 %v1969
    %2111 = vmatprep.subr.mxu0 %v1972
    %2112 = vmatpush1.msra.mxu0 %v1971
    %2113 = vmatprep.subr.mxu0 %v1974
    %2114 = vmatpush1.msra.mxu0 %v1973
    %2115 = vmatprep.subr.mxu0 %v1976
    %2116 = vmatpush1.msra.mxu0 %v1975
    %2117 = vmatprep.subr.mxu0 %v1978
    %2118 = vmatpush1.msra.mxu0 %v1977
    %2119 = vmatprep.subr.mxu0 %v1980
    %2120 = vmatpush1.msra.mxu0 %v1979
    %2121 = vmatprep.subr.mxu0 %v1982
    %2122 = vmatpush1.msra.mxu0 %v1981
    %2123 = vmatprep.subr.mxu0 %v1984
    %2124 = vmatpush1.msra.mxu0 %v1983
    %2125 = vmatprep.mubr.f32.mxu0 %v1918
    %2126 = vmatmul.mubr.f32.gmra.mrb[0].mxu0 %v1917
    %v2127 = vpop.f32.mrb[0].mxu0
    %v2128 = vadd.f32 %v2054, %v2127
    %v2129 = vpop.f32.mrb[0].mxu0
    %v2130 = vadd.f32 %v2058, %v2129
    %2131 = vdwg.mxu0
    %2132 = vmatprep.subr.mxu0 %v1986
    %2133 = vmatpush1.msra.mxu0 %v1985
    %2134 = vmatprep.subr.mxu0 %v1988
    %2135 = vmatpush1.msra.mxu0 %v1987
    %2136 = vmatprep.subr.mxu0 %v1990
    %2137 = vmatpush1.msra.mxu0 %v1989
    %2138 = vmatprep.subr.mxu0 %v1992
    %2139 = vmatpush1.msra.mxu0 %v1991
    %2140 = vmatprep.subr.mxu0 %v1994
    %2141 = vmatpush1.msra.mxu0 %v1993
    %2142 = vmatprep.subr.mxu0 %v1996
    %2143 = vmatpush1.msra.mxu0 %v1995
    %2144 = vmatprep.subr.mxu0 %v1998
    %2145 = vmatpush1.msra.mxu0 %v1997
    %2146 = vmatprep.subr.mxu0 %v2000
    %2147 = vmatpush1.msra.mxu0 %v1999
    %2148 = vmatprep.subr.mxu0 %v2002
    %2149 = vmatpush1.msra.mxu0 %v2001
    %2150 = vmatprep.subr.mxu0 %v2004
    %2151 = vmatpush1.msra.mxu0 %v2003
    %2152 = vmatprep.subr.mxu0 %v2006
    %2153 = vmatpush1.msra.mxu0 %v2005
    %2154 = vmatprep.subr.mxu0 %v2008
    %2155 = vmatpush1.msra.mxu0 %v2007
    %2156 = vmatprep.subr.mxu0 %v2010
    %2157 = vmatpush1.msra.mxu0 %v2009
    %2158 = vmatprep.subr.mxu0 %v2012
    %2159 = vmatpush1.msra.mxu0 %v2011
    %2160 = vmatprep.subr.mxu0 %v2014
    %2161 = vmatpush1.msra.mxu0 %v2013
    %2162 = vmatprep.subr.mxu0 %v2016
    %2163 = vmatpush1.msra.mxu0 %v2015
    %2164 = vmatprep.subr.mxu0 %v2018
    %2165 = vmatpush1.msra.mxu0 %v2017
    %2166 = vmatprep.subr.mxu0 %v2020
    %2167 = vmatpush1.msra.mxu0 %v2019
    %2168 = vmatprep.subr.mxu0 %v2022
    %2169 = vmatpush1.msra.mxu0 %v2021
    %2170 = vmatprep.subr.mxu0 %v2024
    %2171 = vmatpush1.msra.mxu0 %v2023
    %2172 = vmatprep.subr.mxu0 %v2026
    %2173 = vmatpush1.msra.mxu0 %v2025
    %2174 = vmatprep.subr.mxu0 %v2028
    %2175 = vmatpush1.msra.mxu0 %v2027
    %2176 = vmatprep.subr.mxu0 %v2030
    %2177 = vmatpush1.msra.mxu0 %v2029
    %2178 = vmatprep.subr.mxu0 %v2032
    %2179 = vmatpush1.msra.mxu0 %v2031
    %2180 = vmatprep.subr.mxu0 %v2034
    %2181 = vmatpush1.msra.mxu0 %v2033
    %2182 = vmatprep.subr.mxu0 %v2036
    %2183 = vmatpush1.msra.mxu0 %v2035
    %2184 = vmatprep.subr.mxu0 %v2038
    %2185 = vmatpush1.msra.mxu0 %v2037
    %2186 = vmatprep.subr.mxu0 %v2040
    %2187 = vmatpush1.msra.mxu0 %v2039
    %2188 = vmatprep.subr.mxu0 %v2042
    %2189 = vmatpush1.msra.mxu0 %v2041
    %2190 = vmatprep.subr.mxu0 %v2044
    %2191 = vmatpush1.msra.mxu0 %v2043
    %2192 = vmatprep.subr.mxu0 %v2046
    %2193 = vmatpush1.msra.mxu0 %v2045
    %2194 = vmatprep.subr.mxu0 %v2048
    %2195 = vmatpush1.msra.mxu0 %v2047
    %2196 = vmatprep.mubr.f32.mxu0 %v1920
    %2197 = vmatmul.mubr.f32.gmra.mrb[0].mxu0 %v1919
    %v2198 = vpop.f32.mrb[0].mxu0
    %v2199 = vadd.f32 %v2128, %v2198
    %v2200 = vpop.f32.mrb[0].mxu0
    %v2201 = vadd.f32 %v2130, %v2200
    %2202 = vdwg.mxu0
    %v2203 = vmax.f32 %v2199, 0.0
    %v2204 = vmax.f32 %v2201, 0.0
    %v2205 = vld [vmem:[%s16] sm:$0xff]
    %v2206 = vld [vmem:[%s16 + $0x8] sm:$0xff]
    %v2207 = vld [vmem:[%s16 + $0x10] sm:$0xff]
    %v2208 = vld [vmem:[%s16 + $0x18] sm:$0xff]
    %v2209 = vld [vmem:[%s16 + $0x20] sm:$0xff]
    %v2210 = vld [vmem:[%s16 + $0x28] sm:$0xff]
    %v2211 = vld [vmem:[%s16 + $0x30] sm:$0xff]
    %v2212 = vld [vmem:[%s16 + $0x38] sm:$0xff]
    %v2213 = vld [vmem:[%s16 + $0x40] sm:$0xff]
    %v2214 = vld [vmem:[%s16 + $0x48] sm:$0xff]
    %v2215 = vld [vmem:[%s16 + $0x50] sm:$0xff]
    %v2216 = vld [vmem:[%s16 + $0x58] sm:$0xff]
    %v2217 = vld [vmem:[%s16 + $0x60] sm:$0xff]
    %v2218 = vld [vmem:[%s16 + $0x68] sm:$0xff]
    %v2219 = vld [vmem:[%s16 + $0x70] sm:$0xff]
    %v2220 = vld [vmem:[%s16 + $0x78] sm:$0xff]
    %v2221 = vld [vmem:[%s16 + $0x80] sm:$0xff]
    %v2222 = vld [vmem:[%s16 + $0x88] sm:$0xff]
    %v2223 = vld [vmem:[%s16 + $0x90] sm:$0xff]
    %v2224 = vld [vmem:[%s16 + $0x98] sm:$0xff]
    %v2225 = vld [vmem:[%s16 + $0xa0] sm:$0xff]
    %v2226 = vld [vmem:[%s16 + $0xa8] sm:$0xff]
    %v2227 = vld [vmem:[%s16 + $0xb0] sm:$0xff]
    %v2228 = vld [vmem:[%s16 + $0xb8] sm:$0xff]
    %v2229 = vld [vmem:[%s16 + $0xc0] sm:$0xff]
    %v2230 = vld [vmem:[%s16 + $0xc8] sm:$0xff]
    %v2231 = vld [vmem:[%s16 + $0xd0] sm:$0xff]
    %v2232 = vld [vmem:[%s16 + $0xd8] sm:$0xff]
    %v2233 = vld [vmem:[%s16 + $0xe0] sm:$0xff]
    %v2234 = vld [vmem:[%s16 + $0xe8] sm:$0xff]
    %v2235 = vld [vmem:[%s16 + $0xf0] sm:$0xff]
    %v2236 = vld [vmem:[%s16 + $0xf8] sm:$0xff]
    %v2237 = vld [vmem:[#allocation19] sm:$0x1]
    %v2239 = vlaneseq
    %v2240 = vshrl.u32 %v2239, 7
    %v2241 = vsub.s32 0, %v2240
    %v2242 = vrot.slane %v2237, %v2241
    %2244 = vmatprep.subr.mxu0 0.0
    %2245 = vmatpush1.msra.mxu0 %v2205
    %2246 = vmatprep.subr.mxu0 0.0
    %2247 = vmatpush1.msra.mxu0 %v2206
    %2248 = vmatprep.subr.mxu0 0.0
    %2249 = vmatpush1.msra.mxu0 %v2207
    %2250 = vmatprep.subr.mxu0 0.0
    %2251 = vmatpush1.msra.mxu0 %v2208
    %2252 = vmatprep.subr.mxu0 0.0
    %2253 = vmatpush1.msra.mxu0 %v2209
    %2254 = vmatprep.subr.mxu0 0.0
    %2255 = vmatpush1.msra.mxu0 %v2210
    %2256 = vmatprep.subr.mxu0 0.0
    %2257 = vmatpush1.msra.mxu0 %v2211
    %2258 = vmatprep.subr.mxu0 0.0
    %2259 = vmatpush1.msra.mxu0 %v2212
    %2260 = vmatprep.subr.mxu0 0.0
    %2261 = vmatpush1.msra.mxu0 %v2213
    %2262 = vmatprep.subr.mxu0 0.0
    %2263 = vmatpush1.msra.mxu0 %v2214
    %2264 = vmatprep.subr.mxu0 0.0
    %2265 = vmatpush1.msra.mxu0 %v2215
    %2266 = vmatprep.subr.mxu0 0.0
    %2267 = vmatpush1.msra.mxu0 %v2216
    %2268 = vmatprep.subr.mxu0 0.0
    %2269 = vmatpush1.msra.mxu0 %v2217
    %2270 = vmatprep.subr.mxu0 0.0
    %2271 = vmatpush1.msra.mxu0 %v2218
    %2272 = vmatprep.subr.mxu0 0.0
    %2273 = vmatpush1.msra.mxu0 %v2219
    %2274 = vmatprep.subr.mxu0 0.0
    %2275 = vmatpush1.msra.mxu0 %v2220
    %2276 = vmatprep.subr.mxu0 0.0
    %2277 = vmatpush1.msra.mxu0 %v2221
    %2278 = vmatprep.subr.mxu0 0.0
    %2279 = vmatpush1.msra.mxu0 %v2222
    %2280 = vmatprep.subr.mxu0 0.0
    %2281 = vmatpush1.msra.mxu0 %v2223
    %2282 = vmatprep.subr.mxu0 0.0
    %2283 = vmatpush1.msra.mxu0 %v2224
    %2284 = vmatprep.subr.mxu0 0.0
    %2285 = vmatpush1.msra.mxu0 %v2225
    %2286 = vmatprep.subr.mxu0 0.0
    %2287 = vmatpush1.msra.mxu0 %v2226
    %2288 = vmatprep.subr.mxu0 0.0
    %2289 = vmatpush1.msra.mxu0 %v2227
    %2290 = vmatprep.subr.mxu0 0.0
    %2291 = vmatpush1.msra.mxu0 %v2228
    %2292 = vmatprep.subr.mxu0 0.0
    %2293 = vmatpush1.msra.mxu0 %v2229
    %2294 = vmatprep.subr.mxu0 0.0
    %2295 = vmatpush1.msra.mxu0 %v2230
    %2296 = vmatprep.subr.mxu0 0.0
    %2297 = vmatpush1.msra.mxu0 %v2231
    %2298 = vmatprep.subr.mxu0 0.0
    %2299 = vmatpush1.msra.mxu0 %v2232
    %2300 = vmatprep.subr.mxu0 0.0
    %2301 = vmatpush1.msra.mxu0 %v2233
    %2302 = vmatprep.subr.mxu0 0.0
    %2303 = vmatpush1.msra.mxu0 %v2234
    %2304 = vmatprep.subr.mxu0 0.0
    %2305 = vmatpush1.msra.mxu0 %v2235
    %2306 = vmatprep.subr.mxu0 0.0
    %2307 = vmatpush1.msra.mxu0 %v2236
    %2308 = vmatprep.mubr.f32.mxu0 %v2204
    %2309 = vmatmul.mubr.f32.gmra.mrb[0].mxu0 %v2203
    %v2310 = vpop.f32.mrb[0].mxu0
    %v2311 = vadd.f32 %v2242, %v2310
    %v2312 = vpop.f32.mrb[0].mxu0
    %2313 = vdwg.mxu0
    %v2315 = vsel %vm990, %v2311, 0
    %2317 = vmatprep.subr.mxu0 %v987
    %2318 = vmatpush1.msra.mxu0 %v986
    %2319 = vmatprep.subr.mxu0 0.0
    %2320 = vmatpush1.msra.mxu0 0.0
    %2321 = vmatprep.subr.mxu0 0.0
    %2322 = vmatpush1.msra.mxu0 0.0
    %2323 = vmatprep.subr.mxu0 0.0
    %2324 = vmatpush1.msra.mxu0 0.0
    %2325 = vmatprep.subr.mxu0 0.0
    %2326 = vmatpush1.msra.mxu0 0.0
    %2327 = vmatprep.subr.mxu0 0.0
    %2328 = vmatpush1.msra.mxu0 0.0
    %2329 = vmatprep.subr.mxu0 0.0
    %2330 = vmatpush1.msra.mxu0 0.0
    %2331 = vmatprep.subr.mxu0 0.0
    %2332 = vmatpush1.msra.mxu0 0.0
    %2333 = vmatprep.subr.mxu0 0.0
    %2334 = vmatpush1.msra.mxu0 0.0
    %2335 = vmatprep.subr.mxu0 0.0
    %2336 = vmatpush1.msra.mxu0 0.0
    %2337 = vmatprep.subr.mxu0 0.0
    %2338 = vmatpush1.msra.mxu0 0.0
    %2339 = vmatprep.subr.mxu0 0.0
    %2340 = vmatpush1.msra.mxu0 0.0
    %2341 = vmatprep.subr.mxu0 0.0
    %2342 = vmatpush1.msra.mxu0 0.0
    %2343 = vmatprep.subr.mxu0 0.0
    %2344 = vmatpush1.msra.mxu0 0.0
    %2345 = vmatprep.subr.mxu0 0.0
    %2346 = vmatpush1.msra.mxu0 0.0
    %2347 = vmatprep.subr.mxu0 0.0
    %2348 = vmatpush1.msra.mxu0 0.0
    %2349 = vmatprep.subr.mxu0 0.0
    %2350 = vmatpush1.msra.mxu0 0.0
    %2351 = vmatprep.subr.mxu0 0.0
    %2352 = vmatpush1.msra.mxu0 0.0
    %2353 = vmatprep.subr.mxu0 0.0
    %2354 = vmatpush1.msra.mxu0 0.0
    %2355 = vmatprep.subr.mxu0 0.0
    %2356 = vmatpush1.msra.mxu0 0.0
    %2357 = vmatprep.subr.mxu0 0.0
    %2358 = vmatpush1.msra.mxu0 0.0
    %2359 = vmatprep.subr.mxu0 0.0
    %2360 = vmatpush1.msra.mxu0 0.0
    %2361 = vmatprep.subr.mxu0 0.0
    %2362 = vmatpush1.msra.mxu0 0.0
    %2363 = vmatprep.subr.mxu0 0.0
    %2364 = vmatpush1.msra.mxu0 0.0
    %2365 = vmatprep.subr.mxu0 0.0
    %2366 = vmatpush1.msra.mxu0 0.0
    %2367 = vmatprep.subr.mxu0 0.0
    %2368 = vmatpush1.msra.mxu0 0.0
    %2369 = vmatprep.subr.mxu0 0.0
    %2370 = vmatpush1.msra.mxu0 0.0
    %2371 = vmatprep.subr.mxu0 0.0
    %2372 = vmatpush1.msra.mxu0 0.0
    %2373 = vmatprep.subr.mxu0 0.0
    %2374 = vmatpush1.msra.mxu0 0.0
    %2375 = vmatprep.subr.mxu0 0.0
    %2376 = vmatpush1.msra.mxu0 0.0
    %2377 = vmatprep.subr.mxu0 0.0
    %2378 = vmatpush1.msra.mxu0 0.0
    %2379 = vmatprep.subr.mxu0 0.0
    %2380 = vmatpush1.msra.mxu0 0.0
    %2381 = vmatprep.mubr.f32.mxu0 0.0
    %2382 = vmatmul.mubr.f32.gmra.mrb[0].mxu0 %v2315
    %v2383 = vpop.f32.mrb[0].mxu0
    %v2384 = vadd.f32 0.0, %v2383
    %v2385 = vpop.f32.mrb[0].mxu0
    %v2386 = vadd.f32 0.0, %v2385
    %2387 = vdwg.mxu0
    %2388 = vmatprep.subr.mxu0 %v989
    %2389 = vmatpush1.msra.mxu0 %v988
    %2390 = vmatprep.subr.mxu0 0.0
    %2391 = vmatpush1.msra.mxu0 0.0
    %2392 = vmatprep.subr.mxu0 0.0
    %2393 = vmatpush1.msra.mxu0 0.0
    %2394 = vmatprep.subr.mxu0 0.0
    %2395 = vmatpush1.msra.mxu0 0.0
    %2396 = vmatprep.subr.mxu0 0.0
    %2397 = vmatpush1.msra.mxu0 0.0
    %2398 = vmatprep.subr.mxu0 0.0
    %2399 = vmatpush1.msra.mxu0 0.0
    %2400 = vmatprep.subr.mxu0 0.0
    %2401 = vmatpush1.msra.mxu0 0.0
    %2402 = vmatprep.subr.mxu0 0.0
    %2403 = vmatpush1.msra.mxu0 0.0
    %2404 = vmatprep.subr.mxu0 0.0
    %2405 = vmatpush1.msra.mxu0 0.0
    %2406 = vmatprep.subr.mxu0 0.0
    %2407 = vmatpush1.msra.mxu0 0.0
    %2408 = vmatprep.subr.mxu0 0.0
    %2409 = vmatpush1.msra.mxu0 0.0
    %2410 = vmatprep.subr.mxu0 0.0
    %2411 = vmatpush1.msra.mxu0 0.0
    %2412 = vmatprep.subr.mxu0 0.0
    %2413 = vmatpush1.msra.mxu0 0.0
    %2414 = vmatprep.subr.mxu0 0.0
    %2415 = vmatpush1.msra.mxu0 0.0
    %2416 = vmatprep.subr.mxu0 0.0
    %2417 = vmatpush1.msra.mxu0 0.0
    %2418 = vmatprep.subr.mxu0 0.0
    %2419 = vmatpush1.msra.mxu0 0.0
    %2420 = vmatprep.subr.mxu0 0.0
    %2421 = vmatpush1.msra.mxu0 0.0
    %2422 = vmatprep.subr.mxu0 0.0
    %2423 = vmatpush1.msra.mxu0 0.0
    %2424 = vmatprep.subr.mxu0 0.0
    %2425 = vmatpush1.msra.mxu0 0.0
    %2426 = vmatprep.subr.mxu0 0.0
    %2427 = vmatpush1.msra.mxu0 0.0
    %2428 = vmatprep.subr.mxu0 0.0
    %2429 = vmatpush1.msra.mxu0 0.0
    %2430 = vmatprep.subr.mxu0 0.0
    %2431 = vmatpush1.msra.mxu0 0.0
    %2432 = vmatprep.subr.mxu0 0.0
    %2433 = vmatpush1.msra.mxu0 0.0
    %2434 = vmatprep.subr.mxu0 0.0
    %2435 = vmatpush1.msra.mxu0 0.0
    %2436 = vmatprep.subr.mxu0 0.0
    %2437 = vmatpush1.msra.mxu0 0.0
    %2438 = vmatprep.subr.mxu0 0.0
    %2439 = vmatpush1.msra.mxu0 0.0
    %2440 = vmatprep.subr.mxu0 0.0
    %2441 = vmatpush1.msra.mxu0 0.0
    %2442 = vmatprep.subr.mxu0 0.0
    %2443 = vmatpush1.msra.mxu0 0.0
    %2444 = vmatprep.subr.mxu0 0.0
    %2445 = vmatpush1.msra.mxu0 0.0
    %2446 = vmatprep.subr.mxu0 0.0
    %2447 = vmatpush1.msra.mxu0 0.0
    %2448 = vmatprep.subr.mxu0 0.0
    %2449 = vmatpush1.msra.mxu0 0.0
    %2450 = vmatprep.subr.mxu0 0.0
    %2451 = vmatpush1.msra.mxu0 0.0
    %2452 = vmatprep.mubr.f32.mxu0 0.0
    %2453 = vmatmul.mubr.f32.gmra.mrb[0].mxu0 %v2315
    %v2454 = vpop.f32.mrb[0].mxu0
    %v2455 = vadd.f32 0.0, %v2454
    %v2456 = vpop.f32.mrb[0].mxu0
    %v2457 = vadd.f32 0.0, %v2456
    %2458 = vdwg.mxu0
    %2459 = vmatprep.subr.mxu0 %v971
    %2460 = vmatpush1.msra.mxu0 %v970
    %2461 = vmatprep.subr.mxu0 %v975
    %2462 = vmatpush1.msra.mxu0 %v974
    %2463 = vmatprep.subr.mxu0 %v979
    %2464 = vmatpush1.msra.mxu0 %v978
    %2465 = vmatprep.subr.mxu0 %v983
    %2466 = vmatpush1.msra.mxu0 %v982
    %2467 = vmatprep.subr.mxu0 0.0
    %2468 = vmatpush1.msra.mxu0 0.0
    %2469 = vmatprep.subr.mxu0 0.0
    %2470 = vmatpush1.msra.mxu0 0.0
    %2471 = vmatprep.subr.mxu0 0.0
    %2472 = vmatpush1.msra.mxu0 0.0
    %2473 = vmatprep.subr.mxu0 0.0
    %2474 = vmatpush1.msra.mxu0 0.0
    %2475 = vmatprep.subr.mxu0 0.0
    %2476 = vmatpush1.msra.mxu0 0.0
    %2477 = vmatprep.subr.mxu0 0.0
    %2478 = vmatpush1.msra.mxu0 0.0
    %2479 = vmatprep.subr.mxu0 0.0
    %2480 = vmatpush1.msra.mxu0 0.0
    %2481 = vmatprep.subr.mxu0 0.0
    %2482 = vmatpush1.msra.mxu0 0.0
    %2483 = vmatprep.subr.mxu0 0.0
    %2484 = vmatpush1.msra.mxu0 0.0
    %2485 = vmatprep.subr.mxu0 0.0
    %2486 = vmatpush1.msra.mxu0 0.0
    %2487 = vmatprep.subr.mxu0 0.0
    %2488 = vmatpush1.msra.mxu0 0.0
    %2489 = vmatprep.subr.mxu0 0.0
    %2490 = vmatpush1.msra.mxu0 0.0
    %2491 = vmatprep.subr.mxu0 0.0
    %2492 = vmatpush1.msra.mxu0 0.0
    %2493 = vmatprep.subr.mxu0 0.0
    %2494 = vmatpush1.msra.mxu0 0.0
    %2495 = vmatprep.subr.mxu0 0.0
    %2496 = vmatpush1.msra.mxu0 0.0
    %2497 = vmatprep.subr.mxu0 0.0
    %2498 = vmatpush1.msra.mxu0 0.0
    %2499 = vmatprep.subr.mxu0 0.0
    %2500 = vmatpush1.msra.mxu0 0.0
    %2501 = vmatprep.subr.mxu0 0.0
    %2502 = vmatpush1.msra.mxu0 0.0
    %2503 = vmatprep.subr.mxu0 0.0
    %2504 = vmatpush1.msra.mxu0 0.0
    %2505 = vmatprep.subr.mxu0 0.0
    %2506 = vmatpush1.msra.mxu0 0.0
    %2507 = vmatprep.subr.mxu0 0.0
    %2508 = vmatpush1.msra.mxu0 0.0
    %2509 = vmatprep.subr.mxu0 0.0
    %2510 = vmatpush1.msra.mxu0 0.0
    %2511 = vmatprep.subr.mxu0 0.0
    %2512 = vmatpush1.msra.mxu0 0.0
    %2513 = vmatprep.subr.mxu0 0.0
    %2514 = vmatpush1.msra.mxu0 0.0
    %2515 = vmatprep.subr.mxu0 0.0
    %2516 = vmatpush1.msra.mxu0 0.0
    %2517 = vmatprep.subr.mxu0 0.0
    %2518 = vmatpush1.msra.mxu0 0.0
    %2519 = vmatprep.subr.mxu0 0.0
    %2520 = vmatpush1.msra.mxu0 0.0
    %2521 = vmatprep.subr.mxu0 0.0
    %2522 = vmatpush1.msra.mxu0 0.0
    %2523 = vmatprep.mubr.f32.mxu0 0.0
    %2524 = vmatmul.mubr.f32.gmra.mrb[0].mxu0 %v1137
    %v2525 = vpop.f32.mrb[0].mxu0
    %v2526 = vadd.f32 %v2384, %v2525
    %v2527 = vpop.f32.mrb[0].mxu0
    %v2528 = vadd.f32 %v2386, %v2527
    %2529 = vdwg.mxu0
    %2530 = vmatprep.subr.mxu0 %v973
    %2531 = vmatpush1.msra.mxu0 %v972
    %2532 = vmatprep.subr.mxu0 %v977
    %2533 = vmatpush1.msra.mxu0 %v976
    %2534 = vmatprep.subr.mxu0 %v981
    %2535 = vmatpush1.msra.mxu0 %v980
    %2536 = vmatprep.subr.mxu0 %v985
    %2537 = vmatpush1.msra.mxu0 %v984
    %2538 = vmatprep.subr.mxu0 0.0
    %2539 = vmatpush1.msra.mxu0 0.0
    %2540 = vmatprep.subr.mxu0 0.0
    %2541 = vmatpush1.msra.mxu0 0.0
    %2542 = vmatprep.subr.mxu0 0.0
    %2543 = vmatpush1.msra.mxu0 0.0
    %2544 = vmatprep.subr.mxu0 0.0
    %2545 = vmatpush1.msra.mxu0 0.0
    %2546 = vmatprep.subr.mxu0 0.0
    %2547 = vmatpush1.msra.mxu0 0.0
    %2548 = vmatprep.subr.mxu0 0.0
    %2549 = vmatpush1.msra.mxu0 0.0
    %2550 = vmatprep.subr.mxu0 0.0
    %2551 = vmatpush1.msra.mxu0 0.0
    %2552 = vmatprep.subr.mxu0 0.0
    %2553 = vmatpush1.msra.mxu0 0.0
    %2554 = vmatprep.subr.mxu0 0.0
    %2555 = vmatpush1.msra.mxu0 0.0
    %2556 = vmatprep.subr.mxu0 0.0
    %2557 = vmatpush1.msra.mxu0 0.0
    %2558 = vmatprep.subr.mxu0 0.0
    %2559 = vmatpush1.msra.mxu0 0.0
    %2560 = vmatprep.subr.mxu0 0.0
    %2561 = vmatpush1.msra.mxu0 0.0
    %2562 = vmatprep.subr.mxu0 0.0
    %2563 = vmatpush1.msra.mxu0 0.0
    %2564 = vmatprep.subr.mxu0 0.0
    %2565 = vmatpush1.msra.mxu0 0.0
    %2566 = vmatprep.subr.mxu0 0.0
    %2567 = vmatpush1.msra.mxu0 0.0
    %2568 = vmatprep.subr.mxu0 0.0
    %2569 = vmatpush1.msra.mxu0 0.0
    %2570 = vmatprep.subr.mxu0 0.0
    %2571 = vmatpush1.msra.mxu0 0.0
    %2572 = vmatprep.subr.mxu0 0.0
    %2573 = vmatpush1.msra.mxu0 0.0
    %2574 = vmatprep.subr.mxu0 0.0
    %2575 = vmatpush1.msra.mxu0 0.0
    %2576 = vmatprep.subr.mxu0 0.0
    %2577 = vmatpush1.msra.mxu0 0.0
    %2578 = vmatprep.subr.mxu0 0.0
    %2579 = vmatpush1.msra.mxu0 0.0
    %2580 = vmatprep.subr.mxu0 0.0
    %2581 = vmatpush1.msra.mxu0 0.0
    %2582 = vmatprep.subr.mxu0 0.0
    %2583 = vmatpush1.msra.mxu0 0.0
    %2584 = vmatprep.subr.mxu0 0.0
    %2585 = vmatpush1.msra.mxu0 0.0
    %2586 = vmatprep.subr.mxu0 0.0
    %2587 = vmatpush1.msra.mxu0 0.0
    %2588 = vmatprep.subr.mxu0 0.0
    %2589 = vmatpush1.msra.mxu0 0.0
    %2590 = vmatprep.subr.mxu0 0.0
    %2591 = vmatpush1.msra.mxu0 0.0
    %2592 = vmatprep.subr.mxu0 0.0
    %2593 = vmatpush1.msra.mxu0 0.0
    %2594 = vmatprep.mubr.f32.mxu0 0.0
    %2595 = vmatmul.mubr.f32.gmra.mrb[0].mxu0 %v1137
    %v2596 = vpop.f32.mrb[0].mxu0
    %v2597 = vadd.f32 %v2455, %v2596
    %v2598 = vpop.f32.mrb[0].mxu0
    %v2599 = vadd.f32 %v2457, %v2598
    %2600 = vdwg.mxu0
    %v2601 = vadd.f32 %v2526, %v1286
    %v2602 = vadd.f32 %v2528, %v1290
    %v2603 = vadd.f32 %v2597, %v1294
    %v2604 = vadd.f32 %v2599, %v1298
    %v2605 = vmax.f32 %v2601, 0.0
    %v2606 = vmax.f32 %v2602, 0.0
    %v2607 = vmax.f32 %v2603, 0.0
    %v2608 = vmax.f32 %v2604, 0.0
    %2609 = vmatprep.subr.mxu0 0.0
    %2610 = vmatpush1.msra.mxu0 %v1311
    %2611 = vmatprep.subr.mxu0 0.0
    %2612 = vmatpush1.msra.mxu0 %v1312
    %2613 = vmatprep.subr.mxu0 0.0
    %2614 = vmatpush1.msra.mxu0 %v1313
    %2615 = vmatprep.subr.mxu0 0.0
    %2616 = vmatpush1.msra.mxu0 %v1314
    %2617 = vmatprep.subr.mxu0 0.0
    %2618 = vmatpush1.msra.mxu0 %v1315
    %2619 = vmatprep.subr.mxu0 0.0
    %2620 = vmatpush1.msra.mxu0 %v1316
    %2621 = vmatprep.subr.mxu0 0.0
    %2622 = vmatpush1.msra.mxu0 %v1317
    %2623 = vmatprep.subr.mxu0 0.0
    %2624 = vmatpush1.msra.mxu0 %v1318
    %2625 = vmatprep.subr.mxu0 0.0
    %2626 = vmatpush1.msra.mxu0 %v1319
    %2627 = vmatprep.subr.mxu0 0.0
    %2628 = vmatpush1.msra.mxu0 %v1320
    %2629 = vmatprep.subr.mxu0 0.0
    %2630 = vmatpush1.msra.mxu0 %v1321
    %2631 = vmatprep.subr.mxu0 0.0
    %2632 = vmatpush1.msra.mxu0 %v1322
    %2633 = vmatprep.subr.mxu0 0.0
    %2634 = vmatpush1.msra.mxu0 %v1323
    %2635 = vmatprep.subr.mxu0 0.0
    %2636 = vmatpush1.msra.mxu0 %v1324
    %2637 = vmatprep.subr.mxu0 0.0
    %2638 = vmatpush1.msra.mxu0 %v1325
    %2639 = vmatprep.subr.mxu0 0.0
    %2640 = vmatpush1.msra.mxu0 %v1326
    %2641 = vmatprep.subr.mxu0 0.0
    %2642 = vmatpush1.msra.mxu0 %v1327
    %2643 = vmatprep.subr.mxu0 0.0
    %2644 = vmatpush1.msra.mxu0 %v1328
    %2645 = vmatprep.subr.mxu0 0.0
    %2646 = vmatpush1.msra.mxu0 %v1329
    %2647 = vmatprep.subr.mxu0 0.0
    %2648 = vmatpush1.msra.mxu0 %v1330
    %2649 = vmatprep.subr.mxu0 0.0
    %2650 = vmatpush1.msra.mxu0 %v1331
    %2651 = vmatprep.subr.mxu0 0.0
    %2652 = vmatpush1.msra.mxu0 %v1332
    %2653 = vmatprep.subr.mxu0 0.0
    %2654 = vmatpush1.msra.mxu0 %v1333
    %2655 = vmatprep.subr.mxu0 0.0
    %2656 = vmatpush1.msra.mxu0 %v1334
    %2657 = vmatprep.subr.mxu0 0.0
    %2658 = vmatpush1.msra.mxu0 %v1335
    %2659 = vmatprep.subr.mxu0 0.0
    %2660 = vmatpush1.msra.mxu0 %v1336
    %2661 = vmatprep.subr.mxu0 0.0
    %2662 = vmatpush1.msra.mxu0 %v1337
    %2663 = vmatprep.subr.mxu0 0.0
    %2664 = vmatpush1.msra.mxu0 %v1338
    %2665 = vmatprep.subr.mxu0 0.0
    %2666 = vmatpush1.msra.mxu0 %v1339
    %2667 = vmatprep.subr.mxu0 0.0
    %2668 = vmatpush1.msra.mxu0 %v1340
    %2669 = vmatprep.subr.mxu0 0.0
    %2670 = vmatpush1.msra.mxu0 %v1341
    %2671 = vmatprep.subr.mxu0 0.0
    %2672 = vmatpush1.msra.mxu0 %v1342
    %2673 = vmatprep.mubr.f32.mxu0 %v2606
    %2674 = vmatmul.mubr.f32.gmra.mrb[0].mxu0 %v2605
    %v2675 = vpop.f32.mrb[0].mxu0
    %v2676 = vadd.f32 %v1380, %v2675
    %v2677 = vpop.f32.mrb[0].mxu0
    %2678 = vdwg.mxu0
    %2679 = vmatprep.subr.mxu0 0.0
    %2680 = vmatpush1.msra.mxu0 %v1343
    %2681 = vmatprep.subr.mxu0 0.0
    %2682 = vmatpush1.msra.mxu0 %v1344
    %2683 = vmatprep.subr.mxu0 0.0
    %2684 = vmatpush1.msra.mxu0 %v1345
    %2685 = vmatprep.subr.mxu0 0.0
    %2686 = vmatpush1.msra.mxu0 %v1346
    %2687 = vmatprep.subr.mxu0 0.0
    %2688 = vmatpush1.msra.mxu0 %v1347
    %2689 = vmatprep.subr.mxu0 0.0
    %2690 = vmatpush1.msra.mxu0 %v1348
    %2691 = vmatprep.subr.mxu0 0.0
    %2692 = vmatpush1.msra.mxu0 %v1349
    %2693 = vmatprep.subr.mxu0 0.0
    %2694 = vmatpush1.msra.mxu0 %v1350
    %2695 = vmatprep.subr.mxu0 0.0
    %2696 = vmatpush1.msra.mxu0 %v1351
    %2697 = vmatprep.subr.mxu0 0.0
    %2698 = vmatpush1.msra.mxu0 %v1352
    %2699 = vmatprep.subr.mxu0 0.0
    %2700 = vmatpush1.msra.mxu0 %v1353
    %2701 = vmatprep.subr.mxu0 0.0
    %2702 = vmatpush1.msra.mxu0 %v1354
    %2703 = vmatprep.subr.mxu0 0.0
    %2704 = vmatpush1.msra.mxu0 %v1355
    %2705 = vmatprep.subr.mxu0 0.0
    %2706 = vmatpush1.msra.mxu0 %v1356
    %2707 = vmatprep.subr.mxu0 0.0
    %2708 = vmatpush1.msra.mxu0 %v1357
    %2709 = vmatprep.subr.mxu0 0.0
    %2710 = vmatpush1.msra.mxu0 %v1358
    %2711 = vmatprep.subr.mxu0 0.0
    %2712 = vmatpush1.msra.mxu0 %v1359
    %2713 = vmatprep.subr.mxu0 0.0
    %2714 = vmatpush1.msra.mxu0 %v1360
    %2715 = vmatprep.subr.mxu0 0.0
    %2716 = vmatpush1.msra.mxu0 %v1361
    %2717 = vmatprep.subr.mxu0 0.0
    %2718 = vmatpush1.msra.mxu0 %v1362
    %2719 = vmatprep.subr.mxu0 0.0
    %2720 = vmatpush1.msra.mxu0 %v1363
    %2721 = vmatprep.subr.mxu0 0.0
    %2722 = vmatpush1.msra.mxu0 %v1364
    %2723 = vmatprep.subr.mxu0 0.0
    %2724 = vmatpush1.msra.mxu0 %v1365
    %2725 = vmatprep.subr.mxu0 0.0
    %2726 = vmatpush1.msra.mxu0 %v1366
    %2727 = vmatprep.subr.mxu0 0.0
    %2728 = vmatpush1.msra.mxu0 %v1367
    %2729 = vmatprep.subr.mxu0 0.0
    %2730 = vmatpush1.msra.mxu0 %v1368
    %2731 = vmatprep.subr.mxu0 0.0
    %2732 = vmatpush1.msra.mxu0 %v1369
    %2733 = vmatprep.subr.mxu0 0.0
    %2734 = vmatpush1.msra.mxu0 %v1370
    %2735 = vmatprep.subr.mxu0 0.0
    %2736 = vmatpush1.msra.mxu0 %v1371
    %2737 = vmatprep.subr.mxu0 0.0
    %2738 = vmatpush1.msra.mxu0 %v1372
    %2739 = vmatprep.subr.mxu0 0.0
    %2740 = vmatpush1.msra.mxu0 %v1373
    %2741 = vmatprep.subr.mxu0 0.0
    %2742 = vmatpush1.msra.mxu0 %v1374
    %2743 = vmatprep.mubr.f32.mxu0 %v2608
    %2744 = vmatmul.mubr.f32.gmra.mrb[0].mxu0 %v2607
    %v2745 = vpop.f32.mrb[0].mxu0
    %v2746 = vadd.f32 %v2676, %v2745
    %v2747 = vpop.f32.mrb[0].mxu0
    %2748 = vdwg.mxu0
    %vm2749 = vcmp.gt.f32.partialorder %v2746, 0.0
    %v2750 = vmul.f32 %v2746, 0.01
    %v2751 = vsel %vm2749, %v2746, %v2750
    %v2752 = vmul.f32 %v2751, %v2751
    %v2753 = vsel %vm310, %v2752, 0.0
    %2754 = vadd.xlane.f32.xlu0 %v2753
    %v2755 = vpop.xlane.xlu0 %2754
    %v2756 = vmax.f32 %v2755, 1e-24
    %v2757 = vrsqrt.pop %v2756
    %v2758 = vmul.f32 %v2751, %v2757
    %v2760 = vsel %vm310, %v1531, 0
    %v2763 = vsel %vm310, %v259, 0
    %v2766 = vsel %vm310, %v260, 0
    %2768 = vmatprep.subr.mxu0 0.0
    %2769 = vmatpush1.xpose.msra.mxu0 %v2763
    %2770 = vmatprep.subr.mxu0 0.0
    %2771 = vmatpush1.xpose.msra.mxu0 %v2766
    %2772 = vmatprep.subr.mxu0 0.0
    %2773 = vmatpush1.xpose.msra.mxu0 0.0
    %2774 = vmatprep.subr.mxu0 0.0
    %2775 = vmatpush1.xpose.msra.mxu0 0.0
    %2776 = vmatprep.subr.mxu0 0.0
    %2777 = vmatpush1.xpose.msra.mxu0 0.0
    %2778 = vmatprep.subr.mxu0 0.0
    %2779 = vmatpush1.xpose.msra.mxu0 0.0
    %2780 = vmatprep.subr.mxu0 0.0
    %2781 = vmatpush1.xpose.msra.mxu0 0.0
    %2782 = vmatprep.subr.mxu0 0.0
    %2783 = vmatpush1.xpose.msra.mxu0 0.0
    %2784 = vmatprep.subr.mxu0 0.0
    %2785 = vmatpush1.xpose.msra.mxu0 0.0
    %2786 = vmatprep.subr.mxu0 0.0
    %2787 = vmatpush1.xpose.msra.mxu0 0.0
    %2788 = vmatprep.subr.mxu0 0.0
    %2789 = vmatpush1.xpose.msra.mxu0 0.0
    %2790 = vmatprep.subr.mxu0 0.0
    %2791 = vmatpush1.xpose.msra.mxu0 0.0
    %2792 = vmatprep.subr.mxu0 0.0
    %2793 = vmatpush1.xpose.msra.mxu0 0.0
    %2794 = vmatprep.subr.mxu0 0.0
    %2795 = vmatpush1.xpose.msra.mxu0 0.0
    %2796 = vmatprep.subr.mxu0 0.0
    %2797 = vmatpush1.xpose.msra.mxu0 0.0
    %2798 = vmatprep.subr.mxu0 0.0
    %2799 = vmatpush1.xpose.msra.mxu0 0.0
    %2800 = vmatprep.subr.mxu0 0.0
    %2801 = vmatpush1.xpose.msra.mxu0 0.0
    %2802 = vmatprep.subr.mxu0 0.0
    %2803 = vmatpush1.xpose.msra.mxu0 0.0
    %2804 = vmatprep.subr.mxu0 0.0
    %2805 = vmatpush1.xpose.msra.mxu0 0.0
    %2806 = vmatprep.subr.mxu0 0.0
    %2807 = vmatpush1.xpose.msra.mxu0 0.0
    %2808 = vmatprep.subr.mxu0 0.0
    %2809 = vmatpush1.xpose.msra.mxu0 0.0
    %2810 = vmatprep.subr.mxu0 0.0
    %2811 = vmatpush1.xpose.msra.mxu0 0.0
    %2812 = vmatprep.subr.mxu0 0.0
    %2813 = vmatpush1.xpose.msra.mxu0 0.0
    %2814 = vmatprep.subr.mxu0 0.0
    %2815 = vmatpush1.xpose.msra.mxu0 0.0
    %2816 = vmatprep.subr.mxu0 0.0
    %2817 = vmatpush1.xpose.msra.mxu0 0.0
    %2818 = vmatprep.subr.mxu0 0.0
    %2819 = vmatpush1.xpose.msra.mxu0 0.0
    %2820 = vmatprep.subr.mxu0 0.0
    %2821 = vmatpush1.xpose.msra.mxu0 0.0
    %2822 = vmatprep.subr.mxu0 0.0
    %2823 = vmatpush1.xpose.msra.mxu0 0.0
    %2824 = vmatprep.subr.mxu0 0.0
    %2825 = vmatpush1.xpose.msra.mxu0 0.0
    %2826 = vmatprep.subr.mxu0 0.0
    %2827 = vmatpush1.xpose.msra.mxu0 0.0
    %2828 = vmatprep.subr.mxu0 0.0
    %2829 = vmatpush1.xpose.msra.mxu0 0.0
    %2830 = vmatprep.subr.mxu0 0.0
    %2831 = vmatpush1.xpose.msra.mxu0 0.0
    %2832 = vmatprep.mubr.f32.mxu0 0.0
    %2833 = vmatmul.mubr.f32.gmra.mrb[0].mxu0 %v2760
    %v2834 = vpop.f32.mrb[0].mxu0
    %v2835 = vadd.f32 0.0, %v2834
    %v2836 = vpop.f32.mrb[0].mxu0
    %2837 = vdwg.mxu0
    %v2839 = vsel %vm310, %v2758, 0
    %2841 = vmatprep.subr.mxu0 0.0
    %2842 = vmatpush1.xpose.msra.mxu0 %v2763
    %2843 = vmatprep.subr.mxu0 0.0
    %2844 = vmatpush1.xpose.msra.mxu0 %v2766
    %2845 = vmatprep.subr.mxu0 0.0
    %2846 = vmatpush1.xpose.msra.mxu0 0.0
    %2847 = vmatprep.subr.mxu0 0.0
    %2848 = vmatpush1.xpose.msra.mxu0 0.0
    %2849 = vmatprep.subr.mxu0 0.0
    %2850 = vmatpush1.xpose.msra.mxu0 0.0
    %2851 = vmatprep.subr.mxu0 0.0
    %2852 = vmatpush1.xpose.msra.mxu0 0.0
    %2853 = vmatprep.subr.mxu0 0.0
    %2854 = vmatpush1.xpose.msra.mxu0 0.0
    %2855 = vmatprep.subr.mxu0 0.0
    %2856 = vmatpush1.xpose.msra.mxu0 0.0
    %2857 = vmatprep.subr.mxu0 0.0
    %2858 = vmatpush1.xpose.msra.mxu0 0.0
    %2859 = vmatprep.subr.mxu0 0.0
    %2860 = vmatpush1.xpose.msra.mxu0 0.0
    %2861 = vmatprep.subr.mxu0 0.0
    %2862 = vmatpush1.xpose.msra.mxu0 0.0
    %2863 = vmatprep.subr.mxu0 0.0
    %2864 = vmatpush1.xpose.msra.mxu0 0.0
    %2865 = vmatprep.subr.mxu0 0.0
    %2866 = vmatpush1.xpose.msra.mxu0 0.0
    %2867 = vmatprep.subr.mxu0 0.0
    %2868 = vmatpush1.xpose.msra.mxu0 0.0
    %2869 = vmatprep.subr.mxu0 0.0
    %2870 = vmatpush1.xpose.msra.mxu0 0.0
    %2871 = vmatprep.subr.mxu0 0.0
    %2872 = vmatpush1.xpose.msra.mxu0 0.0
    %2873 = vmatprep.subr.mxu0 0.0
    %2874 = vmatpush1.xpose.msra.mxu0 0.0
    %2875 = vmatprep.subr.mxu0 0.0
    %2876 = vmatpush1.xpose.msra.mxu0 0.0
    %2877 = vmatprep.subr.mxu0 0.0
    %2878 = vmatpush1.xpose.msra.mxu0 0.0
    %2879 = vmatprep.subr.mxu0 0.0
    %2880 = vmatpush1.xpose.msra.mxu0 0.0
    %2881 = vmatprep.subr.mxu0 0.0
    %2882 = vmatpush1.xpose.msra.mxu0 0.0
    %2883 = vmatprep.subr.mxu0 0.0
    %2884 = vmatpush1.xpose.msra.mxu0 0.0
    %2885 = vmatprep.subr.mxu0 0.0
    %2886 = vmatpush1.xpose.msra.mxu0 0.0
    %2887 = vmatprep.subr.mxu0 0.0
    %2888 = vmatpush1.xpose.msra.mxu0 0.0
    %2889 = vmatprep.subr.mxu0 0.0
    %2890 = vmatpush1.xpose.msra.mxu0 0.0
    %2891 = vmatprep.subr.mxu0 0.0
    %2892 = vmatpush1.xpose.msra.mxu0 0.0
    %2893 = vmatprep.subr.mxu0 0.0
    %2894 = vmatpush1.xpose.msra.mxu0 0.0
    %2895 = vmatprep.subr.mxu0 0.0
    %2896 = vmatpush1.xpose.msra.mxu0 0.0
    %2897 = vmatprep.subr.mxu0 0.0
    %2898 = vmatpush1.xpose.msra.mxu0 0.0
    %2899 = vmatprep.subr.mxu0 0.0
    %2900 = vmatpush1.xpose.msra.mxu0 0.0
    %2901 = vmatprep.subr.mxu0 0.0
    %2902 = vmatpush1.xpose.msra.mxu0 0.0
    %2903 = vmatprep.subr.mxu0 0.0
    %2904 = vmatpush1.xpose.msra.mxu0 0.0
    %2905 = vmatprep.mubr.f32.mxu0 0.0
    %2906 = vmatmul.mubr.f32.gmra.mrb[0].mxu0 %v2839
    %v2907 = vpop.f32.mrb[0].mxu0
    %v2908 = vadd.f32 0.0, %v2907
    %v2909 = vpop.f32.mrb[0].mxu0
    %2910 = vdwg.mxu0
    %2911 = vst [vmem:[%s23] sm:$0xff] 0.0
    %2912 = vst [vmem:[%s23 + $0x8] sm:$0xff] 0.0
    %2913 = vst [vmem:[%s23 + $0x10] sm:$0xff] 0.0
    %2914 = vst [vmem:[%s23 + $0x18] sm:$0xff] 0.0
    %2915 = vst [vmem:[%s23 + $0x20] sm:$0xff] 0.0
    %2916 = vst.msk [vmem:[%s23] sm:$0xff] %vm891, %v2311
    %2917 = vst.msk [vmem:[%s23 + $0x8] sm:$0xff] %vm310, %v2758
    %2918 = vst.msk [vmem:[%s23 + $0x10] sm:$0xff] %vm891, %v2835
    %2919 = vst.msk [vmem:[%s23 + $0x18] sm:$0xff] %vm891, %v2908
    %2920 = vst.msk [vmem:[%s23 + $0x20] sm:$0xff] %vm310, %v1531
    %2921 = vst [vmem:[%s24] sm:$0xff] 0.0
    %2922 = vst [vmem:[%s24 + $0x8] sm:$0xff] 0.0
    %2923 = vst.msk [vmem:[%s24] sm:$0xff] %vm891, %v883
    %2924 = vst.msk [vmem:[%s24 + $0x8] sm:$0xff] %vm891, %v888
    // Predicated region
    $region154: #{vae_forward.1} parent=1 // pred_check
      _
    $region155: #{vae_forward.1} parent=1 // pred_check_branch
      %2926 = sbr.rel (0) target = $region157
    $region156: #{vae_forward.1} parent=1 // pred_region
      _
    $region157: #{vae_forward.1} parent=1 // pred_fallthru
      _
    // Predicated region
    $region158: #{vae_forward.1} parent=1 // pred_check
      _
    $region159: #{vae_forward.1} parent=1 // pred_check_branch
      %2928 = sbr.rel (0) target = $region161
    $region160: #{vae_forward.1} parent=1 // pred_region
      _
    $region161: #{vae_forward.1} parent=1 // pred_fallthru
      _
    // Predicated region
    $region162: #{vae_forward.1} parent=1 // pred_check
      _
    $region163: #{vae_forward.1} parent=1 // pred_check_branch
      %2930 = sbr.rel (0) target = $region165
    $region164: #{vae_forward.1} parent=1 // pred_region
      _
    $region165: #{vae_forward.1} parent=1 // pred_fallthru
      _
    // Predicated region
    $region166: #{vae_forward.1} parent=1 // pred_check
      _
    $region167: #{vae_forward.1} parent=1 // pred_check_branch
      %2932 = sbr.rel (0) target = $region169
    $region168: #{vae_forward.1} parent=1 // pred_region
      _
    $region169: #{vae_forward.1} parent=1 // pred_fallthru
      _
    %2933 = vsyncpa [#allocation3], 1
    %2934 = vsyncpa [#allocation5], 1
    %2935 = vsyncpa [#allocation8], 1
    %2936 = vsyncpa [#allocation11], 1
    %2937 = vsyncpa [#allocation14], 1
    %2938 = vsyncpa [#allocation17], 1
    %2939 = vsyncpa [#allocation20], 1
    %2940 = vsyncpa [#allocation23], 1

</llo_original>
